<compile_context>
chip_gen: v6e
topology: v6e:2x2x1
jax: 0.10.0
libtpu: 0.0.40
codegen_flags: <defaults>
</compile_context>

<pallas_src>
import math
from functools import partial

import jax
import jax.numpy as jnp
from jax.experimental import pallas as pl
from jax.experimental.pallas import tpu as pltpu


# ------------------------------ tiling helpers ------------------------------

def _ceil_to(x, m):
    return (x + m - 1) // m * m


def _tile(dim, pref):
    """Return (tile, padded_dim). Full-dim block if dim <= pref, else a
    pref-sized tile with the dim padded up to a multiple of it.
    (At the demo shapes every dim fits in one tile, so no pads are emitted;
    for production sizes, weights should be pre-padded once at init.)"""
    if dim <= pref:
        return dim, dim
    return pref, _ceil_to(dim, pref)


# ------------------------------ Pallas kernels ------------------------------

def _matmul_kernel(*refs, relu, has_residual):
    """3-D tiled matmul: f32 acc over K, bias (+ReLU) (+residual) epilogue,
    bf16 (or f32) output."""
    if has_residual:
        x_ref, w_ref, b_ref, r_ref, o_ref, acc_ref = refs
    else:
        x_ref, w_ref, b_ref, o_ref, acc_ref = refs

    @pl.when(pl.program_id(2) == 0)
    def _init():
        acc_ref[...] = jnp.zeros_like(acc_ref)

    acc_ref[...] += jnp.dot(x_ref[...], w_ref[...],
                            preferred_element_type=jnp.float32)

    @pl.when(pl.program_id(2) == pl.num_programs(2) - 1)
    def _finalize():
        y = acc_ref[...] + b_ref[...]
        if relu:
            y = jnp.maximum(y, 0.0)
        if has_residual:
            y = y + r_ref[...].astype(jnp.float32)
        o_ref[...] = y.astype(o_ref.dtype)


def _norm_matmul_kernel(x_ref, a_ref, nb_ref, w_ref, b_ref, o_ref, *, relu):
    """LayerNorm (unbiased std, eps on std, exact division) fused as the
    prologue of a matmul; bf16 output."""
    x = x_ref[...].astype(jnp.float32)
    d = x.shape[-1]
    mean = jnp.mean(x, axis=-1, keepdims=True)
    var = jnp.sum((x - mean) ** 2, axis=-1, keepdims=True) / (d - 1)
    std = jnp.sqrt(var)
    xn = a_ref[...] * (x - mean) / (std + 1e-6) + nb_ref[...]
    y = jnp.dot(xn.astype(jnp.bfloat16), w_ref[...],
                preferred_element_type=jnp.float32) + b_ref[...]
    if relu:
        y = jnp.maximum(y, 0.0)
    o_ref[...] = y.astype(o_ref.dtype)


def _norm_kernel(x_ref, a_ref, b_ref, o_ref):
    x = x_ref[...].astype(jnp.float32)
    d = x.shape[-1]
    mean = jnp.mean(x, axis=-1, keepdims=True)
    var = jnp.sum((x - mean) ** 2, axis=-1, keepdims=True) / (d - 1)
    std = jnp.sqrt(var)
    o_ref[...] = (a_ref[...] * (x - mean) / (std + 1e-6) + b_ref[...]).astype(o_ref.dtype)


def _attn_kernel(q_ref, k_ref, v_ref, m_ref, wo_ref, bo_ref, r_ref, o_ref, *, heads):
    """All-heads attention for one (batch, q-tile) grid point, with the
    out-projection + bias + residual fused into the epilogue.

    q_ref : (1, H, tq, dk) bf16          k_ref/v_ref : (1, H, Sk, dk) bf16
    m_ref : (1, Sm, Sk) int  (Sm in {1, tq}; raw mask, no broadcast/cast)
    wo_ref: (D, D) bf16   bo_ref: (1, D) f32   r_ref/o_ref: (1, tq, D)
    """
    q = q_ref[0]                                   # (H, tq, dk)
    k = k_ref[0]                                   # (H, Sk, dk)
    v = v_ref[0]                                   # (H, Sk, dk)
    dk = q.shape[-1]

    # Scores for all heads in one batched dot_general (no per-head lane slices).
    # 1/sqrt(dk) is already folded into the Q projection weights.
    s = jnp.einsum('hqd,hkd->hqk', q, k, preferred_element_type=jnp.float32)
    m = m_ref[0]                                   # (Sm, Sk)
    s = jnp.where(jnp.broadcast_to((m == 0)[None, :, :], s.shape), -1e9, s)

    s = s - jnp.max(s, axis=-1, keepdims=True)     # stable softmax
    p = jnp.exp(s)
    p = p * pl.reciprocal(jnp.sum(p, axis=-1, keepdims=True), approx=True)

    o = jnp.einsum('hqk,hkd->hqd', p.astype(jnp.bfloat16), v,
                   preferred_element_type=jnp.float32)   # (H, tq, dk)

    # Fused out-projection: acc = residual + bias + sum_h O_h @ Wo[h*dk:(h+1)*dk]
    acc = r_ref[0].astype(jnp.float32) + bo_ref[...]
    for h in range(heads):
        acc = acc + jnp.dot(o[h].astype(jnp.bfloat16),
                            wo_ref[h * dk:(h + 1) * dk, :],
                            preferred_element_type=jnp.float32)
    o_ref[0] = acc.astype(o_ref.dtype)             # lane-dense (tq, D) store


# --------------------------- pallas_call wrappers ---------------------------

def matmul(x, w, b, *, residual=None, relu=False, out_dtype=jnp.bfloat16,
           tm_pref=256, tn_pref=256, tk_pref=512):
    """y = x @ w + b (+ReLU) (+residual), 3-D tiled, f32 acc, bf16/f32 out."""
    M, K = x.shape
    N = w.shape[1]
    tm, Mp = _tile(M, tm_pref)
    tn, Np = _tile(N, tn_pref)
    tk, Kp = _tile(K, tk_pref)

    xp = jnp.pad(x, ((0, Mp - M), (0, Kp - K))) if (Mp != M or Kp != K) else x
    wp = jnp.pad(w, ((0, Kp - K), (0, Np - N))) if (Kp != K or Np != N) else w
    bp = jnp.pad(b, ((0, 0), (0, Np - N))) if Np != N else b

    has_res = residual is not None
    inputs = [xp, wp, bp]
    in_specs = [
        pl.BlockSpec((tm, tk), lambda i, j, k: (i, k)),
        pl.BlockSpec((tk, tn), lambda i, j, k: (k, j)),
        pl.BlockSpec((1, tn), lambda i, j, k: (0, j)),
    ]
    if has_res:
        rp = residual
        if Mp != M or Np != N:
            rp = jnp.pad(rp, ((0, Mp - M), (0, Np - N)))
        inputs.append(rp)
        in_specs.append(pl.BlockSpec((tm, tn), lambda i, j, k: (i, j)))

    out = pl.pallas_call(
        partial(_matmul_kernel, relu=relu, has_residual=has_res),
        out_shape=jax.ShapeDtypeStruct((Mp, Np), out_dtype),
        grid=(Mp // tm, Np // tn, Kp // tk),
        in_specs=in_specs,
        out_specs=pl.BlockSpec((tm, tn), lambda i, j, k: (i, j)),
        scratch_shapes=[pltpu.VMEM((tm, tn), jnp.float32)],
        compiler_params=pltpu.CompilerParams(
            dimension_semantics=("parallel", "parallel", "arbitrary")),
    )(*inputs)
    if Mp != M or Np != N:
        out = out[:M, :N]
    return out


def norm_matmul(x, alpha, nbias, w, b, *, relu=False, out_dtype=jnp.bfloat16,
                tm_pref=256, tn_pref=256):
    """y = LayerNorm(x) @ w + b (+ReLU); norm fused as matmul prologue (full K)."""
    M, D = x.shape
    N = w.shape[1]
    tm, Mp = _tile(M, tm_pref)
    tn, Np = _tile(N, tn_pref)

    xp = jnp.pad(x, ((0, Mp - M), (0, 0))) if Mp != M else x
    wp = jnp.pad(w, ((0, 0), (0, Np - N))) if Np != N else w
    bp = jnp.pad(b, ((0, 0), (0, Np - N))) if Np != N else b

    out = pl.pallas_call(
        partial(_norm_matmul_kernel, relu=relu),
        out_shape=jax.ShapeDtypeStruct((Mp, Np), out_dtype),
        grid=(Mp // tm, Np // tn),
        in_specs=[pl.BlockSpec((tm, D), lambda i, j: (i, 0)),
                  pl.BlockSpec((1, D), lambda i, j: (0, 0)),
                  pl.BlockSpec((1, D), lambda i, j: (0, 0)),
                  pl.BlockSpec((D, tn), lambda i, j: (0, j)),
                  pl.BlockSpec((1, tn), lambda i, j: (0, j))],
        out_specs=pl.BlockSpec((tm, tn), lambda i, j: (i, j)),
        compiler_params=pltpu.CompilerParams(
            dimension_semantics=("parallel", "parallel")),
    )(xp, alpha, nbias, wp, bp)
    if Mp != M or Np != N:
        out = out[:M, :N]
    return out


def layer_norm(x3d, alpha, bias, *, out_dtype=jnp.bfloat16, tm_pref=512):
    """Standalone row-tiled LayerNorm (encoder / decoder final norms)."""
    B, S, D = x3d.shape
    M = B * S
    x = x3d.reshape(M, D)
    tm, Mp = _tile(M, tm_pref)
    xp = jnp.pad(x, ((0, Mp - M), (0, 0))) if Mp != M else x
    out = pl.pallas_call(
        _norm_kernel,
        out_shape=jax.ShapeDtypeStruct((Mp, D), out_dtype),
        grid=(Mp // tm,),
        in_specs=[pl.BlockSpec((tm, D), lambda i: (i, 0)),
                  pl.BlockSpec((1, D), lambda i: (0, 0)),
                  pl.BlockSpec((1, D), lambda i: (0, 0))],
        out_specs=pl.BlockSpec((tm, D), lambda i: (i, 0)),
        compiler_params=pltpu.CompilerParams(dimension_semantics=("parallel",)),
    )(xp, alpha, bias)
    if Mp != M:
        out = out[:M]
    return out.reshape(B, S, D)


def fused_attention(q, k, v, mask, wo, bo, residual):
    """Multi-head attention + fused out-projection + bias + residual.

    q: (B, H, Sq, dk) bf16;  k, v: (B, H, Sk, dk) bf16;
    mask: (B, Sm, Sk) int (Sm in {1, Sq});  residual: (B, Sq, D) bf16.
    Returns (B, Sq, D) bf16.
    """
    B, H, Sq, dk = q.shape
    Sk = k.shape[2]
    D = H * dk
    Sm = mask.shape[1]

    # q-tile axis: keeps per-step VMEM bounded and adds parallel grid points.
    tq = 256 if (Sq > 256 and Sq % 256 == 0) else Sq

    if Sm == 1:
        m_spec = pl.BlockSpec((1, 1, Sk), lambda b, qi: (b, 0, 0))
    else:
        m_spec = pl.BlockSpec((1, tq, Sk), lambda b, qi: (b, qi, 0))

    return pl.pallas_call(
        partial(_attn_kernel, heads=H),
        out_shape=jax.ShapeDtypeStruct((B, Sq, D), jnp.bfloat16),
        grid=(B, Sq // tq),
        in_specs=[
            pl.BlockSpec((1, H, tq, dk), lambda b, qi: (b, 0, qi, 0)),
            pl.BlockSpec((1, H, Sk, dk), lambda b, qi: (b, 0, 0, 0)),
            pl.BlockSpec((1, H, Sk, dk), lambda b, qi: (b, 0, 0, 0)),
            m_spec,
            pl.BlockSpec((D, D), lambda b, qi: (0, 0)),
            pl.BlockSpec((1, D), lambda b, qi: (0, 0)),
            pl.BlockSpec((1, tq, D), lambda b, qi: (b, qi, 0)),
        ],
        out_specs=pl.BlockSpec((1, tq, D), lambda b, qi: (b, qi, 0)),
        compiler_params=pltpu.CompilerParams(
            dimension_semantics=("parallel", "parallel")),
    )(q, k, v, mask, wo, bo, residual)


# ------------------------------ model pieces --------------------------------

def embed_pe(tokens, embed_table, pe_table, d_model):
    # Embedding gather + positional encoding: JAX glue (not a hot path).
    x = jnp.take(embed_table, tokens, axis=0) * math.sqrt(d_model)
    S = tokens.shape[1]
    return (x + pe_table[:S][None, :, :]).astype(jnp.bfloat16)


def _split_qkv(qkv, B, S, heads, dk, n):
    """(B*S, n*H*dk) packed projection -> n tensors of (B, H, S, dk)."""
    t = qkv.reshape(B, S, n, heads, dk)
    return [t[:, :, i].transpose(0, 2, 1, 3) for i in range(n)]


def encoder_layer(p, x, mask, heads):
    B, S, D = x.shape
    dk = D // heads
    x2d = x.reshape(B * S, D)
    # norm1 fused into the packed QKV projection; out-proj + residual fused
    # into the attention kernel.
    qkv = norm_matmul(x2d, p["norm1"]["alpha"], p["norm1"]["bias"],
                      p["attn"]["wqkv"], p["attn"]["bqkv"])
    q, k, v = _split_qkv(qkv, B, S, heads, dk, 3)
    x = fused_attention(q, k, v, mask, p["attn"]["wo"], p["attn"]["bo"], x)
    # norm2 fused into FF1 (+ReLU); residual fused into FF2.
    x2d = x.reshape(B * S, D)
    h = norm_matmul(x2d, p["norm2"]["alpha"], p["norm2"]["bias"],
                    p["ff"]["w1"], p["ff"]["b1"], relu=True)
    x2d = matmul(h, p["ff"]["w2"], p["ff"]["b2"], residual=x2d)
    return x2d.reshape(B, S, D)


def decoder_layer(p, x, e2d, Sk, src_mask, trg_mask, heads):
    B, S, D = x.shape
    dk = D // heads
    x2d = x.reshape(B * S, D)
    # masked self-attention
    qkv = norm_matmul(x2d, p["norm1"]["alpha"], p["norm1"]["bias"],
                      p["attn1"]["wqkv"], p["attn1"]["bqkv"])
    q, k, v = _split_qkv(qkv, B, S, heads, dk, 3)
    x = fused_attention(q, k, v, trg_mask, p["attn1"]["wo"], p["attn1"]["bo"], x)
    # cross-attention (K/V from encoder outputs via a fused (D, 2D) projection)
    x2d = x.reshape(B * S, D)
    qc = norm_matmul(x2d, p["norm2"]["alpha"], p["norm2"]["bias"],
                     p["attn2"]["wq"], p["attn2"]["bq"])
    kv = matmul(e2d, p["attn2"]["wkv"], p["attn2"]["bkv"])
    kc, vc = _split_qkv(kv, B, Sk, heads, dk, 2)
    qh = qc.reshape(B, S, heads, dk).transpose(0, 2, 1, 3)
    x = fused_attention(qh, kc, vc, src_mask, p["attn2"]["wo"], p["attn2"]["bo"], x)
    # feed-forward
    x2d = x.reshape(B * S, D)
    h = norm_matmul(x2d, p["norm3"]["alpha"], p["norm3"]["bias"],
                    p["ff"]["w1"], p["ff"]["b1"], relu=True)
    x2d = matmul(h, p["ff"]["w2"], p["ff"]["b2"], residual=x2d)
    return x2d.reshape(B, S, D)


def encoder_forward(p, src, mask, heads, d_model):
    x = embed_pe(src, p["embed"], p["pe"], d_model)
    for lp in p["layers"]:
        x = encoder_layer(lp, x, mask, heads)
    return layer_norm(x, p["norm"]["alpha"], p["norm"]["bias"])


def decoder_forward(p, trg, e_outputs, src_mask, trg_mask, heads, d_model):
    B, Sk, D = e_outputs.shape
    e2d = e_outputs.reshape(B * Sk, D)
    x = embed_pe(trg, p["embed"], p["pe"], d_model)
    for lp in p["layers"]:
        x = decoder_layer(lp, x, e2d, Sk, src_mask, trg_mask, heads)
    # Final decoder Norm applied ONCE so the vocab projection is a plain
    # K-tiled matmul (no per-vocab-tile norm recompute).
    return layer_norm(x, p["norm"]["alpha"], p["norm"]["bias"])


def transformer_forward(params, src, trg, src_mask, trg_mask, heads, d_model):
    e_outputs = encoder_forward(params["encoder"], src, src_mask, heads, d_model)
    d_x = decoder_forward(params["decoder"], trg, e_outputs,
                          src_mask, trg_mask, heads, d_model)
    B, T, D = d_x.shape
    V = params["out_w"].shape[1]
    out = matmul(d_x.reshape(B * T, D), params["out_w"], params["out_b"],
                 out_dtype=jnp.float32)
    return out.reshape(B, T, V)


# ------------------------------ param init ----------------------------------

def _init_linear(key, din, dout):
    k1, k2 = jax.random.split(key)
    bound = 1.0 / math.sqrt(din)
    w = jax.random.uniform(k1, (din, dout), jnp.float32, -bound, bound)
    b = jax.random.uniform(k2, (1, dout), jnp.float32, -bound, bound)
    return w, b


def _init_self_attn(key, d_model, dk):
    kq, kk, kv, ko = jax.random.split(key, 4)
    wq, bq = _init_linear(kq, d_model, d_model)
    wk, bk = _init_linear(kk, d_model, d_model)
    wv, bv = _init_linear(kv, d_model, d_model)
    wo, bo = _init_linear(ko, d_model, d_model)
    scale = 1.0 / math.sqrt(dk)          # fold 1/sqrt(d_k) into the Q projection
    wq, bq = wq * scale, bq * scale
    return {"wqkv": jnp.concatenate([wq, wk, wv], axis=1).astype(jnp.bfloat16),
            "bqkv": jnp.concatenate([bq, bk, bv], axis=1),
            "wo": wo.astype(jnp.bfloat16), "bo": bo}


def _init_cross_attn(key, d_model, dk):
    kq, kk, kv, ko = jax.random.split(key, 4)
    wq, bq = _init_linear(kq, d_model, d_model)
    wk, bk = _init_linear(kk, d_model, d_model)
    wv, bv = _init_linear(kv, d_model, d_model)
    wo, bo = _init_linear(ko, d_model, d_model)
    scale = 1.0 / math.sqrt(dk)
    wq, bq = wq * scale, bq * scale
    return {"wq": wq.astype(jnp.bfloat16), "bq": bq,
            "wkv": jnp.concatenate([wk, wv], axis=1).astype(jnp.bfloat16),
            "bkv": jnp.concatenate([bk, bv], axis=1),
            "wo": wo.astype(jnp.bfloat16), "bo": bo}


def _init_ff(key, d_model, d_ff):
    k1, k2 = jax.random.split(key)
    w1, b1 = _init_linear(k1, d_model, d_ff)
    w2, b2 = _init_linear(k2, d_ff, d_model)
    return {"w1": w1.astype(jnp.bfloat16), "b1": b1,
            "w2": w2.astype(jnp.bfloat16), "b2": b2}


def _init_norm(d_model):
    return {"alpha": jnp.ones((1, d_model), jnp.float32),
            "bias": jnp.zeros((1, d_model), jnp.float32)}


def _build_pe(max_len, d_model):
    pos = jnp.arange(max_len, dtype=jnp.float32)[:, None]
    i = jnp.arange(0, d_model, 2, dtype=jnp.float32)[None, :]
    sin_part = jnp.sin(pos / jnp.power(10000.0, (2.0 * i) / d_model))
    cos_part = jnp.cos(pos / jnp.power(10000.0, (2.0 * (i + 1.0)) / d_model))
    pe = jnp.zeros((max_len, d_model), jnp.float32)
    pe = pe.at[:, 0::2].set(sin_part)
    pe = pe.at[:, 1::2].set(cos_part)
    return pe


def init_transformer(key, src_vocab, trg_vocab, d_model, max_text_len,
                     max_sum_len, N, heads, d_ff):
    dk = d_model // heads
    keys = jax.random.split(key, 8)

    def stack(key_, decoder):
        ks = jax.random.split(key_, N * 4)
        layers = []
        for n in range(N):
            base = ks[n * 4:(n + 1) * 4]
            lp = {"norm1": _init_norm(d_model),
                  "norm2": _init_norm(d_model),
                  "ff": _init_ff(base[0], d_model, d_ff)}
            if decoder:
                lp["norm3"] = _init_norm(d_model)
                lp["attn1"] = _init_self_attn(base[1], d_model, dk)
                lp["attn2"] = _init_cross_attn(base[2], d_model, dk)
            else:
                lp["attn"] = _init_self_attn(base[1], d_model, dk)
            layers.append(lp)
        return layers

    enc = {"embed": 0.1 * jax.random.normal(keys[0], (src_vocab, d_model), jnp.float32),
           "pe": _build_pe(max_text_len, d_model),
           "layers": stack(keys[1], decoder=False),
           "norm": _init_norm(d_model)}
    dec = {"embed": 0.1 * jax.random.normal(keys[2], (trg_vocab, d_model), jnp.float32),
           "pe": _build_pe(max_sum_len, d_model),
           "layers": stack(keys[3], decoder=True),
           "norm": _init_norm(d_model)}
    out_w, out_b = _init_linear(keys[4], d_model, trg_vocab)
    return {"encoder": enc, "decoder": dec,
            "out_w": out_w.astype(jnp.bfloat16), "out_b": out_b}


# ---------------------------------- main -------------------------------------

if __name__ == "__main__":
    # Small config consistent with Transformer(__init__)
    src_vocab, trg_vocab = 50, 60
    d_model, heads, N = 32, 4, 2
    d_ff = 4 * d_model      # TODO(synk): reference FeedForward default is d_ff=2048; scaled down for demo
    max_text_len, max_sum_len = 16, 16
    B, S_src, S_trg = 2, 8, 8

    root = jax.random.PRNGKey(0)
    k_params, k_src, k_trg = jax.random.split(root, 3)

    params = init_transformer(k_params, src_vocab, trg_vocab, d_model,
                              max_text_len, max_sum_len, N, heads, d_ff)

    src = jax.random.randint(k_src, (B, S_src), 1, src_vocab, dtype=jnp.int32)
    trg = jax.random.randint(k_trg, (B, S_trg), 1, trg_vocab, dtype=jnp.int32)

    # Masks exactly as the PyTorch pipeline builds them (passed in native int dtype):
    src_mask = jnp.ones((B, 1, S_src), dtype=jnp.int32)                     # pad mask (no pads here)
    trg_mask = jnp.tril(jnp.ones((S_trg, S_trg), dtype=jnp.int32))[None]    # no-peek mask
    trg_mask = jnp.broadcast_to(trg_mask, (B, S_trg, S_trg))

    fwd = jax.jit(partial(transformer_forward, heads=heads, d_model=d_model))
    out = fwd(params, src, trg, src_mask, trg_mask)
    out = jax.block_until_ready(out)

    assert out.shape == (B, S_trg, trg_vocab), out.shape
    assert jnp.all(jnp.isfinite(out))
    print("KERNEL_OK")
</pallas_src>

<mosaic_0001>
module attributes {stable_mosaic.version = 11 : i64} {
  func.func @_norm_matmul_kernel(%arg0: i32, %arg1: i32, %arg2: memref<16x32xbf16, #tpu.memory_space<vmem>>, %arg3: memref<1x32xf32, #tpu.memory_space<vmem>>, %arg4: memref<1x32xf32, #tpu.memory_space<vmem>>, %arg5: memref<32x96xbf16, #tpu.memory_space<vmem>>, %arg6: memref<1x96xf32, #tpu.memory_space<vmem>>, %arg7: memref<16x96xbf16, #tpu.memory_space<vmem>>) attributes {dimension_semantics = [#tpu.dimension_semantics<parallel>, #tpu.dimension_semantics<parallel>], iteration_bounds = array<i64: 1, 1>, scalar_prefetch = 0 : i64, scratch_operands = 0 : i64, tpu.core_type = #tpu.core_type<tc>, window_params = [{transform_indices = @transform_0, window_bounds = array<i64: 16, 32>}, {pipeline_mode = #tpu.pipeline_mode<synchronous>, transform_indices = @transform_1, window_bounds = array<i64: 1, 32>}, {pipeline_mode = #tpu.pipeline_mode<synchronous>, transform_indices = @transform_2, window_bounds = array<i64: 1, 32>}, {transform_indices = @transform_3, window_bounds = array<i64: 32, 96>}, {transform_indices = @transform_4, window_bounds = array<i64: 1, 96>}, {transform_indices = @transform_5, window_bounds = array<i64: 16, 96>}]} {
    %c0 = arith.constant 0 : index
    %c0_0 = arith.constant 0 : index
    %0 = vector.load %arg2[%c0, %c0_0] : memref<16x32xbf16, #tpu.memory_space<vmem>>, vector<16x32xbf16>
    %1 = arith.extf %0 : vector<16x32xbf16> to vector<16x32xf32>
    %cst = arith.constant dense<0.000000e+00> : vector<16xf32>
    %2 = vector.multi_reduction <add>, %1, %cst [1] : vector<16x32xf32> to vector<16xf32>
    %3 = vector.shape_cast %2 : vector<16xf32> to vector<16x1xf32>
    %cst_1 = arith.constant 3.200000e+01 : f32
    %4 = vector.broadcast %cst_1 : f32 to vector<16x1xf32>
    %5 = arith.divf %3, %4 : vector<16x1xf32>
    %6 = vector.broadcast %5 : vector<16x1xf32> to vector<16x32xf32>
    %7 = arith.subf %1, %6 : vector<16x32xf32>
    %8 = arith.mulf %7, %7 : vector<16x32xf32>
    %cst_2 = arith.constant dense<0.000000e+00> : vector<16xf32>
    %9 = vector.multi_reduction <add>, %8, %cst_2 [1] : vector<16x32xf32> to vector<16xf32>
    %10 = vector.shape_cast %9 : vector<16xf32> to vector<16x1xf32>
    %cst_3 = arith.constant 3.100000e+01 : f32
    %11 = vector.broadcast %cst_3 : f32 to vector<16x1xf32>
    %12 = arith.divf %10, %11 : vector<16x1xf32>
    %13 = math.sqrt %12 : vector<16x1xf32>
    %c0_4 = arith.constant 0 : index
    %c0_5 = arith.constant 0 : index
    %14 = vector.load %arg3[%c0_4, %c0_5] : memref<1x32xf32, #tpu.memory_space<vmem>>, vector<1x32xf32>
    %15 = vector.broadcast %5 : vector<16x1xf32> to vector<16x32xf32>
    %16 = arith.subf %1, %15 : vector<16x32xf32>
    %17 = vector.broadcast %14 : vector<1x32xf32> to vector<16x32xf32>
    %18 = arith.mulf %17, %16 : vector<16x32xf32>
    %cst_6 = arith.constant 9.99999997E-7 : f32
    %19 = vector.broadcast %cst_6 : f32 to vector<16x1xf32>
    %20 = arith.addf %13, %19 : vector<16x1xf32>
    %21 = vector.broadcast %20 : vector<16x1xf32> to vector<16x32xf32>
    %22 = arith.divf %18, %21 : vector<16x32xf32>
    %c0_7 = arith.constant 0 : index
    %c0_8 = arith.constant 0 : index
    %23 = vector.load %arg4[%c0_7, %c0_8] : memref<1x32xf32, #tpu.memory_space<vmem>>, vector<1x32xf32>
    %24 = vector.broadcast %23 : vector<1x32xf32> to vector<16x32xf32>
    %25 = arith.addf %22, %24 : vector<16x32xf32>
    %26 = arith.truncf %25 : vector<16x32xf32> to vector<16x32xbf16>
    %c0_9 = arith.constant 0 : index
    %c0_10 = arith.constant 0 : index
    %27 = vector.load %arg5[%c0_9, %c0_10] : memref<32x96xbf16, #tpu.memory_space<vmem>>, vector<32x96xbf16>
    %cst_11 = arith.constant dense<0.000000e+00> : vector<16x96xf32>
    %28 = tpu.matmul %26, %27, %cst_11 {dimension_numbers = #tpu.dot_dimension_numbers<[1], [0], [0], [1], [0, 0, 1, 1], [], []>} : vector<16x32xbf16>, vector<32x96xbf16>, vector<16x96xf32> -> vector<16x96xf32>
    %c0_12 = arith.constant 0 : index
    %c0_13 = arith.constant 0 : index
    %29 = vector.load %arg6[%c0_12, %c0_13] : memref<1x96xf32, #tpu.memory_space<vmem>>, vector<1x96xf32>
    %30 = vector.broadcast %29 : vector<1x96xf32> to vector<16x96xf32>
    %31 = arith.addf %28, %30 : vector<16x96xf32>
    %32 = arith.truncf %31 : vector<16x96xf32> to vector<16x96xbf16>
    %c0_14 = arith.constant 0 : index
    %c0_15 = arith.constant 0 : index
    %33 = vector.load %arg7[%c0_14, %c0_15] : memref<16x96xbf16, #tpu.memory_space<vmem>>, vector<16x96xbf16>
    tpu.vector_store %arg7[%c0_14, %c0_15], %32 {strides = array<i32>} : memref<16x96xbf16, #tpu.memory_space<vmem>>, vector<16x96xbf16>,
    return
  }
  func.func @transform_0(%arg0: i32, %arg1: i32) -> (i32, i32) {
    %c0_i32 = arith.constant 0 : i32
    %c0_i32_0 = arith.constant 0 : i32
    return %arg0, %c0_i32 : i32, i32
  }
  func.func @transform_1(%arg0: i32, %arg1: i32) -> (i32, i32) {
    %c0_i32 = arith.constant 0 : i32
    %c0_i32_0 = arith.constant 0 : i32
    %c0_i32_1 = arith.constant 0 : i32
    return %c0_i32, %c0_i32_0 : i32, i32
  }
  func.func @transform_2(%arg0: i32, %arg1: i32) -> (i32, i32) {
    %c0_i32 = arith.constant 0 : i32
    %c0_i32_0 = arith.constant 0 : i32
    %c0_i32_1 = arith.constant 0 : i32
    return %c0_i32, %c0_i32_0 : i32, i32
  }
  func.func @transform_3(%arg0: i32, %arg1: i32) -> (i32, i32) {
    %c0_i32 = arith.constant 0 : i32
    %c0_i32_0 = arith.constant 0 : i32
    return %c0_i32, %arg1 : i32, i32
  }
  func.func @transform_4(%arg0: i32, %arg1: i32) -> (i32, i32) {
    %c0_i32 = arith.constant 0 : i32
    %c0_i32_0 = arith.constant 0 : i32
    return %c0_i32, %arg1 : i32, i32
  }
  func.func @transform_5(%arg0: i32, %arg1: i32) -> (i32, i32) {
    %c0_i32 = arith.constant 0 : i32
    return %arg0, %arg1 : i32, i32
  }
}

module attributes {stable_mosaic.version = 11 : i64} {
  func.func @_norm_matmul_kernel(%arg0: i32, %arg1: i32, %arg2: memref<16x32xbf16, #tpu.memory_space<vmem>>, %arg3: memref<1x32xf32, #tpu.memory_space<vmem>>, %arg4: memref<1x32xf32, #tpu.memory_space<vmem>>, %arg5: memref<32x32xbf16, #tpu.memory_space<vmem>>, %arg6: memref<1x32xf32, #tpu.memory_space<vmem>>, %arg7: memref<16x32xbf16, #tpu.memory_space<vmem>>) attributes {dimension_semantics = [#tpu.dimension_semantics<parallel>, #tpu.dimension_semantics<parallel>], iteration_bounds = array<i64: 1, 1>, scalar_prefetch = 0 : i64, scratch_operands = 0 : i64, tpu.core_type = #tpu.core_type<tc>, window_params = [{transform_indices = @transform_0, window_bounds = array<i64: 16, 32>}, {pipeline_mode = #tpu.pipeline_mode<synchronous>, transform_indices = @transform_1, window_bounds = array<i64: 1, 32>}, {pipeline_mode = #tpu.pipeline_mode<synchronous>, transform_indices = @transform_2, window_bounds = array<i64: 1, 32>}, {transform_indices = @transform_3, window_bounds = array<i64: 32, 32>}, {transform_indices = @transform_4, window_bounds = array<i64: 1, 32>}, {transform_indices = @transform_5, window_bounds = array<i64: 16, 32>}]} {
    %c0 = arith.constant 0 : index
    %c0_0 = arith.constant 0 : index
    %0 = vector.load %arg2[%c0, %c0_0] : memref<16x32xbf16, #tpu.memory_space<vmem>>, vector<16x32xbf16>
    %1 = arith.extf %0 : vector<16x32xbf16> to vector<16x32xf32>
    %cst = arith.constant dense<0.000000e+00> : vector<16xf32>
    %2 = vector.multi_reduction <add>, %1, %cst [1] : vector<16x32xf32> to vector<16xf32>
    %3 = vector.shape_cast %2 : vector<16xf32> to vector<16x1xf32>
    %cst_1 = arith.constant 3.200000e+01 : f32
    %4 = vector.broadcast %cst_1 : f32 to vector<16x1xf32>
    %5 = arith.divf %3, %4 : vector<16x1xf32>
    %6 = vector.broadcast %5 : vector<16x1xf32> to vector<16x32xf32>
    %7 = arith.subf %1, %6 : vector<16x32xf32>
    %8 = arith.mulf %7, %7 : vector<16x32xf32>
    %cst_2 = arith.constant dense<0.000000e+00> : vector<16xf32>
    %9 = vector.multi_reduction <add>, %8, %cst_2 [1] : vector<16x32xf32> to vector<16xf32>
    %10 = vector.shape_cast %9 : vector<16xf32> to vector<16x1xf32>
    %cst_3 = arith.constant 3.100000e+01 : f32
    %11 = vector.broadcast %cst_3 : f32 to vector<16x1xf32>
    %12 = arith.divf %10, %11 : vector<16x1xf32>
    %13 = math.sqrt %12 : vector<16x1xf32>
    %c0_4 = arith.constant 0 : index
    %c0_5 = arith.constant 0 : index
    %14 = vector.load %arg3[%c0_4, %c0_5] : memref<1x32xf32, #tpu.memory_space<vmem>>, vector<1x32xf32>
    %15 = vector.broadcast %5 : vector<16x1xf32> to vector<16x32xf32>
    %16 = arith.subf %1, %15 : vector<16x32xf32>
    %17 = vector.broadcast %14 : vector<1x32xf32> to vector<16x32xf32>
    %18 = arith.mulf %17, %16 : vector<16x32xf32>
    %cst_6 = arith.constant 9.99999997E-7 : f32
    %19 = vector.broadcast %cst_6 : f32 to vector<16x1xf32>
    %20 = arith.addf %13, %19 : vector<16x1xf32>
    %21 = vector.broadcast %20 : vector<16x1xf32> to vector<16x32xf32>
    %22 = arith.divf %18, %21 : vector<16x32xf32>
    %c0_7 = arith.constant 0 : index
    %c0_8 = arith.constant 0 : index
    %23 = vector.load %arg4[%c0_7, %c0_8] : memref<1x32xf32, #tpu.memory_space<vmem>>, vector<1x32xf32>
    %24 = vector.broadcast %23 : vector<1x32xf32> to vector<16x32xf32>
    %25 = arith.addf %22, %24 : vector<16x32xf32>
    %26 = arith.truncf %25 : vector<16x32xf32> to vector<16x32xbf16>
    %c0_9 = arith.constant 0 : index
    %c0_10 = arith.constant 0 : index
    %27 = vector.load %arg5[%c0_9, %c0_10] : memref<32x32xbf16, #tpu.memory_space<vmem>>, vector<32x32xbf16>
    %cst_11 = arith.constant dense<0.000000e+00> : vector<16x32xf32>
    %28 = tpu.matmul %26, %27, %cst_11 {dimension_numbers = #tpu.dot_dimension_numbers<[1], [0], [0], [1], [0, 0, 1, 1], [], []>} : vector<16x32xbf16>, vector<32x32xbf16>, vector<16x32xf32> -> vector<16x32xf32>
    %c0_12 = arith.constant 0 : index
    %c0_13 = arith.constant 0 : index
    %29 = vector.load %arg6[%c0_12, %c0_13] : memref<1x32xf32, #tpu.memory_space<vmem>>, vector<1x32xf32>
    %30 = vector.broadcast %29 : vector<1x32xf32> to vector<16x32xf32>
    %31 = arith.addf %28, %30 : vector<16x32xf32>
    %32 = arith.truncf %31 : vector<16x32xf32> to vector<16x32xbf16>
    %c0_14 = arith.constant 0 : index
    %c0_15 = arith.constant 0 : index
    %33 = vector.load %arg7[%c0_14, %c0_15] : memref<16x32xbf16, #tpu.memory_space<vmem>>, vector<16x32xbf16>
    tpu.vector_store %arg7[%c0_14, %c0_15], %32 {strides = array<i32>} : memref<16x32xbf16, #tpu.memory_space<vmem>>, vector<16x32xbf16>,
    return
  }
  func.func @transform_0(%arg0: i32, %arg1: i32) -> (i32, i32) {
    %c0_i32 = arith.constant 0 : i32
    %c0_i32_0 = arith.constant 0 : i32
    return %arg0, %c0_i32 : i32, i32
  }
  func.func @transform_1(%arg0: i32, %arg1: i32) -> (i32, i32) {
    %c0_i32 = arith.constant 0 : i32
    %c0_i32_0 = arith.constant 0 : i32
    %c0_i32_1 = arith.constant 0 : i32
    return %c0_i32, %c0_i32_0 : i32, i32
  }
  func.func @transform_2(%arg0: i32, %arg1: i32) -> (i32, i32) {
    %c0_i32 = arith.constant 0 : i32
    %c0_i32_0 = arith.constant 0 : i32
    %c0_i32_1 = arith.constant 0 : i32
    return %c0_i32, %c0_i32_0 : i32, i32
  }
  func.func @transform_3(%arg0: i32, %arg1: i32) -> (i32, i32) {
    %c0_i32 = arith.constant 0 : i32
    %c0_i32_0 = arith.constant 0 : i32
    return %c0_i32, %arg1 : i32, i32
  }
  func.func @transform_4(%arg0: i32, %arg1: i32) -> (i32, i32) {
    %c0_i32 = arith.constant 0 : i32
    %c0_i32_0 = arith.constant 0 : i32
    return %c0_i32, %arg1 : i32, i32
  }
  func.func @transform_5(%arg0: i32, %arg1: i32) -> (i32, i32) {
    %c0_i32 = arith.constant 0 : i32
    return %arg0, %arg1 : i32, i32
  }
}

module attributes {stable_mosaic.version = 11 : i64} {
  func.func @_attn_kernel(%arg0: i32, %arg1: i32, %arg2: memref<1x4x8x8xbf16, #tpu.memory_space<vmem>>, %arg3: memref<1x4x8x8xbf16, #tpu.memory_space<vmem>>, %arg4: memref<1x4x8x8xbf16, #tpu.memory_space<vmem>>, %arg5: memref<1x8x8xi32, #tpu.memory_space<vmem>>, %arg6: memref<32x32xbf16, #tpu.memory_space<vmem>>, %arg7: memref<1x32xf32, #tpu.memory_space<vmem>>, %arg8: memref<1x8x32xbf16, #tpu.memory_space<vmem>>, %arg9: memref<1x8x32xbf16, #tpu.memory_space<vmem>>) attributes {dimension_semantics = [#tpu.dimension_semantics<parallel>, #tpu.dimension_semantics<parallel>], iteration_bounds = array<i64: 2, 1>, scalar_prefetch = 0 : i64, scratch_operands = 0 : i64, tpu.core_type = #tpu.core_type<tc>, window_params = [{transform_indices = @transform_0, window_bounds = array<i64: 1, 4, 8, 8>}, {transform_indices = @transform_1, window_bounds = array<i64: 1, 4, 8, 8>}, {transform_indices = @transform_2, window_bounds = array<i64: 1, 4, 8, 8>}, {transform_indices = @transform_3, window_bounds = array<i64: 1, 8, 8>}, {pipeline_mode = #tpu.pipeline_mode<synchronous>, transform_indices = @transform_4, window_bounds = array<i64: 32, 32>}, {pipeline_mode = #tpu.pipeline_mode<synchronous>, transform_indices = @transform_5, window_bounds = array<i64: 1, 32>}, {transform_indices = @transform_6, window_bounds = array<i64: 1, 8, 32>}, {transform_indices = @transform_7, window_bounds = array<i64: 1, 8, 32>}]} {
    %c0 = arith.constant 0 : index
    %c0_0 = arith.constant 0 : index
    %c0_1 = arith.constant 0 : index
    %c0_2 = arith.constant 0 : index
    %0 = vector.load %arg2[%c0, %c0_0, %c0_1, %c0_2] : memref<1x4x8x8xbf16, #tpu.memory_space<vmem>>, vector<1x4x8x8xbf16>
    %1 = vector.shape_cast %0 : vector<1x4x8x8xbf16> to vector<4x8x8xbf16>
    %c0_3 = arith.constant 0 : index
    %c0_4 = arith.constant 0 : index
    %c0_5 = arith.constant 0 : index
    %c0_6 = arith.constant 0 : index
    %2 = vector.load %arg3[%c0_3, %c0_4, %c0_5, %c0_6] : memref<1x4x8x8xbf16, #tpu.memory_space<vmem>>, vector<1x4x8x8xbf16>
    %3 = vector.shape_cast %2 : vector<1x4x8x8xbf16> to vector<4x8x8xbf16>
    %c0_7 = arith.constant 0 : index
    %c0_8 = arith.constant 0 : index
    %c0_9 = arith.constant 0 : index
    %c0_10 = arith.constant 0 : index
    %4 = vector.load %arg4[%c0_7, %c0_8, %c0_9, %c0_10] : memref<1x4x8x8xbf16, #tpu.memory_space<vmem>>, vector<1x4x8x8xbf16>
    %5 = vector.shape_cast %4 : vector<1x4x8x8xbf16> to vector<4x8x8xbf16>
    "tpu.trace_start"() <{level = 10 : i32, message = "hqd,hkd->hqk"}> : () -> ()
    %cst = arith.constant dense<0.000000e+00> : vector<4x8x8xf32>
    %6 = tpu.matmul %1, %3, %cst {dimension_numbers = #tpu.dot_dimension_numbers<[2], [2], [1], [1], [0, 0, 0, 1, 1, 1], [0], [0]>} : vector<4x8x8xbf16>, vector<4x8x8xbf16>, vector<4x8x8xf32> -> vector<4x8x8xf32>
    "tpu.trace_stop"() : () -> ()
    %c0_11 = arith.constant 0 : index
    %c0_12 = arith.constant 0 : index
    %c0_13 = arith.constant 0 : index
    %7 = vector.load %arg5[%c0_11, %c0_12, %c0_13] : memref<1x8x8xi32, #tpu.memory_space<vmem>>, vector<1x8x8xi32>
    %8 = vector.shape_cast %7 : vector<1x8x8xi32> to vector<8x8xi32>
    %c0_i32 = arith.constant 0 : i32
    %9 = vector.broadcast %c0_i32 : i32 to vector<8x8xi32>
    %10 = arith.cmpi eq, %8, %9 : vector<8x8xi32>
    %11 = vector.shape_cast %10 : vector<8x8xi1> to vector<1x8x8xi1>
    %12 = vector.shape_cast %11 : vector<1x8x8xi1> to vector<1x8x8xi1>
    %13 = vector.broadcast %12 : vector<1x8x8xi1> to vector<4x8x8xi1>
    %cst_14 = arith.constant -1.000000e+09 : f32
    %14 = vector.broadcast %cst_14 : f32 to vector<4x8x8xf32>
    %15 = arith.select %13, %14, %6 : vector<4x8x8xi1>, vector<4x8x8xf32>
    %cst_15 = arith.constant dense<0xFF800000> : vector<4x8xf32>
    %16 = vector.multi_reduction <maximumf>, %15, %cst_15 [2] : vector<4x8x8xf32> to vector<4x8xf32>
    %17 = vector.shape_cast %16 : vector<4x8xf32> to vector<4x8x1xf32>
    %18 = vector.broadcast %17 : vector<4x8x1xf32> to vector<4x8x8xf32>
    %19 = arith.subf %15, %18 : vector<4x8x8xf32>
    %20 = math.exp %19 : vector<4x8x8xf32>
    %cst_16 = arith.constant dense<0.000000e+00> : vector<4x8xf32>
    %21 = vector.multi_reduction <add>, %20, %cst_16 [2] : vector<4x8x8xf32> to vector<4x8xf32>
    %22 = vector.shape_cast %21 : vector<4x8xf32> to vector<4x8x1xf32>
    %23 = tpu.reciprocal %22 {approx = true} : vector<4x8x1xf32> -> vector<4x8x1xf32>
    %24 = vector.broadcast %23 : vector<4x8x1xf32> to vector<4x8x8xf32>
    %25 = arith.mulf %20, %24 : vector<4x8x8xf32>
    %26 = arith.truncf %25 : vector<4x8x8xf32> to vector<4x8x8xbf16>
    "tpu.trace_start"() <{level = 10 : i32, message = "hqk,hkd->hqd"}> : () -> ()
    %cst_17 = arith.constant dense<0.000000e+00> : vector<4x8x8xf32>
    %27 = tpu.matmul %26, %5, %cst_17 {dimension_numbers = #tpu.dot_dimension_numbers<[2], [1], [1], [2], [0, 0, 0, 1, 1, 2], [0], [0]>} : vector<4x8x8xbf16>, vector<4x8x8xbf16>, vector<4x8x8xf32> -> vector<4x8x8xf32>
    "tpu.trace_stop"() : () -> ()
    %c0_18 = arith.constant 0 : index
    %c0_19 = arith.constant 0 : index
    %c0_20 = arith.constant 0 : index
    %28 = vector.load %arg8[%c0_18, %c0_19, %c0_20] : memref<1x8x32xbf16, #tpu.memory_space<vmem>>, vector<1x8x32xbf16>
    %29 = vector.shape_cast %28 : vector<1x8x32xbf16> to vector<8x32xbf16>
    %30 = arith.extf %29 : vector<8x32xbf16> to vector<8x32xf32>
    %c0_21 = arith.constant 0 : index
    %c0_22 = arith.constant 0 : index
    %31 = vector.load %arg7[%c0_21, %c0_22] : memref<1x32xf32, #tpu.memory_space<vmem>>, vector<1x32xf32>
    %32 = vector.broadcast %31 : vector<1x32xf32> to vector<8x32xf32>
    %33 = arith.addf %30, %32 : vector<8x32xf32>
    %34 = vector.extract_strided_slice %27 {offsets = [0, 0, 0], sizes = [1, 8, 8], strides = [1, 1, 1]} : vector<4x8x8xf32> to vector<1x8x8xf32>
    %35 = vector.shape_cast %34 : vector<1x8x8xf32> to vector<8x8xf32>
    %36 = arith.truncf %35 : vector<8x8xf32> to vector<8x8xbf16>
    %c0_23 = arith.constant 0 : index
    %c0_24 = arith.constant 0 : index
    %37 = vector.load %arg6[%c0_23, %c0_24] : memref<32x32xbf16, #tpu.memory_space<vmem>>, vector<8x32xbf16>
    %cst_25 = arith.constant dense<0.000000e+00> : vector<8x32xf32>
    %38 = tpu.matmul %36, %37, %cst_25 {dimension_numbers = #tpu.dot_dimension_numbers<[1], [0], [0], [1], [0, 0, 1, 1], [], []>} : vector<8x8xbf16>, vector<8x32xbf16>, vector<8x32xf32> -> vector<8x32xf32>
    %39 = arith.addf %33, %38 : vector<8x32xf32>
    %40 = vector.extract_strided_slice %27 {offsets = [1, 0, 0], sizes = [1, 8, 8], strides = [1, 1, 1]} : vector<4x8x8xf32> to vector<1x8x8xf32>
    %41 = vector.shape_cast %40 : vector<1x8x8xf32> to vector<8x8xf32>
    %42 = arith.truncf %41 : vector<8x8xf32> to vector<8x8xbf16>
    %c8 = arith.constant 8 : index
    %c0_26 = arith.constant 0 : index
    %43 = vector.load %arg6[%c8, %c0_26] : memref<32x32xbf16, #tpu.memory_space<vmem>>, vector<8x32xbf16>
    %cst_27 = arith.constant dense<0.000000e+00> : vector<8x32xf32>
    %44 = tpu.matmul %42, %43, %cst_27 {dimension_numbers = #tpu.dot_dimension_numbers<[1], [0], [0], [1], [0, 0, 1, 1], [], []>} : vector<8x8xbf16>, vector<8x32xbf16>, vector<8x32xf32> -> vector<8x32xf32>
    %45 = arith.addf %39, %44 : vector<8x32xf32>
    %46 = vector.extract_strided_slice %27 {offsets = [2, 0, 0], sizes = [1, 8, 8], strides = [1, 1, 1]} : vector<4x8x8xf32> to vector<1x8x8xf32>
    %47 = vector.shape_cast %46 : vector<1x8x8xf32> to vector<8x8xf32>
    %48 = arith.truncf %47 : vector<8x8xf32> to vector<8x8xbf16>
    %c16 = arith.constant 16 : index
    %c0_28 = arith.constant 0 : index
    %49 = vector.load %arg6[%c16, %c0_28] : memref<32x32xbf16, #tpu.memory_space<vmem>>, vector<8x32xbf16>
    %cst_29 = arith.constant dense<0.000000e+00> : vector<8x32xf32>
    %50 = tpu.matmul %48, %49, %cst_29 {dimension_numbers = #tpu.dot_dimension_numbers<[1], [0], [0], [1], [0, 0, 1, 1], [], []>} : vector<8x8xbf16>, vector<8x32xbf16>, vector<8x32xf32> -> vector<8x32xf32>
    %51 = arith.addf %45, %50 : vector<8x32xf32>
    %52 = vector.extract_strided_slice %27 {offsets = [3, 0, 0], sizes = [1, 8, 8], strides = [1, 1, 1]} : vector<4x8x8xf32> to vector<1x8x8xf32>
    %53 = vector.shape_cast %52 : vector<1x8x8xf32> to vector<8x8xf32>
    %54 = arith.truncf %53 : vector<8x8xf32> to vector<8x8xbf16>
    %c24 = arith.constant 24 : index
    %c0_30 = arith.constant 0 : index
    %55 = vector.load %arg6[%c24, %c0_30] : memref<32x32xbf16, #tpu.memory_space<vmem>>, vector<8x32xbf16>
    %cst_31 = arith.constant dense<0.000000e+00> : vector<8x32xf32>
    %56 = tpu.matmul %54, %55, %cst_31 {dimension_numbers = #tpu.dot_dimension_numbers<[1], [0], [0], [1], [0, 0, 1, 1], [], []>} : vector<8x8xbf16>, vector<8x32xbf16>, vector<8x32xf32> -> vector<8x32xf32>
    %57 = arith.addf %51, %56 : vector<8x32xf32>
    %58 = arith.truncf %57 : vector<8x32xf32> to vector<8x32xbf16>
    %c0_32 = arith.constant 0 : index
    %c0_33 = arith.constant 0 : index
    %c0_34 = arith.constant 0 : index
    %59 = vector.load %arg9[%c0_32, %c0_33, %c0_34] : memref<1x8x32xbf16, #tpu.memory_space<vmem>>, vector<1x8x32xbf16>
    %60 = vector.shape_cast %59 : vector<1x8x32xbf16> to vector<8x32xbf16>
    %61 = vector.shape_cast %58 : vector<8x32xbf16> to vector<1x8x32xbf16>
    tpu.vector_store %arg9[%c0_32, %c0_33, %c0_34], %61 {strides = array<i32>} : memref<1x8x32xbf16, #tpu.memory_space<vmem>>, vector<1x8x32xbf16>,
    return
  }
  func.func @transform_0(%arg0: i32, %arg1: i32) -> (i32, i32, i32, i32) {
    %c0_i32 = arith.constant 0 : i32
    %c0_i32_0 = arith.constant 0 : i32
    %c0_i32_1 = arith.constant 0 : i32
    return %arg0, %c0_i32, %arg1, %c0_i32_0 : i32, i32, i32, i32
  }
  func.func @transform_1(%arg0: i32, %arg1: i32) -> (i32, i32, i32, i32) {
    %c0_i32 = arith.constant 0 : i32
    %c0_i32_0 = arith.constant 0 : i32
    %c0_i32_1 = arith.constant 0 : i32
    %c0_i32_2 = arith.constant 0 : i32
    return %arg0, %c0_i32, %c0_i32_0, %c0_i32_1 : i32, i32, i32, i32
  }
  func.func @transform_2(%arg0: i32, %arg1: i32) -> (i32, i32, i32, i32) {
    %c0_i32 = arith.constant 0 : i32
    %c0_i32_0 = arith.constant 0 : i32
    %c0_i32_1 = arith.constant 0 : i32
    %c0_i32_2 = arith.constant 0 : i32
    return %arg0, %c0_i32, %c0_i32_0, %c0_i32_1 : i32, i32, i32, i32
  }
  func.func @transform_3(%arg0: i32, %arg1: i32) -> (i32, i32, i32) {
    %c0_i32 = arith.constant 0 : i32
    %c0_i32_0 = arith.constant 0 : i32
    return %arg0, %arg1, %c0_i32 : i32, i32, i32
  }
  func.func @transform_4(%arg0: i32, %arg1: i32) -> (i32, i32) {
    %c0_i32 = arith.constant 0 : i32
    %c0_i32_0 = arith.constant 0 : i32
    %c0_i32_1 = arith.constant 0 : i32
    return %c0_i32, %c0_i32_0 : i32, i32
  }
  func.func @transform_5(%arg0: i32, %arg1: i32) -> (i32, i32) {
    %c0_i32 = arith.constant 0 : i32
    %c0_i32_0 = arith.constant 0 : i32
    %c0_i32_1 = arith.constant 0 : i32
    return %c0_i32, %c0_i32_0 : i32, i32
  }
  func.func @transform_6(%arg0: i32, %arg1: i32) -> (i32, i32, i32) {
    %c0_i32 = arith.constant 0 : i32
    %c0_i32_0 = arith.constant 0 : i32
    return %arg0, %arg1, %c0_i32 : i32, i32, i32
  }
  func.func @transform_7(%arg0: i32, %arg1: i32) -> (i32, i32, i32) {
    %c0_i32 = arith.constant 0 : i32
    %c0_i32_0 = arith.constant 0 : i32
    return %arg0, %arg1, %c0_i32 : i32, i32, i32
  }
}

module attributes {stable_mosaic.version = 11 : i64} {
  func.func @_norm_matmul_kernel(%arg0: i32, %arg1: i32, %arg2: memref<16x32xbf16, #tpu.memory_space<vmem>>, %arg3: memref<1x32xf32, #tpu.memory_space<vmem>>, %arg4: memref<1x32xf32, #tpu.memory_space<vmem>>, %arg5: memref<32x128xbf16, #tpu.memory_space<vmem>>, %arg6: memref<1x128xf32, #tpu.memory_space<vmem>>, %arg7: memref<16x128xbf16, #tpu.memory_space<vmem>>) attributes {dimension_semantics = [#tpu.dimension_semantics<parallel>, #tpu.dimension_semantics<parallel>], iteration_bounds = array<i64: 1, 1>, scalar_prefetch = 0 : i64, scratch_operands = 0 : i64, tpu.core_type = #tpu.core_type<tc>, window_params = [{transform_indices = @transform_0, window_bounds = array<i64: 16, 32>}, {pipeline_mode = #tpu.pipeline_mode<synchronous>, transform_indices = @transform_1, window_bounds = array<i64: 1, 32>}, {pipeline_mode = #tpu.pipeline_mode<synchronous>, transform_indices = @transform_2, window_bounds = array<i64: 1, 32>}, {transform_indices = @transform_3, window_bounds = array<i64: 32, 128>}, {transform_indices = @transform_4, window_bounds = array<i64: 1, 128>}, {transform_indices = @transform_5, window_bounds = array<i64: 16, 128>}]} {
    %c0 = arith.constant 0 : index
    %c0_0 = arith.constant 0 : index
    %0 = vector.load %arg2[%c0, %c0_0] : memref<16x32xbf16, #tpu.memory_space<vmem>>, vector<16x32xbf16>
    %1 = arith.extf %0 : vector<16x32xbf16> to vector<16x32xf32>
    %cst = arith.constant dense<0.000000e+00> : vector<16xf32>
    %2 = vector.multi_reduction <add>, %1, %cst [1] : vector<16x32xf32> to vector<16xf32>
    %3 = vector.shape_cast %2 : vector<16xf32> to vector<16x1xf32>
    %cst_1 = arith.constant 3.200000e+01 : f32
    %4 = vector.broadcast %cst_1 : f32 to vector<16x1xf32>
    %5 = arith.divf %3, %4 : vector<16x1xf32>
    %6 = vector.broadcast %5 : vector<16x1xf32> to vector<16x32xf32>
    %7 = arith.subf %1, %6 : vector<16x32xf32>
    %8 = arith.mulf %7, %7 : vector<16x32xf32>
    %cst_2 = arith.constant dense<0.000000e+00> : vector<16xf32>
    %9 = vector.multi_reduction <add>, %8, %cst_2 [1] : vector<16x32xf32> to vector<16xf32>
    %10 = vector.shape_cast %9 : vector<16xf32> to vector<16x1xf32>
    %cst_3 = arith.constant 3.100000e+01 : f32
    %11 = vector.broadcast %cst_3 : f32 to vector<16x1xf32>
    %12 = arith.divf %10, %11 : vector<16x1xf32>
    %13 = math.sqrt %12 : vector<16x1xf32>
    %c0_4 = arith.constant 0 : index
    %c0_5 = arith.constant 0 : index
    %14 = vector.load %arg3[%c0_4, %c0_5] : memref<1x32xf32, #tpu.memory_space<vmem>>, vector<1x32xf32>
    %15 = vector.broadcast %5 : vector<16x1xf32> to vector<16x32xf32>
    %16 = arith.subf %1, %15 : vector<16x32xf32>
    %17 = vector.broadcast %14 : vector<1x32xf32> to vector<16x32xf32>
    %18 = arith.mulf %17, %16 : vector<16x32xf32>
    %cst_6 = arith.constant 9.99999997E-7 : f32
    %19 = vector.broadcast %cst_6 : f32 to vector<16x1xf32>
    %20 = arith.addf %13, %19 : vector<16x1xf32>
    %21 = vector.broadcast %20 : vector<16x1xf32> to vector<16x32xf32>
    %22 = arith.divf %18, %21 : vector<16x32xf32>
    %c0_7 = arith.constant 0 : index
    %c0_8 = arith.constant 0 : index
    %23 = vector.load %arg4[%c0_7, %c0_8] : memref<1x32xf32, #tpu.memory_space<vmem>>, vector<1x32xf32>
    %24 = vector.broadcast %23 : vector<1x32xf32> to vector<16x32xf32>
    %25 = arith.addf %22, %24 : vector<16x32xf32>
    %26 = arith.truncf %25 : vector<16x32xf32> to vector<16x32xbf16>
    %c0_9 = arith.constant 0 : index
    %c0_10 = arith.constant 0 : index
    %27 = vector.load %arg5[%c0_9, %c0_10] : memref<32x128xbf16, #tpu.memory_space<vmem>>, vector<32x128xbf16>
    %cst_11 = arith.constant dense<0.000000e+00> : vector<16x128xf32>
    %28 = tpu.matmul %26, %27, %cst_11 {dimension_numbers = #tpu.dot_dimension_numbers<[1], [0], [0], [1], [0, 0, 1, 1], [], []>} : vector<16x32xbf16>, vector<32x128xbf16>, vector<16x128xf32> -> vector<16x128xf32>
    %c0_12 = arith.constant 0 : index
    %c0_13 = arith.constant 0 : index
    %29 = vector.load %arg6[%c0_12, %c0_13] : memref<1x128xf32, #tpu.memory_space<vmem>>, vector<1x128xf32>
    %30 = vector.broadcast %29 : vector<1x128xf32> to vector<16x128xf32>
    %31 = arith.addf %28, %30 : vector<16x128xf32>
    %cst_14 = arith.constant 0.000000e+00 : f32
    %32 = vector.broadcast %cst_14 : f32 to vector<16x128xf32>
    %33 = arith.maximumf %31, %32 : vector<16x128xf32>
    %34 = arith.truncf %33 : vector<16x128xf32> to vector<16x128xbf16>
    %c0_15 = arith.constant 0 : index
    %c0_16 = arith.constant 0 : index
    %35 = vector.load %arg7[%c0_15, %c0_16] : memref<16x128xbf16, #tpu.memory_space<vmem>>, vector<16x128xbf16>
    tpu.vector_store %arg7[%c0_15, %c0_16], %34 {strides = array<i32>} : memref<16x128xbf16, #tpu.memory_space<vmem>>, vector<16x128xbf16>,
    return
  }
  func.func @transform_0(%arg0: i32, %arg1: i32) -> (i32, i32) {
    %c0_i32 = arith.constant 0 : i32
    %c0_i32_0 = arith.constant 0 : i32
    return %arg0, %c0_i32 : i32, i32
  }
  func.func @transform_1(%arg0: i32, %arg1: i32) -> (i32, i32) {
    %c0_i32 = arith.constant 0 : i32
    %c0_i32_0 = arith.constant 0 : i32
    %c0_i32_1 = arith.constant 0 : i32
    return %c0_i32, %c0_i32_0 : i32, i32
  }
  func.func @transform_2(%arg0: i32, %arg1: i32) -> (i32, i32) {
    %c0_i32 = arith.constant 0 : i32
    %c0_i32_0 = arith.constant 0 : i32
    %c0_i32_1 = arith.constant 0 : i32
    return %c0_i32, %c0_i32_0 : i32, i32
  }
  func.func @transform_3(%arg0: i32, %arg1: i32) -> (i32, i32) {
    %c0_i32 = arith.constant 0 : i32
    %c0_i32_0 = arith.constant 0 : i32
    return %c0_i32, %arg1 : i32, i32
  }
  func.func @transform_4(%arg0: i32, %arg1: i32) -> (i32, i32) {
    %c0_i32 = arith.constant 0 : i32
    %c0_i32_0 = arith.constant 0 : i32
    return %c0_i32, %arg1 : i32, i32
  }
  func.func @transform_5(%arg0: i32, %arg1: i32) -> (i32, i32) {
    %c0_i32 = arith.constant 0 : i32
    return %arg0, %arg1 : i32, i32
  }
}

module attributes {stable_mosaic.version = 11 : i64} {
  func.func @_matmul_kernel(%arg0: i32, %arg1: i32, %arg2: i32, %arg3: memref<16x128xbf16, #tpu.memory_space<vmem>>, %arg4: memref<128x32xbf16, #tpu.memory_space<vmem>>, %arg5: memref<1x32xf32, #tpu.memory_space<vmem>>, %arg6: memref<16x32xbf16, #tpu.memory_space<vmem>>, %arg7: memref<16x32xbf16, #tpu.memory_space<vmem>>, %arg8: memref<16x32xf32, #tpu.memory_space<vmem>>) attributes {dimension_semantics = [#tpu.dimension_semantics<parallel>, #tpu.dimension_semantics<parallel>, #tpu.dimension_semantics<arbitrary>], iteration_bounds = array<i64: 1, 1, 1>, scalar_prefetch = 0 : i64, scratch_operands = 1 : i64, tpu.core_type = #tpu.core_type<tc>, window_params = [{transform_indices = @transform_0, window_bounds = array<i64: 16, 128>}, {transform_indices = @transform_1, window_bounds = array<i64: 128, 32>}, {transform_indices = @transform_2, window_bounds = array<i64: 1, 32>}, {transform_indices = @transform_3, window_bounds = array<i64: 16, 32>}, {transform_indices = @transform_4, window_bounds = array<i64: 16, 32>}]} {
    %c0_i32 = arith.constant 0 : i32
    %0 = arith.cmpi eq, %arg2, %c0_i32 : i32
    %1 = arith.extui %0 : i1 to i32
    %c0_i32_0 = arith.constant 0 : i32
    %2 = arith.cmpi ne, %1, %c0_i32_0 : i32
    scf.if %2 {
      %cst_10 = arith.constant 0.000000e+00 : f32
      %12 = vector.broadcast %cst_10 : f32 to vector<16x32xf32>
      %c0_11 = arith.constant 0 : index
      %c0_12 = arith.constant 0 : index
      %13 = vector.load %arg8[%c0_11, %c0_12] : memref<16x32xf32, #tpu.memory_space<vmem>>, vector<16x32xf32>
      tpu.vector_store %arg8[%c0_11, %c0_12], %12 {strides = array<i32>} : memref<16x32xf32, #tpu.memory_space<vmem>>, vector<16x32xf32>,
    } else {
    }
    %c0 = arith.constant 0 : index
    %c0_1 = arith.constant 0 : index
    %3 = vector.load %arg8[%c0, %c0_1] : memref<16x32xf32, #tpu.memory_space<vmem>>, vector<16x32xf32>
    %c0_2 = arith.constant 0 : index
    %c0_3 = arith.constant 0 : index
    %4 = vector.load %arg3[%c0_2, %c0_3] : memref<16x128xbf16, #tpu.memory_space<vmem>>, vector<16x128xbf16>
    %c0_4 = arith.constant 0 : index
    %c0_5 = arith.constant 0 : index
    %5 = vector.load %arg4[%c0_4, %c0_5] : memref<128x32xbf16, #tpu.memory_space<vmem>>, vector<128x32xbf16>
    %cst = arith.constant dense<0.000000e+00> : vector<16x32xf32>
    %6 = tpu.matmul %4, %5, %cst {dimension_numbers = #tpu.dot_dimension_numbers<[1], [0], [0], [1], [0, 0, 1, 1], [], []>} : vector<16x128xbf16>, vector<128x32xbf16>, vector<16x32xf32> -> vector<16x32xf32>
    %7 = arith.addf %3, %6 : vector<16x32xf32>
    %c0_6 = arith.constant 0 : index
    %c0_7 = arith.constant 0 : index
    %8 = vector.load %arg8[%c0_6, %c0_7] : memref<16x32xf32, #tpu.memory_space<vmem>>, vector<16x32xf32>
    tpu.vector_store %arg8[%c0_6, %c0_7], %7 {strides = array<i32>} : memref<16x32xf32, #tpu.memory_space<vmem>>, vector<16x32xf32>,
    %c0_i32_8 = arith.constant 0 : i32
    %9 = arith.cmpi eq, %arg2, %c0_i32_8 : i32
    %10 = arith.extui %9 : i1 to i32
    %c0_i32_9 = arith.constant 0 : i32
    %11 = arith.cmpi ne, %10, %c0_i32_9 : i32
    scf.if %11 {
      %c0_10 = arith.constant 0 : index
      %c0_11 = arith.constant 0 : index
      %12 = vector.load %arg8[%c0_10, %c0_11] : memref<16x32xf32, #tpu.memory_space<vmem>>, vector<16x32xf32>
      %c0_12 = arith.constant 0 : index
      %c0_13 = arith.constant 0 : index
      %13 = vector.load %arg5[%c0_12, %c0_13] : memref<1x32xf32, #tpu.memory_space<vmem>>, vector<1x32xf32>
      %14 = vector.broadcast %13 : vector<1x32xf32> to vector<16x32xf32>
      %15 = arith.addf %12, %14 : vector<16x32xf32>
      %c0_14 = arith.constant 0 : index
      %c0_15 = arith.constant 0 : index
      %16 = vector.load %arg6[%c0_14, %c0_15] : memref<16x32xbf16, #tpu.memory_space<vmem>>, vector<16x32xbf16>
      %17 = arith.extf %16 : vector<16x32xbf16> to vector<16x32xf32>
      %18 = arith.addf %15, %17 : vector<16x32xf32>
      %19 = arith.truncf %18 : vector<16x32xf32> to vector<16x32xbf16>
      %c0_16 = arith.constant 0 : index
      %c0_17 = arith.constant 0 : index
      %20 = vector.load %arg7[%c0_16, %c0_17] : memref<16x32xbf16, #tpu.memory_space<vmem>>, vector<16x32xbf16>
      tpu.vector_store %arg7[%c0_16, %c0_17], %19 {strides = array<i32>} : memref<16x32xbf16, #tpu.memory_space<vmem>>, vector<16x32xbf16>,
    } else {
    }
    return
  }
  func.func @transform_0(%arg0: i32, %arg1: i32, %arg2: i32) -> (i32, i32) {
    %c0_i32 = arith.constant 0 : i32
    return %arg0, %arg2 : i32, i32
  }
  func.func @transform_1(%arg0: i32, %arg1: i32, %arg2: i32) -> (i32, i32) {
    %c0_i32 = arith.constant 0 : i32
    return %arg2, %arg1 : i32, i32
  }
  func.func @transform_2(%arg0: i32, %arg1: i32, %arg2: i32) -> (i32, i32) {
    %c0_i32 = arith.constant 0 : i32
    %c0_i32_0 = arith.constant 0 : i32
    return %c0_i32, %arg1 : i32, i32
  }
  func.func @transform_3(%arg0: i32, %arg1: i32, %arg2: i32) -> (i32, i32) {
    %c0_i32 = arith.constant 0 : i32
    return %arg0, %arg1 : i32, i32
  }
  func.func @transform_4(%arg0: i32, %arg1: i32, %arg2: i32) -> (i32, i32) {
    %c0_i32 = arith.constant 0 : i32
    return %arg0, %arg1 : i32, i32
  }
}

module attributes {stable_mosaic.version = 11 : i64} {
  func.func @_attn_kernel(%arg0: i32, %arg1: i32, %arg2: memref<1x4x8x8xbf16, #tpu.memory_space<vmem>>, %arg3: memref<1x4x8x8xbf16, #tpu.memory_space<vmem>>, %arg4: memref<1x4x8x8xbf16, #tpu.memory_space<vmem>>, %arg5: memref<1x1x8xi32, #tpu.memory_space<vmem>>, %arg6: memref<32x32xbf16, #tpu.memory_space<vmem>>, %arg7: memref<1x32xf32, #tpu.memory_space<vmem>>, %arg8: memref<1x8x32xbf16, #tpu.memory_space<vmem>>, %arg9: memref<1x8x32xbf16, #tpu.memory_space<vmem>>) attributes {dimension_semantics = [#tpu.dimension_semantics<parallel>, #tpu.dimension_semantics<parallel>], iteration_bounds = array<i64: 2, 1>, scalar_prefetch = 0 : i64, scratch_operands = 0 : i64, tpu.core_type = #tpu.core_type<tc>, window_params = [{transform_indices = @transform_0, window_bounds = array<i64: 1, 4, 8, 8>}, {transform_indices = @transform_1, window_bounds = array<i64: 1, 4, 8, 8>}, {transform_indices = @transform_2, window_bounds = array<i64: 1, 4, 8, 8>}, {transform_indices = @transform_3, window_bounds = array<i64: 1, 1, 8>}, {pipeline_mode = #tpu.pipeline_mode<synchronous>, transform_indices = @transform_4, window_bounds = array<i64: 32, 32>}, {pipeline_mode = #tpu.pipeline_mode<synchronous>, transform_indices = @transform_5, window_bounds = array<i64: 1, 32>}, {transform_indices = @transform_6, window_bounds = array<i64: 1, 8, 32>}, {transform_indices = @transform_7, window_bounds = array<i64: 1, 8, 32>}]} {
    %c0 = arith.constant 0 : index
    %c0_0 = arith.constant 0 : index
    %c0_1 = arith.constant 0 : index
    %c0_2 = arith.constant 0 : index
    %0 = vector.load %arg2[%c0, %c0_0, %c0_1, %c0_2] : memref<1x4x8x8xbf16, #tpu.memory_space<vmem>>, vector<1x4x8x8xbf16>
    %1 = vector.shape_cast %0 : vector<1x4x8x8xbf16> to vector<4x8x8xbf16>
    %c0_3 = arith.constant 0 : index
    %c0_4 = arith.constant 0 : index
    %c0_5 = arith.constant 0 : index
    %c0_6 = arith.constant 0 : index
    %2 = vector.load %arg3[%c0_3, %c0_4, %c0_5, %c0_6] : memref<1x4x8x8xbf16, #tpu.memory_space<vmem>>, vector<1x4x8x8xbf16>
    %3 = vector.shape_cast %2 : vector<1x4x8x8xbf16> to vector<4x8x8xbf16>
    %c0_7 = arith.constant 0 : index
    %c0_8 = arith.constant 0 : index
    %c0_9 = arith.constant 0 : index
    %c0_10 = arith.constant 0 : index
    %4 = vector.load %arg4[%c0_7, %c0_8, %c0_9, %c0_10] : memref<1x4x8x8xbf16, #tpu.memory_space<vmem>>, vector<1x4x8x8xbf16>
    %5 = vector.shape_cast %4 : vector<1x4x8x8xbf16> to vector<4x8x8xbf16>
    "tpu.trace_start"() <{level = 10 : i32, message = "hqd,hkd->hqk"}> : () -> ()
    %cst = arith.constant dense<0.000000e+00> : vector<4x8x8xf32>
    %6 = tpu.matmul %1, %3, %cst {dimension_numbers = #tpu.dot_dimension_numbers<[2], [2], [1], [1], [0, 0, 0, 1, 1, 1], [0], [0]>} : vector<4x8x8xbf16>, vector<4x8x8xbf16>, vector<4x8x8xf32> -> vector<4x8x8xf32>
    "tpu.trace_stop"() : () -> ()
    %c0_11 = arith.constant 0 : index
    %c0_12 = arith.constant 0 : index
    %c0_13 = arith.constant 0 : index
    %7 = vector.load %arg5[%c0_11, %c0_12, %c0_13] : memref<1x1x8xi32, #tpu.memory_space<vmem>>, vector<1x1x8xi32>
    %8 = vector.shape_cast %7 : vector<1x1x8xi32> to vector<1x8xi32>
    %c0_i32 = arith.constant 0 : i32
    %9 = vector.broadcast %c0_i32 : i32 to vector<1x8xi32>
    %10 = arith.cmpi eq, %8, %9 : vector<1x8xi32>
    %11 = vector.shape_cast %10 : vector<1x8xi1> to vector<1x1x8xi1>
    %12 = vector.shape_cast %11 : vector<1x1x8xi1> to vector<1x1x8xi1>
    %13 = vector.broadcast %12 : vector<1x1x8xi1> to vector<4x8x8xi1>
    %cst_14 = arith.constant -1.000000e+09 : f32
    %14 = vector.broadcast %cst_14 : f32 to vector<4x8x8xf32>
    %15 = arith.select %13, %14, %6 : vector<4x8x8xi1>, vector<4x8x8xf32>
    %cst_15 = arith.constant dense<0xFF800000> : vector<4x8xf32>
    %16 = vector.multi_reduction <maximumf>, %15, %cst_15 [2] : vector<4x8x8xf32> to vector<4x8xf32>
    %17 = vector.shape_cast %16 : vector<4x8xf32> to vector<4x8x1xf32>
    %18 = vector.broadcast %17 : vector<4x8x1xf32> to vector<4x8x8xf32>
    %19 = arith.subf %15, %18 : vector<4x8x8xf32>
    %20 = math.exp %19 : vector<4x8x8xf32>
    %cst_16 = arith.constant dense<0.000000e+00> : vector<4x8xf32>
    %21 = vector.multi_reduction <add>, %20, %cst_16 [2] : vector<4x8x8xf32> to vector<4x8xf32>
    %22 = vector.shape_cast %21 : vector<4x8xf32> to vector<4x8x1xf32>
    %23 = tpu.reciprocal %22 {approx = true} : vector<4x8x1xf32> -> vector<4x8x1xf32>
    %24 = vector.broadcast %23 : vector<4x8x1xf32> to vector<4x8x8xf32>
    %25 = arith.mulf %20, %24 : vector<4x8x8xf32>
    %26 = arith.truncf %25 : vector<4x8x8xf32> to vector<4x8x8xbf16>
    "tpu.trace_start"() <{level = 10 : i32, message = "hqk,hkd->hqd"}> : () -> ()
    %cst_17 = arith.constant dense<0.000000e+00> : vector<4x8x8xf32>
    %27 = tpu.matmul %26, %5, %cst_17 {dimension_numbers = #tpu.dot_dimension_numbers<[2], [1], [1], [2], [0, 0, 0, 1, 1, 2], [0], [0]>} : vector<4x8x8xbf16>, vector<4x8x8xbf16>, vector<4x8x8xf32> -> vector<4x8x8xf32>
    "tpu.trace_stop"() : () -> ()
    %c0_18 = arith.constant 0 : index
    %c0_19 = arith.constant 0 : index
    %c0_20 = arith.constant 0 : index
    %28 = vector.load %arg8[%c0_18, %c0_19, %c0_20] : memref<1x8x32xbf16, #tpu.memory_space<vmem>>, vector<1x8x32xbf16>
    %29 = vector.shape_cast %28 : vector<1x8x32xbf16> to vector<8x32xbf16>
    %30 = arith.extf %29 : vector<8x32xbf16> to vector<8x32xf32>
    %c0_21 = arith.constant 0 : index
    %c0_22 = arith.constant 0 : index
    %31 = vector.load %arg7[%c0_21, %c0_22] : memref<1x32xf32, #tpu.memory_space<vmem>>, vector<1x32xf32>
    %32 = vector.broadcast %31 : vector<1x32xf32> to vector<8x32xf32>
    %33 = arith.addf %30, %32 : vector<8x32xf32>
    %34 = vector.extract_strided_slice %27 {offsets = [0, 0, 0], sizes = [1, 8, 8], strides = [1, 1, 1]} : vector<4x8x8xf32> to vector<1x8x8xf32>
    %35 = vector.shape_cast %34 : vector<1x8x8xf32> to vector<8x8xf32>
    %36 = arith.truncf %35 : vector<8x8xf32> to vector<8x8xbf16>
    %c0_23 = arith.constant 0 : index
    %c0_24 = arith.constant 0 : index
    %37 = vector.load %arg6[%c0_23, %c0_24] : memref<32x32xbf16, #tpu.memory_space<vmem>>, vector<8x32xbf16>
    %cst_25 = arith.constant dense<0.000000e+00> : vector<8x32xf32>
    %38 = tpu.matmul %36, %37, %cst_25 {dimension_numbers = #tpu.dot_dimension_numbers<[1], [0], [0], [1], [0, 0, 1, 1], [], []>} : vector<8x8xbf16>, vector<8x32xbf16>, vector<8x32xf32> -> vector<8x32xf32>
    %39 = arith.addf %33, %38 : vector<8x32xf32>
    %40 = vector.extract_strided_slice %27 {offsets = [1, 0, 0], sizes = [1, 8, 8], strides = [1, 1, 1]} : vector<4x8x8xf32> to vector<1x8x8xf32>
    %41 = vector.shape_cast %40 : vector<1x8x8xf32> to vector<8x8xf32>
    %42 = arith.truncf %41 : vector<8x8xf32> to vector<8x8xbf16>
    %c8 = arith.constant 8 : index
    %c0_26 = arith.constant 0 : index
    %43 = vector.load %arg6[%c8, %c0_26] : memref<32x32xbf16, #tpu.memory_space<vmem>>, vector<8x32xbf16>
    %cst_27 = arith.constant dense<0.000000e+00> : vector<8x32xf32>
    %44 = tpu.matmul %42, %43, %cst_27 {dimension_numbers = #tpu.dot_dimension_numbers<[1], [0], [0], [1], [0, 0, 1, 1], [], []>} : vector<8x8xbf16>, vector<8x32xbf16>, vector<8x32xf32> -> vector<8x32xf32>
    %45 = arith.addf %39, %44 : vector<8x32xf32>
    %46 = vector.extract_strided_slice %27 {offsets = [2, 0, 0], sizes = [1, 8, 8], strides = [1, 1, 1]} : vector<4x8x8xf32> to vector<1x8x8xf32>
    %47 = vector.shape_cast %46 : vector<1x8x8xf32> to vector<8x8xf32>
    %48 = arith.truncf %47 : vector<8x8xf32> to vector<8x8xbf16>
    %c16 = arith.constant 16 : index
    %c0_28 = arith.constant 0 : index
    %49 = vector.load %arg6[%c16, %c0_28] : memref<32x32xbf16, #tpu.memory_space<vmem>>, vector<8x32xbf16>
    %cst_29 = arith.constant dense<0.000000e+00> : vector<8x32xf32>
    %50 = tpu.matmul %48, %49, %cst_29 {dimension_numbers = #tpu.dot_dimension_numbers<[1], [0], [0], [1], [0, 0, 1, 1], [], []>} : vector<8x8xbf16>, vector<8x32xbf16>, vector<8x32xf32> -> vector<8x32xf32>
    %51 = arith.addf %45, %50 : vector<8x32xf32>
    %52 = vector.extract_strided_slice %27 {offsets = [3, 0, 0], sizes = [1, 8, 8], strides = [1, 1, 1]} : vector<4x8x8xf32> to vector<1x8x8xf32>
    %53 = vector.shape_cast %52 : vector<1x8x8xf32> to vector<8x8xf32>
    %54 = arith.truncf %53 : vector<8x8xf32> to vector<8x8xbf16>
    %c24 = arith.constant 24 : index
    %c0_30 = arith.constant 0 : index
    %55 = vector.load %arg6[%c24, %c0_30] : memref<32x32xbf16, #tpu.memory_space<vmem>>, vector<8x32xbf16>
    %cst_31 = arith.constant dense<0.000000e+00> : vector<8x32xf32>
    %56 = tpu.matmul %54, %55, %cst_31 {dimension_numbers = #tpu.dot_dimension_numbers<[1], [0], [0], [1], [0, 0, 1, 1], [], []>} : vector<8x8xbf16>, vector<8x32xbf16>, vector<8x32xf32> -> vector<8x32xf32>
    %57 = arith.addf %51, %56 : vector<8x32xf32>
    %58 = arith.truncf %57 : vector<8x32xf32> to vector<8x32xbf16>
    %c0_32 = arith.constant 0 : index
    %c0_33 = arith.constant 0 : index
    %c0_34 = arith.constant 0 : index
    %59 = vector.load %arg9[%c0_32, %c0_33, %c0_34] : memref<1x8x32xbf16, #tpu.memory_space<vmem>>, vector<1x8x32xbf16>
    %60 = vector.shape_cast %59 : vector<1x8x32xbf16> to vector<8x32xbf16>
    %61 = vector.shape_cast %58 : vector<8x32xbf16> to vector<1x8x32xbf16>
    tpu.vector_store %arg9[%c0_32, %c0_33, %c0_34], %61 {strides = array<i32>} : memref<1x8x32xbf16, #tpu.memory_space<vmem>>, vector<1x8x32xbf16>,
    return
  }
  func.func @transform_0(%arg0: i32, %arg1: i32) -> (i32, i32, i32, i32) {
    %c0_i32 = arith.constant 0 : i32
    %c0_i32_0 = arith.constant 0 : i32
    %c0_i32_1 = arith.constant 0 : i32
    return %arg0, %c0_i32, %arg1, %c0_i32_0 : i32, i32, i32, i32
  }
  func.func @transform_1(%arg0: i32, %arg1: i32) -> (i32, i32, i32, i32) {
    %c0_i32 = arith.constant 0 : i32
    %c0_i32_0 = arith.constant 0 : i32
    %c0_i32_1 = arith.constant 0 : i32
    %c0_i32_2 = arith.constant 0 : i32
    return %arg0, %c0_i32, %c0_i32_0, %c0_i32_1 : i32, i32, i32, i32
  }
  func.func @transform_2(%arg0: i32, %arg1: i32) -> (i32, i32, i32, i32) {
    %c0_i32 = arith.constant 0 : i32
    %c0_i32_0 = arith.constant 0 : i32
    %c0_i32_1 = arith.constant 0 : i32
    %c0_i32_2 = arith.constant 0 : i32
    return %arg0, %c0_i32, %c0_i32_0, %c0_i32_1 : i32, i32, i32, i32
  }
  func.func @transform_3(%arg0: i32, %arg1: i32) -> (i32, i32, i32) {
    %c0_i32 = arith.constant 0 : i32
    %c0_i32_0 = arith.constant 0 : i32
    %c0_i32_1 = arith.constant 0 : i32
    return %arg0, %c0_i32, %c0_i32_0 : i32, i32, i32
  }
  func.func @transform_4(%arg0: i32, %arg1: i32) -> (i32, i32) {
    %c0_i32 = arith.constant 0 : i32
    %c0_i32_0 = arith.constant 0 : i32
    %c0_i32_1 = arith.constant 0 : i32
    return %c0_i32, %c0_i32_0 : i32, i32
  }
  func.func @transform_5(%arg0: i32, %arg1: i32) -> (i32, i32) {
    %c0_i32 = arith.constant 0 : i32
    %c0_i32_0 = arith.constant 0 : i32
    %c0_i32_1 = arith.constant 0 : i32
    return %c0_i32, %c0_i32_0 : i32, i32
  }
  func.func @transform_6(%arg0: i32, %arg1: i32) -> (i32, i32, i32) {
    %c0_i32 = arith.constant 0 : i32
    %c0_i32_0 = arith.constant 0 : i32
    return %arg0, %arg1, %c0_i32 : i32, i32, i32
  }
  func.func @transform_7(%arg0: i32, %arg1: i32) -> (i32, i32, i32) {
    %c0_i32 = arith.constant 0 : i32
    %c0_i32_0 = arith.constant 0 : i32
    return %arg0, %arg1, %c0_i32 : i32, i32, i32
  }
}

module attributes {stable_mosaic.version = 11 : i64} {
  func.func @_norm_kernel(%arg0: i32, %arg1: memref<16x32xbf16, #tpu.memory_space<vmem>>, %arg2: memref<1x32xf32, #tpu.memory_space<vmem>>, %arg3: memref<1x32xf32, #tpu.memory_space<vmem>>, %arg4: memref<16x32xbf16, #tpu.memory_space<vmem>>) attributes {dimension_semantics = [#tpu.dimension_semantics<parallel>], iteration_bounds = array<i64: 1>, scalar_prefetch = 0 : i64, scratch_operands = 0 : i64, tpu.core_type = #tpu.core_type<tc>, window_params = [{transform_indices = @transform_0, window_bounds = array<i64: 16, 32>}, {pipeline_mode = #tpu.pipeline_mode<synchronous>, transform_indices = @transform_1, window_bounds = array<i64: 1, 32>}, {pipeline_mode = #tpu.pipeline_mode<synchronous>, transform_indices = @transform_2, window_bounds = array<i64: 1, 32>}, {transform_indices = @transform_3, window_bounds = array<i64: 16, 32>}]} {
    %c0 = arith.constant 0 : index
    %c0_0 = arith.constant 0 : index
    %0 = vector.load %arg1[%c0, %c0_0] : memref<16x32xbf16, #tpu.memory_space<vmem>>, vector<16x32xbf16>
    %1 = arith.extf %0 : vector<16x32xbf16> to vector<16x32xf32>
    %cst = arith.constant dense<0.000000e+00> : vector<16xf32>
    %2 = vector.multi_reduction <add>, %1, %cst [1] : vector<16x32xf32> to vector<16xf32>
    %3 = vector.shape_cast %2 : vector<16xf32> to vector<16x1xf32>
    %cst_1 = arith.constant 3.200000e+01 : f32
    %4 = vector.broadcast %cst_1 : f32 to vector<16x1xf32>
    %5 = arith.divf %3, %4 : vector<16x1xf32>
    %6 = vector.broadcast %5 : vector<16x1xf32> to vector<16x32xf32>
    %7 = arith.subf %1, %6 : vector<16x32xf32>
    %8 = arith.mulf %7, %7 : vector<16x32xf32>
    %cst_2 = arith.constant dense<0.000000e+00> : vector<16xf32>
    %9 = vector.multi_reduction <add>, %8, %cst_2 [1] : vector<16x32xf32> to vector<16xf32>
    %10 = vector.shape_cast %9 : vector<16xf32> to vector<16x1xf32>
    %cst_3 = arith.constant 3.100000e+01 : f32
    %11 = vector.broadcast %cst_3 : f32 to vector<16x1xf32>
    %12 = arith.divf %10, %11 : vector<16x1xf32>
    %13 = math.sqrt %12 : vector<16x1xf32>
    %c0_4 = arith.constant 0 : index
    %c0_5 = arith.constant 0 : index
    %14 = vector.load %arg2[%c0_4, %c0_5] : memref<1x32xf32, #tpu.memory_space<vmem>>, vector<1x32xf32>
    %15 = vector.broadcast %5 : vector<16x1xf32> to vector<16x32xf32>
    %16 = arith.subf %1, %15 : vector<16x32xf32>
    %17 = vector.broadcast %14 : vector<1x32xf32> to vector<16x32xf32>
    %18 = arith.mulf %17, %16 : vector<16x32xf32>
    %cst_6 = arith.constant 9.99999997E-7 : f32
    %19 = vector.broadcast %cst_6 : f32 to vector<16x1xf32>
    %20 = arith.addf %13, %19 : vector<16x1xf32>
    %21 = vector.broadcast %20 : vector<16x1xf32> to vector<16x32xf32>
    %22 = arith.divf %18, %21 : vector<16x32xf32>
    %c0_7 = arith.constant 0 : index
    %c0_8 = arith.constant 0 : index
    %23 = vector.load %arg3[%c0_7, %c0_8] : memref<1x32xf32, #tpu.memory_space<vmem>>, vector<1x32xf32>
    %24 = vector.broadcast %23 : vector<1x32xf32> to vector<16x32xf32>
    %25 = arith.addf %22, %24 : vector<16x32xf32>
    %26 = arith.truncf %25 : vector<16x32xf32> to vector<16x32xbf16>
    %c0_9 = arith.constant 0 : index
    %c0_10 = arith.constant 0 : index
    %27 = vector.load %arg4[%c0_9, %c0_10] : memref<16x32xbf16, #tpu.memory_space<vmem>>, vector<16x32xbf16>
    tpu.vector_store %arg4[%c0_9, %c0_10], %26 {strides = array<i32>} : memref<16x32xbf16, #tpu.memory_space<vmem>>, vector<16x32xbf16>,
    return
  }
  func.func @transform_0(%arg0: i32) -> (i32, i32) {
    %c0_i32 = arith.constant 0 : i32
    %c0_i32_0 = arith.constant 0 : i32
    return %arg0, %c0_i32 : i32, i32
  }
  func.func @transform_1(%arg0: i32) -> (i32, i32) {
    %c0_i32 = arith.constant 0 : i32
    %c0_i32_0 = arith.constant 0 : i32
    %c0_i32_1 = arith.constant 0 : i32
    return %c0_i32, %c0_i32_0 : i32, i32
  }
  func.func @transform_2(%arg0: i32) -> (i32, i32) {
    %c0_i32 = arith.constant 0 : i32
    %c0_i32_0 = arith.constant 0 : i32
    %c0_i32_1 = arith.constant 0 : i32
    return %c0_i32, %c0_i32_0 : i32, i32
  }
  func.func @transform_3(%arg0: i32) -> (i32, i32) {
    %c0_i32 = arith.constant 0 : i32
    %c0_i32_0 = arith.constant 0 : i32
    return %arg0, %c0_i32 : i32, i32
  }
}

module attributes {stable_mosaic.version = 11 : i64} {
  func.func @_matmul_kernel(%arg0: i32, %arg1: i32, %arg2: i32, %arg3: memref<16x32xbf16, #tpu.memory_space<vmem>>, %arg4: memref<32x64xbf16, #tpu.memory_space<vmem>>, %arg5: memref<1x64xf32, #tpu.memory_space<vmem>>, %arg6: memref<16x64xbf16, #tpu.memory_space<vmem>>, %arg7: memref<16x64xf32, #tpu.memory_space<vmem>>) attributes {dimension_semantics = [#tpu.dimension_semantics<parallel>, #tpu.dimension_semantics<parallel>, #tpu.dimension_semantics<arbitrary>], iteration_bounds = array<i64: 1, 1, 1>, scalar_prefetch = 0 : i64, scratch_operands = 1 : i64, tpu.core_type = #tpu.core_type<tc>, window_params = [{transform_indices = @transform_0, window_bounds = array<i64: 16, 32>}, {transform_indices = @transform_1, window_bounds = array<i64: 32, 64>}, {transform_indices = @transform_2, window_bounds = array<i64: 1, 64>}, {transform_indices = @transform_3, window_bounds = array<i64: 16, 64>}]} {
    %c0_i32 = arith.constant 0 : i32
    %0 = arith.cmpi eq, %arg2, %c0_i32 : i32
    %1 = arith.extui %0 : i1 to i32
    %c0_i32_0 = arith.constant 0 : i32
    %2 = arith.cmpi ne, %1, %c0_i32_0 : i32
    scf.if %2 {
      %cst_10 = arith.constant 0.000000e+00 : f32
      %12 = vector.broadcast %cst_10 : f32 to vector<16x64xf32>
      %c0_11 = arith.constant 0 : index
      %c0_12 = arith.constant 0 : index
      %13 = vector.load %arg7[%c0_11, %c0_12] : memref<16x64xf32, #tpu.memory_space<vmem>>, vector<16x64xf32>
      tpu.vector_store %arg7[%c0_11, %c0_12], %12 {strides = array<i32>} : memref<16x64xf32, #tpu.memory_space<vmem>>, vector<16x64xf32>,
    } else {
    }
    %c0 = arith.constant 0 : index
    %c0_1 = arith.constant 0 : index
    %3 = vector.load %arg7[%c0, %c0_1] : memref<16x64xf32, #tpu.memory_space<vmem>>, vector<16x64xf32>
    %c0_2 = arith.constant 0 : index
    %c0_3 = arith.constant 0 : index
    %4 = vector.load %arg3[%c0_2, %c0_3] : memref<16x32xbf16, #tpu.memory_space<vmem>>, vector<16x32xbf16>
    %c0_4 = arith.constant 0 : index
    %c0_5 = arith.constant 0 : index
    %5 = vector.load %arg4[%c0_4, %c0_5] : memref<32x64xbf16, #tpu.memory_space<vmem>>, vector<32x64xbf16>
    %cst = arith.constant dense<0.000000e+00> : vector<16x64xf32>
    %6 = tpu.matmul %4, %5, %cst {dimension_numbers = #tpu.dot_dimension_numbers<[1], [0], [0], [1], [0, 0, 1, 1], [], []>} : vector<16x32xbf16>, vector<32x64xbf16>, vector<16x64xf32> -> vector<16x64xf32>
    %7 = arith.addf %3, %6 : vector<16x64xf32>
    %c0_6 = arith.constant 0 : index
    %c0_7 = arith.constant 0 : index
    %8 = vector.load %arg7[%c0_6, %c0_7] : memref<16x64xf32, #tpu.memory_space<vmem>>, vector<16x64xf32>
    tpu.vector_store %arg7[%c0_6, %c0_7], %7 {strides = array<i32>} : memref<16x64xf32, #tpu.memory_space<vmem>>, vector<16x64xf32>,
    %c0_i32_8 = arith.constant 0 : i32
    %9 = arith.cmpi eq, %arg2, %c0_i32_8 : i32
    %10 = arith.extui %9 : i1 to i32
    %c0_i32_9 = arith.constant 0 : i32
    %11 = arith.cmpi ne, %10, %c0_i32_9 : i32
    scf.if %11 {
      %c0_10 = arith.constant 0 : index
      %c0_11 = arith.constant 0 : index
      %12 = vector.load %arg7[%c0_10, %c0_11] : memref<16x64xf32, #tpu.memory_space<vmem>>, vector<16x64xf32>
      %c0_12 = arith.constant 0 : index
      %c0_13 = arith.constant 0 : index
      %13 = vector.load %arg5[%c0_12, %c0_13] : memref<1x64xf32, #tpu.memory_space<vmem>>, vector<1x64xf32>
      %14 = vector.broadcast %13 : vector<1x64xf32> to vector<16x64xf32>
      %15 = arith.addf %12, %14 : vector<16x64xf32>
      %16 = arith.truncf %15 : vector<16x64xf32> to vector<16x64xbf16>
      %c0_14 = arith.constant 0 : index
      %c0_15 = arith.constant 0 : index
      %17 = vector.load %arg6[%c0_14, %c0_15] : memref<16x64xbf16, #tpu.memory_space<vmem>>, vector<16x64xbf16>
      tpu.vector_store %arg6[%c0_14, %c0_15], %16 {strides = array<i32>} : memref<16x64xbf16, #tpu.memory_space<vmem>>, vector<16x64xbf16>,
    } else {
    }
    return
  }
  func.func @transform_0(%arg0: i32, %arg1: i32, %arg2: i32) -> (i32, i32) {
    %c0_i32 = arith.constant 0 : i32
    return %arg0, %arg2 : i32, i32
  }
  func.func @transform_1(%arg0: i32, %arg1: i32, %arg2: i32) -> (i32, i32) {
    %c0_i32 = arith.constant 0 : i32
    return %arg2, %arg1 : i32, i32
  }
  func.func @transform_2(%arg0: i32, %arg1: i32, %arg2: i32) -> (i32, i32) {
    %c0_i32 = arith.constant 0 : i32
    %c0_i32_0 = arith.constant 0 : i32
    return %c0_i32, %arg1 : i32, i32
  }
  func.func @transform_3(%arg0: i32, %arg1: i32, %arg2: i32) -> (i32, i32) {
    %c0_i32 = arith.constant 0 : i32
    return %arg0, %arg1 : i32, i32
  }
}

module attributes {stable_mosaic.version = 11 : i64} {
  func.func @_matmul_kernel(%arg0: i32, %arg1: i32, %arg2: i32, %arg3: memref<16x32xbf16, #tpu.memory_space<vmem>>, %arg4: memref<32x60xbf16, #tpu.memory_space<vmem>>, %arg5: memref<1x60xf32, #tpu.memory_space<vmem>>, %arg6: memref<16x60xf32, #tpu.memory_space<vmem>>, %arg7: memref<16x60xf32, #tpu.memory_space<vmem>>) attributes {dimension_semantics = [#tpu.dimension_semantics<parallel>, #tpu.dimension_semantics<parallel>, #tpu.dimension_semantics<arbitrary>], iteration_bounds = array<i64: 1, 1, 1>, scalar_prefetch = 0 : i64, scratch_operands = 1 : i64, tpu.core_type = #tpu.core_type<tc>, window_params = [{transform_indices = @transform_0, window_bounds = array<i64: 16, 32>}, {transform_indices = @transform_1, window_bounds = array<i64: 32, 60>}, {transform_indices = @transform_2, window_bounds = array<i64: 1, 60>}, {transform_indices = @transform_3, window_bounds = array<i64: 16, 60>}]} {
    %c0_i32 = arith.constant 0 : i32
    %0 = arith.cmpi eq, %arg2, %c0_i32 : i32
    %1 = arith.extui %0 : i1 to i32
    %c0_i32_0 = arith.constant 0 : i32
    %2 = arith.cmpi ne, %1, %c0_i32_0 : i32
    scf.if %2 {
      %cst_10 = arith.constant 0.000000e+00 : f32
      %12 = vector.broadcast %cst_10 : f32 to vector<16x60xf32>
      %c0_11 = arith.constant 0 : index
      %c0_12 = arith.constant 0 : index
      %13 = vector.load %arg7[%c0_11, %c0_12] : memref<16x60xf32, #tpu.memory_space<vmem>>, vector<16x60xf32>
      tpu.vector_store %arg7[%c0_11, %c0_12], %12 {strides = array<i32>} : memref<16x60xf32, #tpu.memory_space<vmem>>, vector<16x60xf32>,
    } else {
    }
    %c0 = arith.constant 0 : index
    %c0_1 = arith.constant 0 : index
    %3 = vector.load %arg7[%c0, %c0_1] : memref<16x60xf32, #tpu.memory_space<vmem>>, vector<16x60xf32>
    %c0_2 = arith.constant 0 : index
    %c0_3 = arith.constant 0 : index
    %4 = vector.load %arg3[%c0_2, %c0_3] : memref<16x32xbf16, #tpu.memory_space<vmem>>, vector<16x32xbf16>
    %c0_4 = arith.constant 0 : index
    %c0_5 = arith.constant 0 : index
    %5 = vector.load %arg4[%c0_4, %c0_5] : memref<32x60xbf16, #tpu.memory_space<vmem>>, vector<32x60xbf16>
    %cst = arith.constant dense<0.000000e+00> : vector<16x60xf32>
    %6 = tpu.matmul %4, %5, %cst {dimension_numbers = #tpu.dot_dimension_numbers<[1], [0], [0], [1], [0, 0, 1, 1], [], []>} : vector<16x32xbf16>, vector<32x60xbf16>, vector<16x60xf32> -> vector<16x60xf32>
    %7 = arith.addf %3, %6 : vector<16x60xf32>
    %c0_6 = arith.constant 0 : index
    %c0_7 = arith.constant 0 : index
    %8 = vector.load %arg7[%c0_6, %c0_7] : memref<16x60xf32, #tpu.memory_space<vmem>>, vector<16x60xf32>
    tpu.vector_store %arg7[%c0_6, %c0_7], %7 {strides = array<i32>} : memref<16x60xf32, #tpu.memory_space<vmem>>, vector<16x60xf32>,
    %c0_i32_8 = arith.constant 0 : i32
    %9 = arith.cmpi eq, %arg2, %c0_i32_8 : i32
    %10 = arith.extui %9 : i1 to i32
    %c0_i32_9 = arith.constant 0 : i32
    %11 = arith.cmpi ne, %10, %c0_i32_9 : i32
    scf.if %11 {
      %c0_10 = arith.constant 0 : index
      %c0_11 = arith.constant 0 : index
      %12 = vector.load %arg7[%c0_10, %c0_11] : memref<16x60xf32, #tpu.memory_space<vmem>>, vector<16x60xf32>
      %c0_12 = arith.constant 0 : index
      %c0_13 = arith.constant 0 : index
      %13 = vector.load %arg5[%c0_12, %c0_13] : memref<1x60xf32, #tpu.memory_space<vmem>>, vector<1x60xf32>
      %14 = vector.broadcast %13 : vector<1x60xf32> to vector<16x60xf32>
      %15 = arith.addf %12, %14 : vector<16x60xf32>
      %c0_14 = arith.constant 0 : index
      %c0_15 = arith.constant 0 : index
      %16 = vector.load %arg6[%c0_14, %c0_15] : memref<16x60xf32, #tpu.memory_space<vmem>>, vector<16x60xf32>
      tpu.vector_store %arg6[%c0_14, %c0_15], %15 {strides = array<i32>} : memref<16x60xf32, #tpu.memory_space<vmem>>, vector<16x60xf32>,
    } else {
    }
    return
  }
  func.func @transform_0(%arg0: i32, %arg1: i32, %arg2: i32) -> (i32, i32) {
    %c0_i32 = arith.constant 0 : i32
    return %arg0, %arg2 : i32, i32
  }
  func.func @transform_1(%arg0: i32, %arg1: i32, %arg2: i32) -> (i32, i32) {
    %c0_i32 = arith.constant 0 : i32
    return %arg2, %arg1 : i32, i32
  }
  func.func @transform_2(%arg0: i32, %arg1: i32, %arg2: i32) -> (i32, i32) {
    %c0_i32 = arith.constant 0 : i32
    %c0_i32_0 = arith.constant 0 : i32
    return %c0_i32, %arg1 : i32, i32
  }
  func.func @transform_3(%arg0: i32, %arg1: i32, %arg2: i32) -> (i32, i32) {
    %c0_i32 = arith.constant 0 : i32
    return %arg0, %arg1 : i32, i32
  }
}

</mosaic_0001>

<llo_original>
// kernel: transformer_forward.36
$region0: #{transformer_forward.36}
  #allocation0 [shape = 'u32[]', space=smem, size = 0x4, offset = 0x4, fixed_abs, tag = 'smem constant byte address 0x4 - core index']
  #allocation1 [shape = 'u32[144,128]{1,0:T(1,128)}', space=vmem, size = 0x12000, scoped, tag = 'internal scratch']
  %s0 = inlined_call_operand.vmem [shape: bf16[16,32], index: 0, kind: input, shape index: {}]
  %s1 = inlined_call_operand.vmem [shape: f32[1,32], index: 1, kind: input, shape index: {}]
  %s2 = inlined_call_operand.vmem [shape: f32[1,32], index: 2, kind: input, shape index: {}]
  %s3 = inlined_call_operand.vmem [shape: bf16[32,32], index: 3, kind: input, shape index: {}]
  %s4 = inlined_call_operand.vmem [shape: f32[1,32], index: 4, kind: input, shape index: {}]
  %s5 = inlined_call_operand.vmem [shape: bf16[16,32], index: 5, kind: output, shape index: {}]
  %s6 = sld [smem:[#allocation0]]
  $region30: #{transformer_forward.36} parent=0
    _
  %s8 = ssub.s32 1, %s6
  %s9 = scalar_select 0, %s8, %s6
  // Predicated region
  $region2: #{transformer_forward.36} parent=0 // pred_check
    _
  $region3: #{transformer_forward.36} parent=0 // pred_check_branch
    %11 = sbr.rel (0) target = $region5
  $region4: #{transformer_forward.36} parent=0 // pred_region
    _
  $region5: #{transformer_forward.36} parent=0 // pred_fallthru
    _
  // Predicated region
  $region6: #{transformer_forward.36} parent=0 // pred_check
    _
  $region7: #{transformer_forward.36} parent=0 // pred_check_branch
    %13 = sbr.rel (0) target = $region9
  $region8: #{transformer_forward.36} parent=0 // pred_region
    _
  $region9: #{transformer_forward.36} parent=0 // pred_fallthru
    _
  // Predicated region
  $region10: #{transformer_forward.36} parent=0 // pred_check
    _
  $region11: #{transformer_forward.36} parent=0 // pred_check_branch
    %15 = sbr.rel (0) target = $region13
  $region12: #{transformer_forward.36} parent=0 // pred_region
    _
  $region13: #{transformer_forward.36} parent=0 // pred_fallthru
    _
  // Predicated region
  $region14: #{transformer_forward.36} parent=0 // pred_check
    _
  $region15: #{transformer_forward.36} parent=0 // pred_check_branch
    %17 = sbr.rel (0) target = $region17
  $region16: #{transformer_forward.36} parent=0 // pred_region
    _
  $region17: #{transformer_forward.36} parent=0 // pred_fallthru
    _
  // Predicated region
  $region18: #{transformer_forward.36} parent=0 // pred_check
    _
  $region19: #{transformer_forward.36} parent=0 // pred_check_branch
    %19 = sbr.rel (0) target = $region21
  $region20: #{transformer_forward.36} parent=0 // pred_region
    _
  $region21: #{transformer_forward.36} parent=0 // pred_fallthru
    _
  %v21 = vld [vmem:[%s0] sm:$0xf]
  %v22 = vld [vmem:[%s0 + $0x4] sm:$0xf]
  %v23 = vunpack.c.l.bf16 %v21
  %v24 = vunpack.c.l.bf16 %v22
  %vm25 = vcmask 261120
  %v26 = vsel %vm25, %v23, 0.0
  %27 = vadd.xlane.f32.xlu0 %v26
  %v28 = vpop.xlane.xlu0 %27
  %v29 = vsel %vm25, %v24, 0.0
  %30 = vadd.xlane.f32.xlu0 %v29
  %v31 = vpop.xlane.xlu0 %30
  %v32 = vrcp.pop 32.0
  %v33 = vmul.f32 %v28, %v32
  %v34 = vmul.f32 %v31, %v32
  %v35 = vsub.f32 %v23, %v33
  %v36 = vsub.f32 %v24, %v34
  %v37 = vmul.f32 %v35, %v35
  %v38 = vmul.f32 %v36, %v36
  %v39 = vsel %vm25, %v37, 0.0
  %40 = vadd.xlane.f32.xlu0 %v39
  %v41 = vpop.xlane.xlu0 %40
  %v42 = vsel %vm25, %v38, 0.0
  %43 = vadd.xlane.f32.xlu0 %v42
  %v44 = vpop.xlane.xlu0 %43
  %v45 = vrcp.pop 31.0
  %v46 = vmul.f32 %v41, %v45
  %v47 = vmul.f32 %v44, %v45
  %v48 = vrsqrt.pop %v46
  %v49 = vmul.f32 %v46, %v48
  %vm50 = vcmp.eq.f32.partialorder %v46, inf
  %v51 = vsel %vm50, %v46, %v49
  %vm52 = vcmp.eq.f32.partialorder %v46, 0.0
  %v53 = vand.u32 %v46, 2147483648
  %v54 = vsel %vm52, %v53, %v51
  %v55 = vrsqrt.pop %v47
  %v56 = vmul.f32 %v47, %v55
  %vm57 = vcmp.eq.f32.partialorder %v47, inf
  %v58 = vsel %vm57, %v47, %v56
  %vm59 = vcmp.eq.f32.partialorder %v47, 0.0
  %v60 = vand.u32 %v47, 2147483648
  %v61 = vsel %vm59, %v60, %v58
  %v62 = vld [vmem:[%s1] sm:$0x1]
  %v64 = vlaneseq
  %v65 = vshrl.u32 %v64, 7
  %v66 = vsub.s32 0, %v65
  %v67 = vrot.slane %v62, %v66
  %v69 = vmul.f32 %v67, %v35
  %v70 = vmul.f32 %v67, %v36
  %v71 = vadd.f32 %v54, 1e-06
  %v72 = vadd.f32 %v61, 1e-06
  %v73 = vrcp.pop %v71
  %v74 = vmul.f32 %v69, %v73
  %v75 = vrcp.pop %v72
  %v76 = vmul.f32 %v70, %v75
  %v77 = vld [vmem:[%s2] sm:$0x1]
  %v79 = vlaneseq
  %v80 = vshrl.u32 %v79, 7
  %v81 = vsub.s32 0, %v80
  %v82 = vrot.slane %v77, %v81
  %v84 = vadd.f32 %v74, %v82
  %v85 = vadd.f32 %v76, %v82
  %v86 = vpack.c.bf16 %v85, %v84
  %v87 = vld [vmem:[%s3] sm:$0xf]
  %v88 = vld [vmem:[%s3 + $0x4] sm:$0xf]
  %v89 = vld [vmem:[%s3 + $0x8] sm:$0xf]
  %v90 = vld [vmem:[%s3 + $0xc] sm:$0xf]
  %v91 = vld [vmem:[%s4] sm:$0x1]
  %v93 = vlaneseq
  %v94 = vshrl.u32 %v93, 7
  %v95 = vsub.s32 0, %v94
  %v96 = vrot.slane %v91, %v95
  %v102 = vunpack.c.l.b16 %v87
  %v103 = vunpack.c.l.b16 %v88
  %v104 = vunpack.c.l.b16 %v89
  %v105 = vunpack.c.l.b16 %v90
  %v106 = vpack.c.b16 %v103, %v102
  %v107 = vpack.c.b16 %v105, %v104
  %v111 = vsel %vm25, %v86, 0
  %113 = vmatprep.subr.bf16.mxu0 0
  %114 = vmatpush1.bf16.msra.mxu0 0
  %115 = vmatprep.subr.bf16.mxu0 0
  %116 = vmatpush1.bf16.msra.mxu0 0
  %117 = vmatprep.subr.bf16.mxu0 0
  %118 = vmatpush1.bf16.msra.mxu0 0
  %119 = vmatprep.subr.bf16.mxu0 0
  %120 = vmatpush1.bf16.msra.mxu0 0
  %121 = vmatprep.subr.bf16.mxu0 0
  %122 = vmatpush1.bf16.msra.mxu0 0
  %123 = vmatprep.subr.bf16.mxu0 0
  %124 = vmatpush1.bf16.msra.mxu0 0
  %125 = vmatprep.subr.bf16.mxu0 0
  %126 = vmatpush1.bf16.msra.mxu0 %v107
  %127 = vmatprep.subr.bf16.mxu0 0
  %128 = vmatpush1.bf16.msra.mxu0 %v106
  %129 = vmatprep.subr.bf16.mxu0 0
  %130 = vmatpush2.bf16.msra.mxu0 0
  %131 = vmatprep.subr.bf16.mxu0 0
  %132 = vmatpush2.bf16.msra.mxu0 0
  %133 = vmatprep.subr.bf16.mxu0 0
  %134 = vmatpush2.bf16.msra.mxu0 0
  %135 = vmatprep.subr.bf16.mxu0 0
  %136 = vmatpush2.bf16.msra.mxu0 0
  %137 = vmatprep.subr.bf16.mxu0 0
  %138 = vmatpush2.bf16.msra.mxu0 0
  %139 = vmatprep.subr.bf16.mxu0 0
  %140 = vmatpush2.bf16.msra.mxu0 0
  %141 = vmatprep.subr.bf16.mxu0 0
  %142 = vmatpush2.bf16.msra.mxu0 0
  %143 = vmatprep.subr.bf16.mxu0 0
  %144 = vmatpush2.bf16.msra.mxu0 0
  %145 = vmatprep.mubr.bf16.mxu0 0
  %146 = vmatmul.mubr.bf16.gmra.mxu0 %v111
  %v147 = vpop.f32.mrf.mxu0
  %v148 = vadd.f32 %v96, %v147
  %v149 = vpop.f32.mrf.mxu0
  %v150 = vpop.f32.mrf.mxu0
  %v151 = vadd.f32 %v96, %v150
  %v152 = vpop.f32.mrf.mxu0
  %153 = vdwg.mxu0
  %v154 = vpack.c.bf16 %v151, %v148
  %v156 = vunpack.c.l.b16 %v154
  %v157 = vunpack.c.h.b16 %v154
  %v158 = vpack.c.b16 %v156, %v156
  %v159 = vpack.c.b16 %v157, %v157
  %vm162 = vcmask 257024
  %163 = vst.msk [vmem:[%s5] sm:$0xf] %vm162, %v158
  %164 = vst.msk [vmem:[%s5 + $0x4] sm:$0xf] %vm162, %v159
  // Predicated region
  $region22: #{transformer_forward.36} parent=0 // pred_check
    _
  $region23: #{transformer_forward.36} parent=0 // pred_check_branch
    %166 = sbr.rel (0) target = $region25
  $region24: #{transformer_forward.36} parent=0 // pred_region
    _
  $region25: #{transformer_forward.36} parent=0 // pred_fallthru
    _
  // Predicated region
  $region26: #{transformer_forward.36} parent=0 // pred_check
    _
  $region27: #{transformer_forward.36} parent=0 // pred_check_branch
    %168 = sbr.rel (0) target = $region29
  $region28: #{transformer_forward.36} parent=0 // pred_region
    _
  $region29: #{transformer_forward.36} parent=0 // pred_fallthru
    _

// kernel: transformer_forward.34
$region0: #{transformer_forward.34}
  #allocation0 [shape = 'u32[]', space=smem, size = 0x4, offset = 0x4, fixed_abs, tag = 'smem constant byte address 0x4 - core index']
  #allocation1 [shape = 'u32[144,128]{1,0:T(1,128)}', space=vmem, size = 0x12000, scoped, tag = 'internal scratch']
  %s0 = inlined_call_operand.vmem [shape: bf16[16,32], index: 0, kind: input, shape index: {}]
  %s1 = inlined_call_operand.vmem [shape: f32[1,32], index: 1, kind: input, shape index: {}]
  %s2 = inlined_call_operand.vmem [shape: f32[1,32], index: 2, kind: input, shape index: {}]
  %s3 = inlined_call_operand.vmem [shape: bf16[32,96], index: 3, kind: input, shape index: {}]
  %s4 = inlined_call_operand.vmem [shape: f32[1,96], index: 4, kind: input, shape index: {}]
  %s5 = inlined_call_operand.vmem [shape: bf16[16,96], index: 5, kind: output, shape index: {}]
  %s6 = sld [smem:[#allocation0]]
  $region30: #{transformer_forward.34} parent=0
    _
  %s8 = ssub.s32 1, %s6
  %s9 = scalar_select 0, %s8, %s6
  // Predicated region
  $region2: #{transformer_forward.34} parent=0 // pred_check
    _
  $region3: #{transformer_forward.34} parent=0 // pred_check_branch
    %11 = sbr.rel (0) target = $region5
  $region4: #{transformer_forward.34} parent=0 // pred_region
    _
  $region5: #{transformer_forward.34} parent=0 // pred_fallthru
    _
  // Predicated region
  $region6: #{transformer_forward.34} parent=0 // pred_check
    _
  $region7: #{transformer_forward.34} parent=0 // pred_check_branch
    %13 = sbr.rel (0) target = $region9
  $region8: #{transformer_forward.34} parent=0 // pred_region
    _
  $region9: #{transformer_forward.34} parent=0 // pred_fallthru
    _
  // Predicated region
  $region10: #{transformer_forward.34} parent=0 // pred_check
    _
  $region11: #{transformer_forward.34} parent=0 // pred_check_branch
    %15 = sbr.rel (0) target = $region13
  $region12: #{transformer_forward.34} parent=0 // pred_region
    _
  $region13: #{transformer_forward.34} parent=0 // pred_fallthru
    _
  // Predicated region
  $region14: #{transformer_forward.34} parent=0 // pred_check
    _
  $region15: #{transformer_forward.34} parent=0 // pred_check_branch
    %17 = sbr.rel (0) target = $region17
  $region16: #{transformer_forward.34} parent=0 // pred_region
    _
  $region17: #{transformer_forward.34} parent=0 // pred_fallthru
    _
  // Predicated region
  $region18: #{transformer_forward.34} parent=0 // pred_check
    _
  $region19: #{transformer_forward.34} parent=0 // pred_check_branch
    %19 = sbr.rel (0) target = $region21
  $region20: #{transformer_forward.34} parent=0 // pred_region
    _
  $region21: #{transformer_forward.34} parent=0 // pred_fallthru
    _
  %v21 = vld [vmem:[%s0] sm:$0xf]
  %v22 = vld [vmem:[%s0 + $0x4] sm:$0xf]
  %v23 = vunpack.c.l.bf16 %v21
  %v24 = vunpack.c.l.bf16 %v22
  %vm25 = vcmask 261120
  %v26 = vsel %vm25, %v23, 0.0
  %27 = vadd.xlane.f32.xlu0 %v26
  %v28 = vpop.xlane.xlu0 %27
  %v29 = vsel %vm25, %v24, 0.0
  %30 = vadd.xlane.f32.xlu0 %v29
  %v31 = vpop.xlane.xlu0 %30
  %v32 = vrcp.pop 32.0
  %v33 = vmul.f32 %v28, %v32
  %v34 = vmul.f32 %v31, %v32
  %v35 = vsub.f32 %v23, %v33
  %v36 = vsub.f32 %v24, %v34
  %v37 = vmul.f32 %v35, %v35
  %v38 = vmul.f32 %v36, %v36
  %v39 = vsel %vm25, %v37, 0.0
  %40 = vadd.xlane.f32.xlu0 %v39
  %v41 = vpop.xlane.xlu0 %40
  %v42 = vsel %vm25, %v38, 0.0
  %43 = vadd.xlane.f32.xlu0 %v42
  %v44 = vpop.xlane.xlu0 %43
  %v45 = vrcp.pop 31.0
  %v46 = vmul.f32 %v41, %v45
  %v47 = vmul.f32 %v44, %v45
  %v48 = vrsqrt.pop %v46
  %v49 = vmul.f32 %v46, %v48
  %vm50 = vcmp.eq.f32.partialorder %v46, inf
  %v51 = vsel %vm50, %v46, %v49
  %vm52 = vcmp.eq.f32.partialorder %v46, 0.0
  %v53 = vand.u32 %v46, 2147483648
  %v54 = vsel %vm52, %v53, %v51
  %v55 = vrsqrt.pop %v47
  %v56 = vmul.f32 %v47, %v55
  %vm57 = vcmp.eq.f32.partialorder %v47, inf
  %v58 = vsel %vm57, %v47, %v56
  %vm59 = vcmp.eq.f32.partialorder %v47, 0.0
  %v60 = vand.u32 %v47, 2147483648
  %v61 = vsel %vm59, %v60, %v58
  %v62 = vld [vmem:[%s1] sm:$0x1]
  %v64 = vlaneseq
  %v65 = vshrl.u32 %v64, 7
  %v66 = vsub.s32 0, %v65
  %v67 = vrot.slane %v62, %v66
  %v69 = vmul.f32 %v67, %v35
  %v70 = vmul.f32 %v67, %v36
  %v71 = vadd.f32 %v54, 1e-06
  %v72 = vadd.f32 %v61, 1e-06
  %v73 = vrcp.pop %v71
  %v74 = vmul.f32 %v69, %v73
  %v75 = vrcp.pop %v72
  %v76 = vmul.f32 %v70, %v75
  %v77 = vld [vmem:[%s2] sm:$0x1]
  %v79 = vlaneseq
  %v80 = vshrl.u32 %v79, 7
  %v81 = vsub.s32 0, %v80
  %v82 = vrot.slane %v77, %v81
  %v84 = vadd.f32 %v74, %v82
  %v85 = vadd.f32 %v76, %v82
  %v86 = vpack.c.bf16 %v85, %v84
  %v87 = vld [vmem:[%s3] sm:$0xf]
  %v88 = vld [vmem:[%s3 + $0x4] sm:$0xf]
  %v89 = vld [vmem:[%s3 + $0x8] sm:$0xf]
  %v90 = vld [vmem:[%s3 + $0xc] sm:$0xf]
  %v91 = vld [vmem:[%s4] sm:$0x1]
  %v93 = vlaneseq
  %v94 = vshrl.u32 %v93, 7
  %v95 = vsub.s32 0, %v94
  %v96 = vrot.slane %v91, %v95
  %v102 = vunpack.c.l.b16 %v87
  %v103 = vunpack.c.l.b16 %v88
  %v104 = vunpack.c.l.b16 %v89
  %v105 = vunpack.c.l.b16 %v90
  %v106 = vpack.c.b16 %v103, %v102
  %v107 = vpack.c.b16 %v105, %v104
  %v111 = vsel %vm25, %v86, 0
  %113 = vmatprep.subr.bf16.mxu0 0
  %114 = vmatpush1.bf16.msra.mxu0 0
  %115 = vmatprep.subr.bf16.mxu0 0
  %116 = vmatpush1.bf16.msra.mxu0 0
  %117 = vmatprep.subr.bf16.mxu0 0
  %118 = vmatpush1.bf16.msra.mxu0 0
  %119 = vmatprep.subr.bf16.mxu0 0
  %120 = vmatpush1.bf16.msra.mxu0 0
  %121 = vmatprep.subr.bf16.mxu0 0
  %122 = vmatpush1.bf16.msra.mxu0 0
  %123 = vmatprep.subr.bf16.mxu0 0
  %124 = vmatpush1.bf16.msra.mxu0 0
  %125 = vmatprep.subr.bf16.mxu0 0
  %126 = vmatpush1.bf16.msra.mxu0 %v107
  %127 = vmatprep.subr.bf16.mxu0 0
  %128 = vmatpush1.bf16.msra.mxu0 %v106
  %129 = vmatprep.subr.bf16.mxu0 0
  %130 = vmatpush2.bf16.msra.mxu0 0
  %131 = vmatprep.subr.bf16.mxu0 0
  %132 = vmatpush2.bf16.msra.mxu0 0
  %133 = vmatprep.subr.bf16.mxu0 0
  %134 = vmatpush2.bf16.msra.mxu0 0
  %135 = vmatprep.subr.bf16.mxu0 0
  %136 = vmatpush2.bf16.msra.mxu0 0
  %137 = vmatprep.subr.bf16.mxu0 0
  %138 = vmatpush2.bf16.msra.mxu0 0
  %139 = vmatprep.subr.bf16.mxu0 0
  %140 = vmatpush2.bf16.msra.mxu0 0
  %141 = vmatprep.subr.bf16.mxu0 0
  %142 = vmatpush2.bf16.msra.mxu0 0
  %143 = vmatprep.subr.bf16.mxu0 0
  %144 = vmatpush2.bf16.msra.mxu0 0
  %145 = vmatprep.mubr.bf16.mxu0 0
  %146 = vmatmul.mubr.bf16.gmra.mxu0 %v111
  %v147 = vpop.f32.mrf.mxu0
  %v148 = vadd.f32 %v96, %v147
  %v149 = vpop.f32.mrf.mxu0
  %v150 = vpop.f32.mrf.mxu0
  %v151 = vadd.f32 %v96, %v150
  %v152 = vpop.f32.mrf.mxu0
  %153 = vdwg.mxu0
  %v154 = vpack.c.bf16 %v151, %v148
  %v156 = vunpack.c.l.b16 %v154
  %v157 = vunpack.c.h.b16 %v154
  %v158 = vpack.c.b16 %v156, %v156
  %v159 = vpack.c.b16 %v157, %v157
  %vm162 = vcmask 781312
  %163 = vst.msk [vmem:[%s5] sm:$0xf] %vm162, %v158
  %164 = vst.msk [vmem:[%s5 + $0x4] sm:$0xf] %vm162, %v159
  // Predicated region
  $region22: #{transformer_forward.34} parent=0 // pred_check
    _
  $region23: #{transformer_forward.34} parent=0 // pred_check_branch
    %166 = sbr.rel (0) target = $region25
  $region24: #{transformer_forward.34} parent=0 // pred_region
    _
  $region25: #{transformer_forward.34} parent=0 // pred_fallthru
    _
  // Predicated region
  $region26: #{transformer_forward.34} parent=0 // pred_check
    _
  $region27: #{transformer_forward.34} parent=0 // pred_check_branch
    %168 = sbr.rel (0) target = $region29
  $region28: #{transformer_forward.34} parent=0 // pred_region
    _
  $region29: #{transformer_forward.34} parent=0 // pred_fallthru
    _

// kernel: transformer_forward.35
$region0: #{transformer_forward.35}
  #allocation0 [shape = 'u32[]', space=smem, size = 0x4, offset = 0x4, fixed_abs, tag = 'smem constant byte address 0x4 - core index']
  #allocation1 [shape = 'u32[144,128]{1,0:T(1,128)}', space=vmem, size = 0x12000, scoped, tag = 'internal scratch']
  %s0 = inlined_call_operand.vmem [shape: bf16[2,4,8,8], index: 0, kind: input, shape index: {}]
  %s1 = inlined_call_operand.vmem [shape: bf16[2,4,8,8], index: 1, kind: input, shape index: {}]
  %s2 = inlined_call_operand.vmem [shape: bf16[2,4,8,8], index: 2, kind: input, shape index: {}]
  %s3 = inlined_call_operand.vmem [shape: s32[2,8,8], index: 3, kind: input, shape index: {}]
  %s4 = inlined_call_operand.vmem [shape: bf16[32,32], index: 4, kind: input, shape index: {}]
  %s5 = inlined_call_operand.vmem [shape: f32[1,32], index: 5, kind: input, shape index: {}]
  %s6 = inlined_call_operand.vmem [shape: bf16[2,8,32], index: 6, kind: input, shape index: {}]
  %s7 = inlined_call_operand.vmem [shape: bf16[2,8,32], index: 7, kind: output, shape index: {}]
  %s8 = sld [smem:[#allocation0]]
  $region61: #{transformer_forward.35} parent=0
    _
  %s10 = ssub.s32 1, %s8
  %s11 = scalar_select 0, %s10, %s8
  loop: start=0, step=1, limit=4
  $region2: #{transformer_forward.35} parent=0 // loop_pre_header
    _
  $region3: #{transformer_forward.35} parent=0 // loop_header
    %s13 = sphi 0, %s17
    %p14 = scmp.ge.s32.totalorder %s13, 4
    %s20 = sphi 0, %s32
    %s21 = sphi 0, %s28
    %s22 = sphi 0, %s20
    %s23 = sphi 0, %s21
    %s24 = sphi 0, %s22
    %s25 = sphi 0, %s23
    %s37 = sphi 0, %s39
    %s40 = sphi 0, %s37
    %s41 = sphi 0, %s40
    %s57 = sphi 0, %s41
    %s63 = sphi 0, %s65
    %s66 = sphi 0, %s63
    %s67 = sphi 0, %s66
    %s83 = sphi 0, %s67
    %s89 = sphi 0, %s91
    %s92 = sphi 0, %s89
    %s93 = sphi 0, %s92
    %s109 = sphi 0, %s93
    %s117 = sphi 0, %s119
    %s120 = sphi 0, %s117
    %s121 = sphi 0, %s120
    %s137 = sphi 0, %s121
    %s141 = sphi 0, %s141
    %s143 = sphi 0, %s141
    %s144 = sphi 0, %s143
    %s158 = sphi 0, %s144
    %s162 = sphi 0, %s162
    %s164 = sphi 0, %s162
    %s165 = sphi 0, %s164
    %s179 = sphi 0, %s165
    %s187 = sphi 0, %s189
    %s190 = sphi 0, %s187
    %s191 = sphi 0, %s190
    %s207 = sphi 0, %s191
    %s215 = sphi 0, %s217
    %s218 = sphi 0, %s215
    %s219 = sphi 0, %s218
    %s235 = sphi 0, %s219
  $region4: #{transformer_forward.35} parent=0 // loop_header_branch
    %16 = sbr.rel (%p14) target = $region8
  $region5: #{transformer_forward.35} parent=0 // loop_body
    %s18 = ssub.s32 %s13, 1
    %s19 = ssub.s32 %s13, 2
    %s26 = sadd.s32 1, %s21
    %p27 = scmp.ge.s32.totalorder %s26, 1
    %s28 = scalar_select %p27, 0, %s26
    %s29 = sadd.s32 1, %s20
    %s30 = scalar_select %p27, %s29, %s20
    %p31 = scmp.ge.s32.totalorder %s30, 2
    %s32 = scalar_select %p31, 0, %s30
    %s33 = ssub.s32 %s20, %s32
    %s34 = ssub.s32 %s21, %s28
    %s35 = sor.u32 %s33, %s34
    %p36 = scmp.eq.s32.totalorder %s35, 0
    %s38 = sadd.s32 %s37, 1
    %s39 = scalar_select %p36, %s37, %s38
    %p42 = pneg %p36
    %p43 = scmp.eq.s32.totalorder %s13, 1
    %p44 = por %p42, %p43
    %p45 = scmp.ne.s32.totalorder %s37, %s40
    %p46 = scmp.eq.s32.totalorder %s13, 0
    %p47 = por %p45, %p46
    %p48 = scmp.ne.s32.totalorder %s37, %s40
    %p49 = scmp.eq.s32.totalorder %s18, 1
    %p50 = por %p48, %p49
    %p51 = scmp.ne.s32.totalorder %s40, %s41
    %p52 = scmp.eq.s32.totalorder %s18, 0
    %p53 = por %p51, %p52
    %p54 = scmp.ne.s32.totalorder %s40, %s41
    %p55 = scmp.eq.s32.totalorder %s19, 1
    %p56 = por %p54, %p55
    %p58 = scmp.ne.s32.totalorder %s41, %s57
    %p59 = scmp.eq.s32.totalorder %s19, 0
    %p60 = por %p58, %p59
    %s61 = ssub.s32 %s20, %s32
    %p62 = scmp.eq.s32.totalorder %s61, 0
    %s64 = sadd.s32 %s63, 1
    %s65 = scalar_select %p62, %s63, %s64
    %p68 = pneg %p62
    %p69 = scmp.eq.s32.totalorder %s13, 1
    %p70 = por %p68, %p69
    %p71 = scmp.ne.s32.totalorder %s63, %s66
    %p72 = scmp.eq.s32.totalorder %s13, 0
    %p73 = por %p71, %p72
    %p74 = scmp.ne.s32.totalorder %s63, %s66
    %p75 = scmp.eq.s32.totalorder %s18, 1
    %p76 = por %p74, %p75
    %p77 = scmp.ne.s32.totalorder %s66, %s67
    %p78 = scmp.eq.s32.totalorder %s18, 0
    %p79 = por %p77, %p78
    %p80 = scmp.ne.s32.totalorder %s66, %s67
    %p81 = scmp.eq.s32.totalorder %s19, 1
    %p82 = por %p80, %p81
    %p84 = scmp.ne.s32.totalorder %s67, %s83
    %p85 = scmp.eq.s32.totalorder %s19, 0
    %p86 = por %p84, %p85
    %s87 = ssub.s32 %s20, %s32
    %p88 = scmp.eq.s32.totalorder %s87, 0
    %s90 = sadd.s32 %s89, 1
    %s91 = scalar_select %p88, %s89, %s90
    %p94 = pneg %p88
    %p95 = scmp.eq.s32.totalorder %s13, 1
    %p96 = por %p94, %p95
    %p97 = scmp.ne.s32.totalorder %s89, %s92
    %p98 = scmp.eq.s32.totalorder %s13, 0
    %p99 = por %p97, %p98
    %p100 = scmp.ne.s32.totalorder %s89, %s92
    %p101 = scmp.eq.s32.totalorder %s18, 1
    %p102 = por %p100, %p101
    %p103 = scmp.ne.s32.totalorder %s92, %s93
    %p104 = scmp.eq.s32.totalorder %s18, 0
    %p105 = por %p103, %p104
    %p106 = scmp.ne.s32.totalorder %s92, %s93
    %p107 = scmp.eq.s32.totalorder %s19, 1
    %p108 = por %p106, %p107
    %p110 = scmp.ne.s32.totalorder %s93, %s109
    %p111 = scmp.eq.s32.totalorder %s19, 0
    %p112 = por %p110, %p111
    %s113 = ssub.s32 %s20, %s32
    %s114 = ssub.s32 %s21, %s28
    %s115 = sor.u32 %s113, %s114
    %p116 = scmp.eq.s32.totalorder %s115, 0
    %s118 = sadd.s32 %s117, 1
    %s119 = scalar_select %p116, %s117, %s118
    %p122 = pneg %p116
    %p123 = scmp.eq.s32.totalorder %s13, 1
    %p124 = por %p122, %p123
    %p125 = scmp.ne.s32.totalorder %s117, %s120
    %p126 = scmp.eq.s32.totalorder %s13, 0
    %p127 = por %p125, %p126
    %p128 = scmp.ne.s32.totalorder %s117, %s120
    %p129 = scmp.eq.s32.totalorder %s18, 1
    %p130 = por %p128, %p129
    %p131 = scmp.ne.s32.totalorder %s120, %s121
    %p132 = scmp.eq.s32.totalorder %s18, 0
    %p133 = por %p131, %p132
    %p134 = scmp.ne.s32.totalorder %s120, %s121
    %p135 = scmp.eq.s32.totalorder %s19, 1
    %p136 = por %p134, %p135
    %p138 = scmp.ne.s32.totalorder %s121, %s137
    %p139 = scmp.eq.s32.totalorder %s19, 0
    %p140 = por %p138, %p139
    %s142 = sadd.s32 %s141, 1
    %p145 = scmp.eq.s32.totalorder %s13, 1
    %p146 = scmp.ne.s32.totalorder %s141, %s143
    %p147 = scmp.eq.s32.totalorder %s13, 0
    %p148 = por %p146, %p147
    %p149 = scmp.ne.s32.totalorder %s141, %s143
    %p150 = scmp.eq.s32.totalorder %s18, 1
    %p151 = por %p149, %p150
    %p152 = scmp.ne.s32.totalorder %s143, %s144
    %p153 = scmp.eq.s32.totalorder %s18, 0
    %p154 = por %p152, %p153
    %p155 = scmp.ne.s32.totalorder %s143, %s144
    %p156 = scmp.eq.s32.totalorder %s19, 1
    %p157 = por %p155, %p156
    %p159 = scmp.ne.s32.totalorder %s144, %s158
    %p160 = scmp.eq.s32.totalorder %s19, 0
    %p161 = por %p159, %p160
    %s163 = sadd.s32 %s162, 1
    %p166 = scmp.eq.s32.totalorder %s13, 1
    %p167 = scmp.ne.s32.totalorder %s162, %s164
    %p168 = scmp.eq.s32.totalorder %s13, 0
    %p169 = por %p167, %p168
    %p170 = scmp.ne.s32.totalorder %s162, %s164
    %p171 = scmp.eq.s32.totalorder %s18, 1
    %p172 = por %p170, %p171
    %p173 = scmp.ne.s32.totalorder %s164, %s165
    %p174 = scmp.eq.s32.totalorder %s18, 0
    %p175 = por %p173, %p174
    %p176 = scmp.ne.s32.totalorder %s164, %s165
    %p177 = scmp.eq.s32.totalorder %s19, 1
    %p178 = por %p176, %p177
    %p180 = scmp.ne.s32.totalorder %s165, %s179
    %p181 = scmp.eq.s32.totalorder %s19, 0
    %p182 = por %p180, %p181
    %s183 = ssub.s32 %s20, %s32
    %s184 = ssub.s32 %s21, %s28
    %s185 = sor.u32 %s183, %s184
    %p186 = scmp.eq.s32.totalorder %s185, 0
    %s188 = sadd.s32 %s187, 1
    %s189 = scalar_select %p186, %s187, %s188
    %p192 = pneg %p186
    %p193 = scmp.eq.s32.totalorder %s13, 1
    %p194 = por %p192, %p193
    %p195 = scmp.ne.s32.totalorder %s187, %s190
    %p196 = scmp.eq.s32.totalorder %s13, 0
    %p197 = por %p195, %p196
    %p198 = scmp.ne.s32.totalorder %s187, %s190
    %p199 = scmp.eq.s32.totalorder %s18, 1
    %p200 = por %p198, %p199
    %p201 = scmp.ne.s32.totalorder %s190, %s191
    %p202 = scmp.eq.s32.totalorder %s18, 0
    %p203 = por %p201, %p202
    %p204 = scmp.ne.s32.totalorder %s190, %s191
    %p205 = scmp.eq.s32.totalorder %s19, 1
    %p206 = por %p204, %p205
    %p208 = scmp.ne.s32.totalorder %s191, %s207
    %p209 = scmp.eq.s32.totalorder %s19, 0
    %p210 = por %p208, %p209
    %s211 = ssub.s32 %s20, %s32
    %s212 = ssub.s32 %s21, %s28
    %s213 = sor.u32 %s211, %s212
    %p214 = scmp.eq.s32.totalorder %s213, 0
    %s216 = sadd.s32 %s215, 1
    %s217 = scalar_select %p214, %s215, %s216
    %p220 = pneg %p214
    %p221 = scmp.eq.s32.totalorder %s13, 1
    %p222 = por %p220, %p221
    %p223 = scmp.ne.s32.totalorder %s215, %s218
    %p224 = scmp.eq.s32.totalorder %s13, 0
    %p225 = por %p223, %p224
    %p226 = scmp.ne.s32.totalorder %s215, %s218
    %p227 = scmp.eq.s32.totalorder %s18, 1
    %p228 = por %p226, %p227
    %p229 = scmp.ne.s32.totalorder %s218, %s219
    %p230 = scmp.eq.s32.totalorder %s18, 0
    %p231 = por %p229, %p230
    %p232 = scmp.ne.s32.totalorder %s218, %s219
    %p233 = scmp.eq.s32.totalorder %s19, 1
    %p234 = por %p232, %p233
    %p236 = scmp.ne.s32.totalorder %s219, %s235
    %p237 = scmp.eq.s32.totalorder %s19, 0
    %p238 = por %p236, %p237
    %p239 = scmp.le.s32.totalorder 1, %s13
    %p240 = scmp.lt.s32.totalorder %s13, 3
    %p241 = pnand %p239, %p240
    %p242 = pneg %p241
    // Predicated region
    $region9: #{transformer_forward.35} parent=5 // pred_check
      _
    $region10: #{transformer_forward.35} parent=5 // pred_check_branch
      %244 = sbr.rel (%p241) target = $region12
    $region11: #{transformer_forward.35} parent=5 // pred_region
      %s245 = ssub.s32 %s13, 1
      // Predicated region
      $region13: #{transformer_forward.35} parent=11 // pred_check
        %p246 = pneg %p154
      $region14: #{transformer_forward.35} parent=11 // pred_check_branch
        %248 = sbr.rel (%p246) target = $region16
      $region15: #{transformer_forward.35} parent=11 // pred_region
        _
      $region16: #{transformer_forward.35} parent=11 // pred_fallthru
        _
      // Predicated region
      $region17: #{transformer_forward.35} parent=11 // pred_check
        %p249 = pneg %p175
      $region18: #{transformer_forward.35} parent=11 // pred_check_branch
        %251 = sbr.rel (%p249) target = $region20
      $region19: #{transformer_forward.35} parent=11 // pred_region
        _
      $region20: #{transformer_forward.35} parent=11 // pred_fallthru
        _
    $region12: #{transformer_forward.35} parent=5 // pred_fallthru
      _
    %p252 = scmp.lt.s32.totalorder %s13, 2
    // Predicated region
    $region21: #{transformer_forward.35} parent=5 // pred_check
      %p253 = pneg %p252
    $region22: #{transformer_forward.35} parent=5 // pred_check_branch
      %255 = sbr.rel (%p253) target = $region24
    $region23: #{transformer_forward.35} parent=5 // pred_region
      // Predicated region
      $region25: #{transformer_forward.35} parent=23 // pred_check
        %p256 = pneg %p47
      $region26: #{transformer_forward.35} parent=23 // pred_check_branch
        %258 = sbr.rel (%p256) target = $region28
      $region27: #{transformer_forward.35} parent=23 // pred_region
        %p259 = scmp.lt.s32.totalorder %s20, 1
        %s260 = scalar_select %p259, %s20, 1
        %p261 = scmp.lt.s32.totalorder %s21, 0
        %s262 = scalar_select %p261, %s21, 0
        %s263 = smul.addr %s260, 4
        %s264 = sadd.s32 %s262, %s263
        %s265 = smul.addr %s264, 4
        %s266 = scalar_lea.vmem %s0, %s265
      $region28: #{transformer_forward.35} parent=23 // pred_fallthru
        _
      // Predicated region
      $region29: #{transformer_forward.35} parent=23 // pred_check
        %p267 = pneg %p73
      $region30: #{transformer_forward.35} parent=23 // pred_check_branch
        %269 = sbr.rel (%p267) target = $region32
      $region31: #{transformer_forward.35} parent=23 // pred_region
        %p270 = scmp.lt.s32.totalorder %s20, 1
        %s271 = scalar_select %p270, %s20, 1
        %s272 = smul.addr %s271, 4
        %s273 = smul.addr %s272, 4
        %s274 = scalar_lea.vmem %s1, %s273
      $region32: #{transformer_forward.35} parent=23 // pred_fallthru
        _
      // Predicated region
      $region33: #{transformer_forward.35} parent=23 // pred_check
        %p275 = pneg %p99
      $region34: #{transformer_forward.35} parent=23 // pred_check_branch
        %277 = sbr.rel (%p275) target = $region36
      $region35: #{transformer_forward.35} parent=23 // pred_region
        %p278 = scmp.lt.s32.totalorder %s20, 1
        %s279 = scalar_select %p278, %s20, 1
        %s280 = smul.addr %s279, 4
        %s281 = smul.addr %s280, 4
        %s282 = scalar_lea.vmem %s2, %s281
      $region36: #{transformer_forward.35} parent=23 // pred_fallthru
        _
      // Predicated region
      $region37: #{transformer_forward.35} parent=23 // pred_check
        %p283 = pneg %p127
      $region38: #{transformer_forward.35} parent=23 // pred_check_branch
        %285 = sbr.rel (%p283) target = $region40
      $region39: #{transformer_forward.35} parent=23 // pred_region
        %p286 = scmp.lt.s32.totalorder %s20, 1
        %s287 = scalar_select %p286, %s20, 1
        %p288 = scmp.lt.s32.totalorder %s21, 0
        %s289 = scalar_select %p288, %s21, 0
        %s290 = sadd.s32 %s289, %s287
        %s291 = smul.addr %s290, 8
        %s292 = scalar_lea.vmem %s3, %s291
      $region40: #{transformer_forward.35} parent=23 // pred_fallthru
        _
      // Predicated region
      $region41: #{transformer_forward.35} parent=23 // pred_check
        %p293 = pneg %p197
      $region42: #{transformer_forward.35} parent=23 // pred_check_branch
        %295 = sbr.rel (%p293) target = $region44
      $region43: #{transformer_forward.35} parent=23 // pred_region
        %p296 = scmp.lt.s32.totalorder %s20, 1
        %s297 = scalar_select %p296, %s20, 1
        %p298 = scmp.lt.s32.totalorder %s21, 0
        %s299 = scalar_select %p298, %s21, 0
        %s300 = sadd.s32 %s299, %s297
        %s301 = smul.addr %s300, 4
        %s302 = scalar_lea.vmem %s6, %s301
      $region44: #{transformer_forward.35} parent=23 // pred_fallthru
        _
    $region24: #{transformer_forward.35} parent=5 // pred_fallthru
      _
    %p303 = scmp.le.s32.totalorder 1, %s13
    %p304 = scmp.lt.s32.totalorder %s13, 3
    %p305 = pnand %p303, %p304
    %p306 = pneg %p305
    // Predicated region
    $region45: #{transformer_forward.35} parent=5 // pred_check
      _
    $region46: #{transformer_forward.35} parent=5 // pred_check_branch
      %308 = sbr.rel (%p305) target = $region48
    $region47: #{transformer_forward.35} parent=5 // pred_region
      %s309 = ssub.s32 %s13, 1
      %p310 = scmp.lt.s32.totalorder %s22, 1
      %s311 = scalar_select %p310, %s22, 1
      %p312 = scmp.lt.s32.totalorder %s23, 0
      %s313 = scalar_select %p312, %s23, 0
      %s314 = smul.addr %s311, 4
      %s315 = sadd.s32 %s313, %s314
      %s316 = smul.addr %s315, 4
      %s317 = scalar_lea.vmem %s0, %s316
      %p318 = pneg %p53
      %p319 = pneg %p50
      %p320 = scmp.lt.s32.totalorder %s22, 1
      %s321 = scalar_select %p320, %s22, 1
      %s322 = smul.addr %s321, 4
      %s323 = smul.addr %s322, 4
      %s324 = scalar_lea.vmem %s1, %s323
      %p325 = pneg %p79
      %p326 = pneg %p76
      %p327 = scmp.lt.s32.totalorder %s22, 1
      %s328 = scalar_select %p327, %s22, 1
      %s329 = smul.addr %s328, 4
      %s330 = smul.addr %s329, 4
      %s331 = scalar_lea.vmem %s2, %s330
      %p332 = pneg %p105
      %p333 = pneg %p102
      %p334 = scmp.lt.s32.totalorder %s22, 1
      %s335 = scalar_select %p334, %s22, 1
      %p336 = scmp.lt.s32.totalorder %s23, 0
      %s337 = scalar_select %p336, %s23, 0
      %s338 = sadd.s32 %s337, %s335
      %s339 = smul.addr %s338, 8
      %s340 = scalar_lea.vmem %s3, %s339
      %p341 = pneg %p133
      %p342 = pneg %p130
      %p343 = pneg %p154
      %p344 = pneg %p151
      %p345 = pneg %p175
      %p346 = pneg %p172
      %p347 = scmp.lt.s32.totalorder %s22, 1
      %s348 = scalar_select %p347, %s22, 1
      %p349 = scmp.lt.s32.totalorder %s23, 0
      %s350 = scalar_select %p349, %s23, 0
      %s351 = sadd.s32 %s350, %s348
      %s352 = smul.addr %s351, 4
      %s353 = scalar_lea.vmem %s6, %s352
      %p354 = pneg %p203
      %p355 = pneg %p200
      %p356 = pneg %p231
      %p357 = pneg %p228
      %p358 = scmp.lt.s32.totalorder %s22, 1
      %s359 = scalar_select %p358, %s22, 1
      %p360 = scmp.lt.s32.totalorder %s23, 0
      %s361 = scalar_select %p360, %s23, 0
      %s362 = sadd.s32 %s361, %s359
      %s363 = smul.addr %s362, 4
      %s364 = scalar_lea.vmem %s7, %s363
      %p365 = scmp.lt.s32.totalorder %s22, 1
      %s366 = scalar_select %p365, %s22, 1
      %p367 = scmp.lt.s32.totalorder %s23, 0
      %s368 = scalar_select %p367, %s23, 0
      %s369 = smul.addr %s366, 4
      %s370 = sadd.s32 %s368, %s369
      %s371 = smul.addr %s370, 4
      %s372 = scalar_lea.vmem %s0, %s371
      %p373 = scmp.lt.s32.totalorder %s22, 1
      %s374 = scalar_select %p373, %s22, 1
      %s375 = smul.addr %s374, 4
      %s376 = smul.addr %s375, 4
      %s377 = scalar_lea.vmem %s1, %s376
      %p378 = scmp.lt.s32.totalorder %s22, 1
      %s379 = scalar_select %p378, %s22, 1
      %s380 = smul.addr %s379, 4
      %s381 = smul.addr %s380, 4
      %s382 = scalar_lea.vmem %s2, %s381
      %p383 = scmp.lt.s32.totalorder %s22, 1
      %s384 = scalar_select %p383, %s22, 1
      %p385 = scmp.lt.s32.totalorder %s23, 0
      %s386 = scalar_select %p385, %s23, 0
      %s387 = sadd.s32 %s386, %s384
      %s388 = smul.addr %s387, 8
      %s389 = scalar_lea.vmem %s3, %s388
      %p390 = scmp.lt.s32.totalorder %s22, 1
      %s391 = scalar_select %p390, %s22, 1
      %p392 = scmp.lt.s32.totalorder %s23, 0
      %s393 = scalar_select %p392, %s23, 0
      %s394 = sadd.s32 %s393, %s391
      %s395 = smul.addr %s394, 4
      %s396 = scalar_lea.vmem %s6, %s395
      %p397 = scmp.lt.s32.totalorder %s22, 1
      %s398 = scalar_select %p397, %s22, 1
      %p399 = scmp.lt.s32.totalorder %s23, 0
      %s400 = scalar_select %p399, %s23, 0
      %s401 = sadd.s32 %s400, %s398
      %s402 = smul.addr %s401, 4
      %s403 = scalar_lea.vmem %s7, %s402
      %v405 = vld [vmem:[%s372] sm:$0xf]
      %v406 = vld [vmem:[%s372 + $0x4] sm:$0xf]
      %v407 = vld [vmem:[%s372 + $0x8] sm:$0xf]
      %v408 = vld [vmem:[%s372 + $0xc] sm:$0xf]
      %v409 = vld [vmem:[%s377] sm:$0xf]
      %v410 = vld [vmem:[%s377 + $0x4] sm:$0xf]
      %v411 = vld [vmem:[%s377 + $0x8] sm:$0xf]
      %v412 = vld [vmem:[%s377 + $0xc] sm:$0xf]
      %v413 = vld [vmem:[%s382] sm:$0xf]
      %v414 = vld [vmem:[%s382 + $0x4] sm:$0xf]
      %v415 = vld [vmem:[%s382 + $0x8] sm:$0xf]
      %v416 = vld [vmem:[%s382 + $0xc] sm:$0xf]
      %vm417 = vcmask 64512
      %v419 = vsel %vm417, %v405, 0
      %v422 = vsel %vm417, %v409, 0
      %424 = vmatprep.subr.bf16.mxu0 0
      %425 = vmatpush1.bf16.xpose.msra.mxu0 0
      %426 = vmatprep.subr.bf16.mxu0 0
      %427 = vmatpush1.bf16.xpose.msra.mxu0 0
      %428 = vmatprep.subr.bf16.mxu0 0
      %429 = vmatpush1.bf16.xpose.msra.mxu0 0
      %430 = vmatprep.subr.bf16.mxu0 0
      %431 = vmatpush1.bf16.xpose.msra.mxu0 0
      %432 = vmatprep.subr.bf16.mxu0 0
      %433 = vmatpush1.bf16.xpose.msra.mxu0 0
      %434 = vmatprep.subr.bf16.mxu0 0
      %435 = vmatpush1.bf16.xpose.msra.mxu0 0
      %436 = vmatprep.subr.bf16.mxu0 0
      %437 = vmatpush1.bf16.xpose.msra.mxu0 0
      %438 = vmatprep.subr.bf16.mxu0 0
      %439 = vmatpush1.bf16.xpose.msra.mxu0 %v422
      %440 = vmatprep.subr.bf16.mxu0 0
      %441 = vmatpush2.bf16.xpose.msra.mxu0 0
      %442 = vmatprep.subr.bf16.mxu0 0
      %443 = vmatpush2.bf16.xpose.msra.mxu0 0
      %444 = vmatprep.subr.bf16.mxu0 0
      %445 = vmatpush2.bf16.xpose.msra.mxu0 0
      %446 = vmatprep.subr.bf16.mxu0 0
      %447 = vmatpush2.bf16.xpose.msra.mxu0 0
      %448 = vmatprep.subr.bf16.mxu0 0
      %449 = vmatpush2.bf16.xpose.msra.mxu0 0
      %450 = vmatprep.subr.bf16.mxu0 0
      %451 = vmatpush2.bf16.xpose.msra.mxu0 0
      %452 = vmatprep.subr.bf16.mxu0 0
      %453 = vmatpush2.bf16.xpose.msra.mxu0 0
      %454 = vmatprep.subr.bf16.mxu0 0
      %455 = vmatpush2.bf16.xpose.msra.mxu0 0
      %456 = vmatprep.mubr.bf16.mxu0 0
      %457 = vmatmul.mubr.bf16.gmra.mxu0 %v419
      %v458 = vpop.f32.mrf.mxu0
      %v459 = vadd.f32 0.0, %v458
      %v460 = vpop.f32.mrf.mxu0
      %v461 = vpop.f32.mrf.mxu0
      %v462 = vpop.f32.mrf.mxu0
      %463 = vdwg.mxu0
      %v465 = vsel %vm417, %v406, 0
      %v468 = vsel %vm417, %v410, 0
      %470 = vmatprep.subr.bf16.mxu0 0
      %471 = vmatpush1.bf16.xpose.msra.mxu0 0
      %472 = vmatprep.subr.bf16.mxu0 0
      %473 = vmatpush1.bf16.xpose.msra.mxu0 0
      %474 = vmatprep.subr.bf16.mxu0 0
      %475 = vmatpush1.bf16.xpose.msra.mxu0 0
      %476 = vmatprep.subr.bf16.mxu0 0
      %477 = vmatpush1.bf16.xpose.msra.mxu0 0
      %478 = vmatprep.subr.bf16.mxu0 0
      %479 = vmatpush1.bf16.xpose.msra.mxu0 0
      %480 = vmatprep.subr.bf16.mxu0 0
      %481 = vmatpush1.bf16.xpose.msra.mxu0 0
      %482 = vmatprep.subr.bf16.mxu0 0
      %483 = vmatpush1.bf16.xpose.msra.mxu0 0
      %484 = vmatprep.subr.bf16.mxu0 0
      %485 = vmatpush1.bf16.xpose.msra.mxu0 %v468
      %486 = vmatprep.subr.bf16.mxu0 0
      %487 = vmatpush2.bf16.xpose.msra.mxu0 0
      %488 = vmatprep.subr.bf16.mxu0 0
      %489 = vmatpush2.bf16.xpose.msra.mxu0 0
      %490 = vmatprep.subr.bf16.mxu0 0
      %491 = vmatpush2.bf16.xpose.msra.mxu0 0
      %492 = vmatprep.subr.bf16.mxu0 0
      %493 = vmatpush2.bf16.xpose.msra.mxu0 0
      %494 = vmatprep.subr.bf16.mxu0 0
      %495 = vmatpush2.bf16.xpose.msra.mxu0 0
      %496 = vmatprep.subr.bf16.mxu0 0
      %497 = vmatpush2.bf16.xpose.msra.mxu0 0
      %498 = vmatprep.subr.bf16.mxu0 0
      %499 = vmatpush2.bf16.xpose.msra.mxu0 0
      %500 = vmatprep.subr.bf16.mxu0 0
      %501 = vmatpush2.bf16.xpose.msra.mxu0 0
      %502 = vmatprep.mubr.bf16.mxu0 0
      %503 = vmatmul.mubr.bf16.gmra.mxu0 %v465
      %v504 = vpop.f32.mrf.mxu0
      %v505 = vadd.f32 0.0, %v504
      %v506 = vpop.f32.mrf.mxu0
      %v507 = vpop.f32.mrf.mxu0
      %v508 = vpop.f32.mrf.mxu0
      %509 = vdwg.mxu0
      %v511 = vsel %vm417, %v407, 0
      %v514 = vsel %vm417, %v411, 0
      %516 = vmatprep.subr.bf16.mxu0 0
      %517 = vmatpush1.bf16.xpose.msra.mxu0 0
      %518 = vmatprep.subr.bf16.mxu0 0
      %519 = vmatpush1.bf16.xpose.msra.mxu0 0
      %520 = vmatprep.subr.bf16.mxu0 0
      %521 = vmatpush1.bf16.xpose.msra.mxu0 0
      %522 = vmatprep.subr.bf16.mxu0 0
      %523 = vmatpush1.bf16.xpose.msra.mxu0 0
      %524 = vmatprep.subr.bf16.mxu0 0
      %525 = vmatpush1.bf16.xpose.msra.mxu0 0
      %526 = vmatprep.subr.bf16.mxu0 0
      %527 = vmatpush1.bf16.xpose.msra.mxu0 0
      %528 = vmatprep.subr.bf16.mxu0 0
      %529 = vmatpush1.bf16.xpose.msra.mxu0 0
      %530 = vmatprep.subr.bf16.mxu0 0
      %531 = vmatpush1.bf16.xpose.msra.mxu0 %v514
      %532 = vmatprep.subr.bf16.mxu0 0
      %533 = vmatpush2.bf16.xpose.msra.mxu0 0
      %534 = vmatprep.subr.bf16.mxu0 0
      %535 = vmatpush2.bf16.xpose.msra.mxu0 0
      %536 = vmatprep.subr.bf16.mxu0 0
      %537 = vmatpush2.bf16.xpose.msra.mxu0 0
      %538 = vmatprep.subr.bf16.mxu0 0
      %539 = vmatpush2.bf16.xpose.msra.mxu0 0
      %540 = vmatprep.subr.bf16.mxu0 0
      %541 = vmatpush2.bf16.xpose.msra.mxu0 0
      %542 = vmatprep.subr.bf16.mxu0 0
      %543 = vmatpush2.bf16.xpose.msra.mxu0 0
      %544 = vmatprep.subr.bf16.mxu0 0
      %545 = vmatpush2.bf16.xpose.msra.mxu0 0
      %546 = vmatprep.subr.bf16.mxu0 0
      %547 = vmatpush2.bf16.xpose.msra.mxu0 0
      %548 = vmatprep.mubr.bf16.mxu0 0
      %549 = vmatmul.mubr.bf16.gmra.mxu0 %v511
      %v550 = vpop.f32.mrf.mxu0
      %v551 = vadd.f32 0.0, %v550
      %v552 = vpop.f32.mrf.mxu0
      %v553 = vpop.f32.mrf.mxu0
      %v554 = vpop.f32.mrf.mxu0
      %555 = vdwg.mxu0
      %v557 = vsel %vm417, %v408, 0
      %v560 = vsel %vm417, %v412, 0
      %562 = vmatprep.subr.bf16.mxu0 0
      %563 = vmatpush1.bf16.xpose.msra.mxu0 0
      %564 = vmatprep.subr.bf16.mxu0 0
      %565 = vmatpush1.bf16.xpose.msra.mxu0 0
      %566 = vmatprep.subr.bf16.mxu0 0
      %567 = vmatpush1.bf16.xpose.msra.mxu0 0
      %568 = vmatprep.subr.bf16.mxu0 0
      %569 = vmatpush1.bf16.xpose.msra.mxu0 0
      %570 = vmatprep.subr.bf16.mxu0 0
      %571 = vmatpush1.bf16.xpose.msra.mxu0 0
      %572 = vmatprep.subr.bf16.mxu0 0
      %573 = vmatpush1.bf16.xpose.msra.mxu0 0
      %574 = vmatprep.subr.bf16.mxu0 0
      %575 = vmatpush1.bf16.xpose.msra.mxu0 0
      %576 = vmatprep.subr.bf16.mxu0 0
      %577 = vmatpush1.bf16.xpose.msra.mxu0 %v560
      %578 = vmatprep.subr.bf16.mxu0 0
      %579 = vmatpush2.bf16.xpose.msra.mxu0 0
      %580 = vmatprep.subr.bf16.mxu0 0
      %581 = vmatpush2.bf16.xpose.msra.mxu0 0
      %582 = vmatprep.subr.bf16.mxu0 0
      %583 = vmatpush2.bf16.xpose.msra.mxu0 0
      %584 = vmatprep.subr.bf16.mxu0 0
      %585 = vmatpush2.bf16.xpose.msra.mxu0 0
      %586 = vmatprep.subr.bf16.mxu0 0
      %587 = vmatpush2.bf16.xpose.msra.mxu0 0
      %588 = vmatprep.subr.bf16.mxu0 0
      %589 = vmatpush2.bf16.xpose.msra.mxu0 0
      %590 = vmatprep.subr.bf16.mxu0 0
      %591 = vmatpush2.bf16.xpose.msra.mxu0 0
      %592 = vmatprep.subr.bf16.mxu0 0
      %593 = vmatpush2.bf16.xpose.msra.mxu0 0
      %594 = vmatprep.mubr.bf16.mxu0 0
      %595 = vmatmul.mubr.bf16.gmra.mxu0 %v557
      %v596 = vpop.f32.mrf.mxu0
      %v597 = vadd.f32 0.0, %v596
      %v598 = vpop.f32.mrf.mxu0
      %v599 = vpop.f32.mrf.mxu0
      %v600 = vpop.f32.mrf.mxu0
      %601 = vdwg.mxu0
      %v602 = vld [vmem:[%s389] sm:$0xff]
      %vm603 = vcmp.eq.s32.totalorder %v602, 0
      %v604 = vsel %vm603, 1, 0
      %vm605 = vcmp.eq.s32.totalorder %v604, 1
      %v606 = vsel %vm605, -1e+09, %v459
      %v607 = vsel %vm605, -1e+09, %v505
      %v608 = vsel %vm605, -1e+09, %v551
      %v609 = vsel %vm605, -1e+09, %v597
      %v610 = vsel %vm417, %v606, -inf
      %611 = vmax.xlane.f32.xlu0 %v610
      %v612 = vpop.xlane.xlu0 %611
      %v613 = vsel %vm417, %v607, -inf
      %614 = vmax.xlane.f32.xlu0 %v613
      %v615 = vpop.xlane.xlu0 %614
      %v616 = vsel %vm417, %v608, -inf
      %617 = vmax.xlane.f32.xlu0 %v616
      %v618 = vpop.xlane.xlu0 %617
      %v619 = vsel %vm417, %v609, -inf
      %620 = vmax.xlane.f32.xlu0 %v619
      %v621 = vpop.xlane.xlu0 %620
      %v622 = vsub.f32 %v606, %v612
      %v623 = vsub.f32 %v607, %v615
      %v624 = vsub.f32 %v608, %v618
      %v625 = vsub.f32 %v609, %v621
      %v626 = vmul.f32 %v622, 1.442695
      %v627 = vpow.pop %v626
      %v628 = vmul.f32 %v623, 1.442695
      %v629 = vpow.pop %v628
      %v630 = vmul.f32 %v624, 1.442695
      %v631 = vpow.pop %v630
      %v632 = vmul.f32 %v625, 1.442695
      %v633 = vpow.pop %v632
      %v634 = vsel %vm417, %v627, 0.0
      %635 = vadd.xlane.f32.xlu0 %v634
      %v636 = vpop.xlane.xlu0 %635
      %v637 = vsel %vm417, %v629, 0.0
      %638 = vadd.xlane.f32.xlu0 %v637
      %v639 = vpop.xlane.xlu0 %638
      %v640 = vsel %vm417, %v631, 0.0
      %641 = vadd.xlane.f32.xlu0 %v640
      %v642 = vpop.xlane.xlu0 %641
      %v643 = vsel %vm417, %v633, 0.0
      %644 = vadd.xlane.f32.xlu0 %v643
      %v645 = vpop.xlane.xlu0 %644
      %v646 = vrcp.pop %v636
      %v647 = vrcp.pop %v639
      %v648 = vrcp.pop %v642
      %v649 = vrcp.pop %v645
      %v650 = vmul.f32 %v627, %v646
      %v651 = vmul.f32 %v629, %v647
      %v652 = vmul.f32 %v631, %v648
      %v653 = vmul.f32 %v633, %v649
      %v654 = vpack.c.bf16 %v650, %v650
      %v655 = vpack.c.bf16 %v651, %v651
      %v656 = vpack.c.bf16 %v652, %v652
      %v657 = vpack.c.bf16 %v653, %v653
      %v659 = vsel %vm417, %v654, 0
      %vm661 = vcmask 1043456
      %v663 = vsel %vm661, %v413, 0
      %665 = vmatprep.subr.bf16.mxu0 0
      %666 = vmatpush1.bf16.msra.mxu0 0
      %667 = vmatprep.subr.bf16.mxu0 0
      %668 = vmatpush1.bf16.msra.mxu0 0
      %669 = vmatprep.subr.bf16.mxu0 0
      %670 = vmatpush1.bf16.msra.mxu0 0
      %671 = vmatprep.subr.bf16.mxu0 0
      %672 = vmatpush1.bf16.msra.mxu0 0
      %673 = vmatprep.subr.bf16.mxu0 0
      %674 = vmatpush1.bf16.msra.mxu0 0
      %675 = vmatprep.subr.bf16.mxu0 0
      %676 = vmatpush1.bf16.msra.mxu0 0
      %677 = vmatprep.subr.bf16.mxu0 0
      %678 = vmatpush1.bf16.msra.mxu0 0
      %679 = vmatprep.subr.bf16.mxu0 0
      %680 = vmatpush1.bf16.msra.mxu0 %v663
      %681 = vmatprep.subr.bf16.mxu0 0
      %682 = vmatpush2.bf16.msra.mxu0 0
      %683 = vmatprep.subr.bf16.mxu0 0
      %684 = vmatpush2.bf16.msra.mxu0 0
      %685 = vmatprep.subr.bf16.mxu0 0
      %686 = vmatpush2.bf16.msra.mxu0 0
      %687 = vmatprep.subr.bf16.mxu0 0
      %688 = vmatpush2.bf16.msra.mxu0 0
      %689 = vmatprep.subr.bf16.mxu0 0
      %690 = vmatpush2.bf16.msra.mxu0 0
      %691 = vmatprep.subr.bf16.mxu0 0
      %692 = vmatpush2.bf16.msra.mxu0 0
      %693 = vmatprep.subr.bf16.mxu0 0
      %694 = vmatpush2.bf16.msra.mxu0 0
      %695 = vmatprep.subr.bf16.mxu0 0
      %696 = vmatpush2.bf16.msra.mxu0 0
      %697 = vmatprep.mubr.bf16.mxu0 0
      %698 = vmatmul.mubr.bf16.gmra.mxu0 %v659
      %v699 = vpop.f32.mrf.mxu0
      %v700 = vadd.f32 0.0, %v699
      %v701 = vpop.f32.mrf.mxu0
      %v702 = vpop.f32.mrf.mxu0
      %v703 = vpop.f32.mrf.mxu0
      %704 = vdwg.mxu0
      %v706 = vsel %vm417, %v655, 0
      %v709 = vsel %vm661, %v414, 0
      %711 = vmatprep.subr.bf16.mxu0 0
      %712 = vmatpush1.bf16.msra.mxu0 0
      %713 = vmatprep.subr.bf16.mxu0 0
      %714 = vmatpush1.bf16.msra.mxu0 0
      %715 = vmatprep.subr.bf16.mxu0 0
      %716 = vmatpush1.bf16.msra.mxu0 0
      %717 = vmatprep.subr.bf16.mxu0 0
      %718 = vmatpush1.bf16.msra.mxu0 0
      %719 = vmatprep.subr.bf16.mxu0 0
      %720 = vmatpush1.bf16.msra.mxu0 0
      %721 = vmatprep.subr.bf16.mxu0 0
      %722 = vmatpush1.bf16.msra.mxu0 0
      %723 = vmatprep.subr.bf16.mxu0 0
      %724 = vmatpush1.bf16.msra.mxu0 0
      %725 = vmatprep.subr.bf16.mxu0 0
      %726 = vmatpush1.bf16.msra.mxu0 %v709
      %727 = vmatprep.subr.bf16.mxu0 0
      %728 = vmatpush2.bf16.msra.mxu0 0
      %729 = vmatprep.subr.bf16.mxu0 0
      %730 = vmatpush2.bf16.msra.mxu0 0
      %731 = vmatprep.subr.bf16.mxu0 0
      %732 = vmatpush2.bf16.msra.mxu0 0
      %733 = vmatprep.subr.bf16.mxu0 0
      %734 = vmatpush2.bf16.msra.mxu0 0
      %735 = vmatprep.subr.bf16.mxu0 0
      %736 = vmatpush2.bf16.msra.mxu0 0
      %737 = vmatprep.subr.bf16.mxu0 0
      %738 = vmatpush2.bf16.msra.mxu0 0
      %739 = vmatprep.subr.bf16.mxu0 0
      %740 = vmatpush2.bf16.msra.mxu0 0
      %741 = vmatprep.subr.bf16.mxu0 0
      %742 = vmatpush2.bf16.msra.mxu0 0
      %743 = vmatprep.mubr.bf16.mxu0 0
      %744 = vmatmul.mubr.bf16.gmra.mxu0 %v706
      %v745 = vpop.f32.mrf.mxu0
      %v746 = vadd.f32 0.0, %v745
      %v747 = vpop.f32.mrf.mxu0
      %v748 = vpop.f32.mrf.mxu0
      %v749 = vpop.f32.mrf.mxu0
      %750 = vdwg.mxu0
      %v752 = vsel %vm417, %v656, 0
      %v755 = vsel %vm661, %v415, 0
      %757 = vmatprep.subr.bf16.mxu0 0
      %758 = vmatpush1.bf16.msra.mxu0 0
      %759 = vmatprep.subr.bf16.mxu0 0
      %760 = vmatpush1.bf16.msra.mxu0 0
      %761 = vmatprep.subr.bf16.mxu0 0
      %762 = vmatpush1.bf16.msra.mxu0 0
      %763 = vmatprep.subr.bf16.mxu0 0
      %764 = vmatpush1.bf16.msra.mxu0 0
      %765 = vmatprep.subr.bf16.mxu0 0
      %766 = vmatpush1.bf16.msra.mxu0 0
      %767 = vmatprep.subr.bf16.mxu0 0
      %768 = vmatpush1.bf16.msra.mxu0 0
      %769 = vmatprep.subr.bf16.mxu0 0
      %770 = vmatpush1.bf16.msra.mxu0 0
      %771 = vmatprep.subr.bf16.mxu0 0
      %772 = vmatpush1.bf16.msra.mxu0 %v755
      %773 = vmatprep.subr.bf16.mxu0 0
      %774 = vmatpush2.bf16.msra.mxu0 0
      %775 = vmatprep.subr.bf16.mxu0 0
      %776 = vmatpush2.bf16.msra.mxu0 0
      %777 = vmatprep.subr.bf16.mxu0 0
      %778 = vmatpush2.bf16.msra.mxu0 0
      %779 = vmatprep.subr.bf16.mxu0 0
      %780 = vmatpush2.bf16.msra.mxu0 0
      %781 = vmatprep.subr.bf16.mxu0 0
      %782 = vmatpush2.bf16.msra.mxu0 0
      %783 = vmatprep.subr.bf16.mxu0 0
      %784 = vmatpush2.bf16.msra.mxu0 0
      %785 = vmatprep.subr.bf16.mxu0 0
      %786 = vmatpush2.bf16.msra.mxu0 0
      %787 = vmatprep.subr.bf16.mxu0 0
      %788 = vmatpush2.bf16.msra.mxu0 0
      %789 = vmatprep.mubr.bf16.mxu0 0
      %790 = vmatmul.mubr.bf16.gmra.mxu0 %v752
      %v791 = vpop.f32.mrf.mxu0
      %v792 = vadd.f32 0.0, %v791
      %v793 = vpop.f32.mrf.mxu0
      %v794 = vpop.f32.mrf.mxu0
      %v795 = vpop.f32.mrf.mxu0
      %796 = vdwg.mxu0
      %v798 = vsel %vm417, %v657, 0
      %v801 = vsel %vm661, %v416, 0
      %803 = vmatprep.subr.bf16.mxu0 0
      %804 = vmatpush1.bf16.msra.mxu0 0
      %805 = vmatprep.subr.bf16.mxu0 0
      %806 = vmatpush1.bf16.msra.mxu0 0
      %807 = vmatprep.subr.bf16.mxu0 0
      %808 = vmatpush1.bf16.msra.mxu0 0
      %809 = vmatprep.subr.bf16.mxu0 0
      %810 = vmatpush1.bf16.msra.mxu0 0
      %811 = vmatprep.subr.bf16.mxu0 0
      %812 = vmatpush1.bf16.msra.mxu0 0
      %813 = vmatprep.subr.bf16.mxu0 0
      %814 = vmatpush1.bf16.msra.mxu0 0
      %815 = vmatprep.subr.bf16.mxu0 0
      %816 = vmatpush1.bf16.msra.mxu0 0
      %817 = vmatprep.subr.bf16.mxu0 0
      %818 = vmatpush1.bf16.msra.mxu0 %v801
      %819 = vmatprep.subr.bf16.mxu0 0
      %820 = vmatpush2.bf16.msra.mxu0 0
      %821 = vmatprep.subr.bf16.mxu0 0
      %822 = vmatpush2.bf16.msra.mxu0 0
      %823 = vmatprep.subr.bf16.mxu0 0
      %824 = vmatpush2.bf16.msra.mxu0 0
      %825 = vmatprep.subr.bf16.mxu0 0
      %826 = vmatpush2.bf16.msra.mxu0 0
      %827 = vmatprep.subr.bf16.mxu0 0
      %828 = vmatpush2.bf16.msra.mxu0 0
      %829 = vmatprep.subr.bf16.mxu0 0
      %830 = vmatpush2.bf16.msra.mxu0 0
      %831 = vmatprep.subr.bf16.mxu0 0
      %832 = vmatpush2.bf16.msra.mxu0 0
      %833 = vmatprep.subr.bf16.mxu0 0
      %834 = vmatpush2.bf16.msra.mxu0 0
      %835 = vmatprep.mubr.bf16.mxu0 0
      %836 = vmatmul.mubr.bf16.gmra.mxu0 %v798
      %v837 = vpop.f32.mrf.mxu0
      %v838 = vadd.f32 0.0, %v837
      %v839 = vpop.f32.mrf.mxu0
      %v840 = vpop.f32.mrf.mxu0
      %v841 = vpop.f32.mrf.mxu0
      %842 = vdwg.mxu0
      %v843 = vld [vmem:[%s396] sm:$0xf]
      %v844 = vunpack.c.l.bf16 %v843
      %v845 = vld [vmem:[%s5] sm:$0x1]
      %v847 = vlaneseq
      %v848 = vshrl.u32 %v847, 7
      %v849 = vsub.s32 0, %v848
      %v850 = vrot.slane %v845, %v849
      %v852 = vadd.f32 %v844, %v850
      %v853 = vpack.c.bf16 %v700, %v700
      %v854 = vld [vmem:[%s4] sm:$0xf]
      %v856 = vsel %vm417, %v853, 0
      %v859 = vsel %vm661, %v854, 0
      %861 = vmatprep.subr.bf16.mxu0 0
      %862 = vmatpush1.bf16.msra.mxu0 0
      %863 = vmatprep.subr.bf16.mxu0 0
      %864 = vmatpush1.bf16.msra.mxu0 0
      %865 = vmatprep.subr.bf16.mxu0 0
      %866 = vmatpush1.bf16.msra.mxu0 0
      %867 = vmatprep.subr.bf16.mxu0 0
      %868 = vmatpush1.bf16.msra.mxu0 0
      %869 = vmatprep.subr.bf16.mxu0 0
      %870 = vmatpush1.bf16.msra.mxu0 0
      %871 = vmatprep.subr.bf16.mxu0 0
      %872 = vmatpush1.bf16.msra.mxu0 0
      %873 = vmatprep.subr.bf16.mxu0 0
      %874 = vmatpush1.bf16.msra.mxu0 0
      %875 = vmatprep.subr.bf16.mxu0 0
      %876 = vmatpush1.bf16.msra.mxu0 %v859
      %877 = vmatprep.subr.bf16.mxu0 0
      %878 = vmatpush2.bf16.msra.mxu0 0
      %879 = vmatprep.subr.bf16.mxu0 0
      %880 = vmatpush2.bf16.msra.mxu0 0
      %881 = vmatprep.subr.bf16.mxu0 0
      %882 = vmatpush2.bf16.msra.mxu0 0
      %883 = vmatprep.subr.bf16.mxu0 0
      %884 = vmatpush2.bf16.msra.mxu0 0
      %885 = vmatprep.subr.bf16.mxu0 0
      %886 = vmatpush2.bf16.msra.mxu0 0
      %887 = vmatprep.subr.bf16.mxu0 0
      %888 = vmatpush2.bf16.msra.mxu0 0
      %889 = vmatprep.subr.bf16.mxu0 0
      %890 = vmatpush2.bf16.msra.mxu0 0
      %891 = vmatprep.subr.bf16.mxu0 0
      %892 = vmatpush2.bf16.msra.mxu0 0
      %893 = vmatprep.mubr.bf16.mxu0 0
      %894 = vmatmul.mubr.bf16.gmra.mxu0 %v856
      %v895 = vpop.f32.mrf.mxu0
      %v896 = vadd.f32 0.0, %v895
      %v897 = vpop.f32.mrf.mxu0
      %v898 = vpop.f32.mrf.mxu0
      %v899 = vpop.f32.mrf.mxu0
      %900 = vdwg.mxu0
      %v901 = vadd.f32 %v852, %v896
      %v902 = vpack.c.bf16 %v746, %v746
      %v903 = vld [vmem:[%s4 + $0x4] sm:$0xf]
      %v905 = vsel %vm417, %v902, 0
      %v908 = vsel %vm661, %v903, 0
      %910 = vmatprep.subr.bf16.mxu0 0
      %911 = vmatpush1.bf16.msra.mxu0 0
      %912 = vmatprep.subr.bf16.mxu0 0
      %913 = vmatpush1.bf16.msra.mxu0 0
      %914 = vmatprep.subr.bf16.mxu0 0
      %915 = vmatpush1.bf16.msra.mxu0 0
      %916 = vmatprep.subr.bf16.mxu0 0
      %917 = vmatpush1.bf16.msra.mxu0 0
      %918 = vmatprep.subr.bf16.mxu0 0
      %919 = vmatpush1.bf16.msra.mxu0 0
      %920 = vmatprep.subr.bf16.mxu0 0
      %921 = vmatpush1.bf16.msra.mxu0 0
      %922 = vmatprep.subr.bf16.mxu0 0
      %923 = vmatpush1.bf16.msra.mxu0 0
      %924 = vmatprep.subr.bf16.mxu0 0
      %925 = vmatpush1.bf16.msra.mxu0 %v908
      %926 = vmatprep.subr.bf16.mxu0 0
      %927 = vmatpush2.bf16.msra.mxu0 0
      %928 = vmatprep.subr.bf16.mxu0 0
      %929 = vmatpush2.bf16.msra.mxu0 0
      %930 = vmatprep.subr.bf16.mxu0 0
      %931 = vmatpush2.bf16.msra.mxu0 0
      %932 = vmatprep.subr.bf16.mxu0 0
      %933 = vmatpush2.bf16.msra.mxu0 0
      %934 = vmatprep.subr.bf16.mxu0 0
      %935 = vmatpush2.bf16.msra.mxu0 0
      %936 = vmatprep.subr.bf16.mxu0 0
      %937 = vmatpush2.bf16.msra.mxu0 0
      %938 = vmatprep.subr.bf16.mxu0 0
      %939 = vmatpush2.bf16.msra.mxu0 0
      %940 = vmatprep.subr.bf16.mxu0 0
      %941 = vmatpush2.bf16.msra.mxu0 0
      %942 = vmatprep.mubr.bf16.mxu0 0
      %943 = vmatmul.mubr.bf16.gmra.mxu0 %v905
      %v944 = vpop.f32.mrf.mxu0
      %v945 = vadd.f32 0.0, %v944
      %v946 = vpop.f32.mrf.mxu0
      %v947 = vpop.f32.mrf.mxu0
      %v948 = vpop.f32.mrf.mxu0
      %949 = vdwg.mxu0
      %v950 = vadd.f32 %v901, %v945
      %v951 = vpack.c.bf16 %v792, %v792
      %v952 = vld [vmem:[%s4 + $0x8] sm:$0xf]
      %v954 = vsel %vm417, %v951, 0
      %v957 = vsel %vm661, %v952, 0
      %959 = vmatprep.subr.bf16.mxu0 0
      %960 = vmatpush1.bf16.msra.mxu0 0
      %961 = vmatprep.subr.bf16.mxu0 0
      %962 = vmatpush1.bf16.msra.mxu0 0
      %963 = vmatprep.subr.bf16.mxu0 0
      %964 = vmatpush1.bf16.msra.mxu0 0
      %965 = vmatprep.subr.bf16.mxu0 0
      %966 = vmatpush1.bf16.msra.mxu0 0
      %967 = vmatprep.subr.bf16.mxu0 0
      %968 = vmatpush1.bf16.msra.mxu0 0
      %969 = vmatprep.subr.bf16.mxu0 0
      %970 = vmatpush1.bf16.msra.mxu0 0
      %971 = vmatprep.subr.bf16.mxu0 0
      %972 = vmatpush1.bf16.msra.mxu0 0
      %973 = vmatprep.subr.bf16.mxu0 0
      %974 = vmatpush1.bf16.msra.mxu0 %v957
      %975 = vmatprep.subr.bf16.mxu0 0
      %976 = vmatpush2.bf16.msra.mxu0 0
      %977 = vmatprep.subr.bf16.mxu0 0
      %978 = vmatpush2.bf16.msra.mxu0 0
      %979 = vmatprep.subr.bf16.mxu0 0
      %980 = vmatpush2.bf16.msra.mxu0 0
      %981 = vmatprep.subr.bf16.mxu0 0
      %982 = vmatpush2.bf16.msra.mxu0 0
      %983 = vmatprep.subr.bf16.mxu0 0
      %984 = vmatpush2.bf16.msra.mxu0 0
      %985 = vmatprep.subr.bf16.mxu0 0
      %986 = vmatpush2.bf16.msra.mxu0 0
      %987 = vmatprep.subr.bf16.mxu0 0
      %988 = vmatpush2.bf16.msra.mxu0 0
      %989 = vmatprep.subr.bf16.mxu0 0
      %990 = vmatpush2.bf16.msra.mxu0 0
      %991 = vmatprep.mubr.bf16.mxu0 0
      %992 = vmatmul.mubr.bf16.gmra.mxu0 %v954
      %v993 = vpop.f32.mrf.mxu0
      %v994 = vadd.f32 0.0, %v993
      %v995 = vpop.f32.mrf.mxu0
      %v996 = vpop.f32.mrf.mxu0
      %v997 = vpop.f32.mrf.mxu0
      %998 = vdwg.mxu0
      %v999 = vadd.f32 %v950, %v994
      %v1000 = vpack.c.bf16 %v838, %v838
      %v1001 = vld [vmem:[%s4 + $0xc] sm:$0xf]
      %v1003 = vsel %vm417, %v1000, 0
      %v1006 = vsel %vm661, %v1001, 0
      %1008 = vmatprep.subr.bf16.mxu0 0
      %1009 = vmatpush1.bf16.msra.mxu0 0
      %1010 = vmatprep.subr.bf16.mxu0 0
      %1011 = vmatpush1.bf16.msra.mxu0 0
      %1012 = vmatprep.subr.bf16.mxu0 0
      %1013 = vmatpush1.bf16.msra.mxu0 0
      %1014 = vmatprep.subr.bf16.mxu0 0
      %1015 = vmatpush1.bf16.msra.mxu0 0
      %1016 = vmatprep.subr.bf16.mxu0 0
      %1017 = vmatpush1.bf16.msra.mxu0 0
      %1018 = vmatprep.subr.bf16.mxu0 0
      %1019 = vmatpush1.bf16.msra.mxu0 0
      %1020 = vmatprep.subr.bf16.mxu0 0
      %1021 = vmatpush1.bf16.msra.mxu0 0
      %1022 = vmatprep.subr.bf16.mxu0 0
      %1023 = vmatpush1.bf16.msra.mxu0 %v1006
      %1024 = vmatprep.subr.bf16.mxu0 0
      %1025 = vmatpush2.bf16.msra.mxu0 0
      %1026 = vmatprep.subr.bf16.mxu0 0
      %1027 = vmatpush2.bf16.msra.mxu0 0
      %1028 = vmatprep.subr.bf16.mxu0 0
      %1029 = vmatpush2.bf16.msra.mxu0 0
      %1030 = vmatprep.subr.bf16.mxu0 0
      %1031 = vmatpush2.bf16.msra.mxu0 0
      %1032 = vmatprep.subr.bf16.mxu0 0
      %1033 = vmatpush2.bf16.msra.mxu0 0
      %1034 = vmatprep.subr.bf16.mxu0 0
      %1035 = vmatpush2.bf16.msra.mxu0 0
      %1036 = vmatprep.subr.bf16.mxu0 0
      %1037 = vmatpush2.bf16.msra.mxu0 0
      %1038 = vmatprep.subr.bf16.mxu0 0
      %1039 = vmatpush2.bf16.msra.mxu0 0
      %1040 = vmatprep.mubr.bf16.mxu0 0
      %1041 = vmatmul.mubr.bf16.gmra.mxu0 %v1003
      %v1042 = vpop.f32.mrf.mxu0
      %v1043 = vadd.f32 0.0, %v1042
      %v1044 = vpop.f32.mrf.mxu0
      %v1045 = vpop.f32.mrf.mxu0
      %v1046 = vpop.f32.mrf.mxu0
      %1047 = vdwg.mxu0
      %v1048 = vadd.f32 %v999, %v1043
      %v1049 = vpack.c.bf16 %v1048, %v1048
      %vm1050 = vcmask 257024
      %1051 = vst.msk [vmem:[%s403] sm:$0xf] %vm1050, %v1049
      %p1052 = scmp.lt.s32.totalorder %s22, 1
      %s1053 = scalar_select %p1052, %s22, 1
      %p1054 = scmp.lt.s32.totalorder %s23, 0
      %s1055 = scalar_select %p1054, %s23, 0
      %s1056 = sadd.s32 %s1055, %s1053
      %s1057 = smul.addr %s1056, 4
      %s1058 = scalar_lea.vmem %s7, %s1057
      // Predicated region
      $region49: #{transformer_forward.35} parent=47 // pred_check
        %p1059 = pneg %p228
      $region50: #{transformer_forward.35} parent=47 // pred_check_branch
        %1061 = sbr.rel (%p1059) target = $region52
      $region51: #{transformer_forward.35} parent=47 // pred_region
        _
      $region52: #{transformer_forward.35} parent=47 // pred_fallthru
        _
    $region48: #{transformer_forward.35} parent=5 // pred_fallthru
      _
    %p1062 = scmp.le.s32.totalorder 2, %s13
    // Predicated region
    $region53: #{transformer_forward.35} parent=5 // pred_check
      %p1063 = pneg %p1062
    $region54: #{transformer_forward.35} parent=5 // pred_check_branch
      %1065 = sbr.rel (%p1063) target = $region56
    $region55: #{transformer_forward.35} parent=5 // pred_region
      %s1066 = ssub.s32 %s13, 2
      // Predicated region
      $region57: #{transformer_forward.35} parent=55 // pred_check
        %p1067 = pneg %p234
      $region58: #{transformer_forward.35} parent=55 // pred_check_branch
        %1069 = sbr.rel (%p1067) target = $region60
      $region59: #{transformer_forward.35} parent=55 // pred_region
        %p1070 = scmp.lt.s32.totalorder %s24, 1
        %s1071 = scalar_select %p1070, %s24, 1
        %p1072 = scmp.lt.s32.totalorder %s25, 0
        %s1073 = scalar_select %p1072, %s25, 0
        %s1074 = sadd.s32 %s1073, %s1071
        %s1075 = smul.addr %s1074, 4
        %s1076 = scalar_lea.vmem %s7, %s1075
      $region60: #{transformer_forward.35} parent=55 // pred_fallthru
        _
    $region56: #{transformer_forward.35} parent=5 // pred_fallthru
      _
  $region6: #{transformer_forward.35} parent=0 // loop_footer
    %s17 = sadd.s32 1, %s13
  $region7: #{transformer_forward.35} parent=0 // loop_footer_branch
    %12 = sbr.rel target = $region3
  $region8: #{transformer_forward.35} parent=0 // loop_exit
    _

// kernel: transformer_forward.27
$region0: #{transformer_forward.27}
  #allocation0 [shape = 'u32[]', space=smem, size = 0x4, offset = 0x4, fixed_abs, tag = 'smem constant byte address 0x4 - core index']
  #allocation1 [shape = 'u32[144,128]{1,0:T(1,128)}', space=vmem, size = 0x12000, scoped, tag = 'internal scratch']
  %s0 = inlined_call_operand.vmem [shape: bf16[16,32], index: 0, kind: input, shape index: {}]
  %s1 = inlined_call_operand.vmem [shape: f32[1,32], index: 1, kind: input, shape index: {}]
  %s2 = inlined_call_operand.vmem [shape: f32[1,32], index: 2, kind: input, shape index: {}]
  %s3 = inlined_call_operand.vmem [shape: bf16[32,128], index: 3, kind: input, shape index: {}]
  %s4 = inlined_call_operand.vmem [shape: f32[1,128], index: 4, kind: input, shape index: {}]
  %s5 = inlined_call_operand.vmem [shape: bf16[16,128], index: 5, kind: output, shape index: {}]
  %s6 = sld [smem:[#allocation0]]
  $region30: #{transformer_forward.27} parent=0
    _
  %s8 = ssub.s32 1, %s6
  %s9 = scalar_select 0, %s8, %s6
  // Predicated region
  $region2: #{transformer_forward.27} parent=0 // pred_check
    _
  $region3: #{transformer_forward.27} parent=0 // pred_check_branch
    %11 = sbr.rel (0) target = $region5
  $region4: #{transformer_forward.27} parent=0 // pred_region
    _
  $region5: #{transformer_forward.27} parent=0 // pred_fallthru
    _
  // Predicated region
  $region6: #{transformer_forward.27} parent=0 // pred_check
    _
  $region7: #{transformer_forward.27} parent=0 // pred_check_branch
    %13 = sbr.rel (0) target = $region9
  $region8: #{transformer_forward.27} parent=0 // pred_region
    _
  $region9: #{transformer_forward.27} parent=0 // pred_fallthru
    _
  // Predicated region
  $region10: #{transformer_forward.27} parent=0 // pred_check
    _
  $region11: #{transformer_forward.27} parent=0 // pred_check_branch
    %15 = sbr.rel (0) target = $region13
  $region12: #{transformer_forward.27} parent=0 // pred_region
    _
  $region13: #{transformer_forward.27} parent=0 // pred_fallthru
    _
  // Predicated region
  $region14: #{transformer_forward.27} parent=0 // pred_check
    _
  $region15: #{transformer_forward.27} parent=0 // pred_check_branch
    %17 = sbr.rel (0) target = $region17
  $region16: #{transformer_forward.27} parent=0 // pred_region
    _
  $region17: #{transformer_forward.27} parent=0 // pred_fallthru
    _
  // Predicated region
  $region18: #{transformer_forward.27} parent=0 // pred_check
    _
  $region19: #{transformer_forward.27} parent=0 // pred_check_branch
    %19 = sbr.rel (0) target = $region21
  $region20: #{transformer_forward.27} parent=0 // pred_region
    _
  $region21: #{transformer_forward.27} parent=0 // pred_fallthru
    _
  %v21 = vld [vmem:[%s0] sm:$0xf]
  %v22 = vld [vmem:[%s0 + $0x4] sm:$0xf]
  %v23 = vunpack.c.l.bf16 %v21
  %v24 = vunpack.c.l.bf16 %v22
  %vm25 = vcmask 261120
  %v26 = vsel %vm25, %v23, 0.0
  %27 = vadd.xlane.f32.xlu0 %v26
  %v28 = vpop.xlane.xlu0 %27
  %v29 = vsel %vm25, %v24, 0.0
  %30 = vadd.xlane.f32.xlu0 %v29
  %v31 = vpop.xlane.xlu0 %30
  %v32 = vrcp.pop 32.0
  %v33 = vmul.f32 %v28, %v32
  %v34 = vmul.f32 %v31, %v32
  %v35 = vsub.f32 %v23, %v33
  %v36 = vsub.f32 %v24, %v34
  %v37 = vmul.f32 %v35, %v35
  %v38 = vmul.f32 %v36, %v36
  %v39 = vsel %vm25, %v37, 0.0
  %40 = vadd.xlane.f32.xlu0 %v39
  %v41 = vpop.xlane.xlu0 %40
  %v42 = vsel %vm25, %v38, 0.0
  %43 = vadd.xlane.f32.xlu0 %v42
  %v44 = vpop.xlane.xlu0 %43
  %v45 = vrcp.pop 31.0
  %v46 = vmul.f32 %v41, %v45
  %v47 = vmul.f32 %v44, %v45
  %v48 = vrsqrt.pop %v46
  %v49 = vmul.f32 %v46, %v48
  %vm50 = vcmp.eq.f32.partialorder %v46, inf
  %v51 = vsel %vm50, %v46, %v49
  %vm52 = vcmp.eq.f32.partialorder %v46, 0.0
  %v53 = vand.u32 %v46, 2147483648
  %v54 = vsel %vm52, %v53, %v51
  %v55 = vrsqrt.pop %v47
  %v56 = vmul.f32 %v47, %v55
  %vm57 = vcmp.eq.f32.partialorder %v47, inf
  %v58 = vsel %vm57, %v47, %v56
  %vm59 = vcmp.eq.f32.partialorder %v47, 0.0
  %v60 = vand.u32 %v47, 2147483648
  %v61 = vsel %vm59, %v60, %v58
  %v62 = vld [vmem:[%s1] sm:$0x1]
  %v64 = vlaneseq
  %v65 = vshrl.u32 %v64, 7
  %v66 = vsub.s32 0, %v65
  %v67 = vrot.slane %v62, %v66
  %v69 = vmul.f32 %v67, %v35
  %v70 = vmul.f32 %v67, %v36
  %v71 = vadd.f32 %v54, 1e-06
  %v72 = vadd.f32 %v61, 1e-06
  %v73 = vrcp.pop %v71
  %v74 = vmul.f32 %v69, %v73
  %v75 = vrcp.pop %v72
  %v76 = vmul.f32 %v70, %v75
  %v77 = vld [vmem:[%s2] sm:$0x1]
  %v79 = vlaneseq
  %v80 = vshrl.u32 %v79, 7
  %v81 = vsub.s32 0, %v80
  %v82 = vrot.slane %v77, %v81
  %v84 = vadd.f32 %v74, %v82
  %v85 = vadd.f32 %v76, %v82
  %v86 = vpack.c.bf16 %v85, %v84
  %v87 = vld [vmem:[%s3] sm:$0xf]
  %v88 = vld [vmem:[%s3 + $0x4] sm:$0xf]
  %v89 = vld [vmem:[%s3 + $0x8] sm:$0xf]
  %v90 = vld [vmem:[%s3 + $0xc] sm:$0xf]
  %v91 = vld [vmem:[%s4] sm:$0x1]
  %v93 = vlaneseq
  %v94 = vshrl.u32 %v93, 7
  %v95 = vsub.s32 0, %v94
  %v96 = vrot.slane %v91, %v95
  %v102 = vunpack.c.l.b16 %v87
  %v103 = vunpack.c.l.b16 %v88
  %v104 = vunpack.c.l.b16 %v89
  %v105 = vunpack.c.l.b16 %v90
  %v106 = vpack.c.b16 %v103, %v102
  %v107 = vpack.c.b16 %v105, %v104
  %v111 = vsel %vm25, %v86, 0
  %113 = vmatprep.subr.bf16.mxu0 0
  %114 = vmatpush1.bf16.msra.mxu0 0
  %115 = vmatprep.subr.bf16.mxu0 0
  %116 = vmatpush1.bf16.msra.mxu0 0
  %117 = vmatprep.subr.bf16.mxu0 0
  %118 = vmatpush1.bf16.msra.mxu0 0
  %119 = vmatprep.subr.bf16.mxu0 0
  %120 = vmatpush1.bf16.msra.mxu0 0
  %121 = vmatprep.subr.bf16.mxu0 0
  %122 = vmatpush1.bf16.msra.mxu0 0
  %123 = vmatprep.subr.bf16.mxu0 0
  %124 = vmatpush1.bf16.msra.mxu0 0
  %125 = vmatprep.subr.bf16.mxu0 0
  %126 = vmatpush1.bf16.msra.mxu0 %v107
  %127 = vmatprep.subr.bf16.mxu0 0
  %128 = vmatpush1.bf16.msra.mxu0 %v106
  %129 = vmatprep.subr.bf16.mxu0 0
  %130 = vmatpush2.bf16.msra.mxu0 0
  %131 = vmatprep.subr.bf16.mxu0 0
  %132 = vmatpush2.bf16.msra.mxu0 0
  %133 = vmatprep.subr.bf16.mxu0 0
  %134 = vmatpush2.bf16.msra.mxu0 0
  %135 = vmatprep.subr.bf16.mxu0 0
  %136 = vmatpush2.bf16.msra.mxu0 0
  %137 = vmatprep.subr.bf16.mxu0 0
  %138 = vmatpush2.bf16.msra.mxu0 0
  %139 = vmatprep.subr.bf16.mxu0 0
  %140 = vmatpush2.bf16.msra.mxu0 0
  %141 = vmatprep.subr.bf16.mxu0 0
  %142 = vmatpush2.bf16.msra.mxu0 0
  %143 = vmatprep.subr.bf16.mxu0 0
  %144 = vmatpush2.bf16.msra.mxu0 0
  %145 = vmatprep.mubr.bf16.mxu0 0
  %146 = vmatmul.mubr.bf16.gmra.mxu0 %v111
  %v147 = vpop.f32.mrf.mxu0
  %v148 = vadd.f32 %v96, %v147
  %v149 = vpop.f32.mrf.mxu0
  %v150 = vpop.f32.mrf.mxu0
  %v151 = vadd.f32 %v96, %v150
  %v152 = vpop.f32.mrf.mxu0
  %153 = vdwg.mxu0
  %v154 = vmax.f32 %v148, 0.0
  %v155 = vmax.f32 %v151, 0.0
  %v156 = vpack.c.bf16 %v155, %v154
  %v158 = vunpack.c.l.b16 %v156
  %v159 = vunpack.c.h.b16 %v156
  %v160 = vpack.c.b16 %v158, %v158
  %v161 = vpack.c.b16 %v159, %v159
  %164 = vst [vmem:[%s5] sm:$0xf] %v160
  %165 = vst [vmem:[%s5 + $0x4] sm:$0xf] %v161
  // Predicated region
  $region22: #{transformer_forward.27} parent=0 // pred_check
    _
  $region23: #{transformer_forward.27} parent=0 // pred_check_branch
    %167 = sbr.rel (0) target = $region25
  $region24: #{transformer_forward.27} parent=0 // pred_region
    _
  $region25: #{transformer_forward.27} parent=0 // pred_fallthru
    _
  // Predicated region
  $region26: #{transformer_forward.27} parent=0 // pred_check
    _
  $region27: #{transformer_forward.27} parent=0 // pred_check_branch
    %169 = sbr.rel (0) target = $region29
  $region28: #{transformer_forward.27} parent=0 // pred_region
    _
  $region29: #{transformer_forward.27} parent=0 // pred_fallthru
    _

// kernel: transformer_forward.28
$region0: #{transformer_forward.28}
  #allocation0 [shape = 'u32[]', space=smem, size = 0x4, offset = 0x4, fixed_abs, tag = 'smem constant byte address 0x4 - core index']
  #allocation1 [shape = 'u32[144,128]{1,0:T(1,128)}', space=vmem, size = 0x12000, scoped, tag = 'internal scratch']
  #allocation2 [shape = 'f32[16,32]{1,0:T(8,128)}', space=vmem, size = 0x2000, scoped, tag = 'scratch operand']
  %s0 = inlined_call_operand.vmem [shape: bf16[16,128], index: 0, kind: input, shape index: {}]
  %s1 = inlined_call_operand.vmem [shape: bf16[128,32], index: 1, kind: input, shape index: {}]
  %s2 = inlined_call_operand.vmem [shape: f32[1,32], index: 2, kind: input, shape index: {}]
  %s3 = inlined_call_operand.vmem [shape: bf16[16,32], index: 3, kind: input, shape index: {}]
  %s4 = inlined_call_operand.vmem [shape: bf16[16,32], index: 4, kind: output, shape index: {}]
  %s5 = sld [smem:[#allocation0]]
  $region34: #{transformer_forward.28} parent=0
    _
  %s7 = ssub.s32 1, %s5
  %s8 = scalar_select 0, %s7, %s5
  // Predicated region
  $region2: #{transformer_forward.28} parent=0 // pred_check
    _
  $region3: #{transformer_forward.28} parent=0 // pred_check_branch
    %10 = sbr.rel (0) target = $region5
  $region4: #{transformer_forward.28} parent=0 // pred_region
    _
  $region5: #{transformer_forward.28} parent=0 // pred_fallthru
    _
  // Predicated region
  $region6: #{transformer_forward.28} parent=0 // pred_check
    _
  $region7: #{transformer_forward.28} parent=0 // pred_check_branch
    %12 = sbr.rel (0) target = $region9
  $region8: #{transformer_forward.28} parent=0 // pred_region
    _
  $region9: #{transformer_forward.28} parent=0 // pred_fallthru
    _
  // Predicated region
  $region10: #{transformer_forward.28} parent=0 // pred_check
    _
  $region11: #{transformer_forward.28} parent=0 // pred_check_branch
    %14 = sbr.rel (0) target = $region13
  $region12: #{transformer_forward.28} parent=0 // pred_region
    _
  $region13: #{transformer_forward.28} parent=0 // pred_fallthru
    _
  // Predicated region
  $region14: #{transformer_forward.28} parent=0 // pred_check
    _
  $region15: #{transformer_forward.28} parent=0 // pred_check_branch
    %16 = sbr.rel (0) target = $region17
  $region16: #{transformer_forward.28} parent=0 // pred_region
    _
  $region17: #{transformer_forward.28} parent=0 // pred_fallthru
    _
  %p18 = scmp.eq.s32.totalorder 0, 0
  // Predicated region
  $region18: #{transformer_forward.28} parent=0 // pred_check
    %p19 = pneg %p18
  $region19: #{transformer_forward.28} parent=0 // pred_check_branch
    %21 = sbr.rel (%p19) target = $region21
  $region20: #{transformer_forward.28} parent=0 // pred_region
    %vm22 = vcmask 261120
    %23 = vst.msk [vmem:[#allocation2] sm:$0xff] %vm22, 0.0
    %24 = vst.msk [vmem:[#allocation2 + $0x8] sm:$0xff] %vm22, 0.0
  $region21: #{transformer_forward.28} parent=0 // pred_fallthru
    _
  %v25 = vld [vmem:[#allocation2] sm:$0xff]
  %v26 = vld [vmem:[#allocation2 + $0x8] sm:$0xff]
  %v27 = vld [vmem:[%s0] sm:$0xf]
  %v28 = vld [vmem:[%s0 + $0x4] sm:$0xf]
  %v29 = vld [vmem:[%s1] sm:$0xf]
  %v30 = vld [vmem:[%s1 + $0x4] sm:$0xf]
  %v31 = vld [vmem:[%s1 + $0x8] sm:$0xf]
  %v32 = vld [vmem:[%s1 + $0xc] sm:$0xf]
  %v33 = vld [vmem:[%s1 + $0x10] sm:$0xf]
  %v34 = vld [vmem:[%s1 + $0x14] sm:$0xf]
  %v35 = vld [vmem:[%s1 + $0x18] sm:$0xf]
  %v36 = vld [vmem:[%s1 + $0x1c] sm:$0xf]
  %v37 = vld [vmem:[%s1 + $0x20] sm:$0xf]
  %v38 = vld [vmem:[%s1 + $0x24] sm:$0xf]
  %v39 = vld [vmem:[%s1 + $0x28] sm:$0xf]
  %v40 = vld [vmem:[%s1 + $0x2c] sm:$0xf]
  %v41 = vld [vmem:[%s1 + $0x30] sm:$0xf]
  %v42 = vld [vmem:[%s1 + $0x34] sm:$0xf]
  %v43 = vld [vmem:[%s1 + $0x38] sm:$0xf]
  %v44 = vld [vmem:[%s1 + $0x3c] sm:$0xf]
  %v47 = vunpack.c.l.b16 %v27
  %v48 = vunpack.c.l.b16 %v28
  %v49 = vpack.c.b16 %v48, %v47
  %v67 = vunpack.c.l.b16 %v29
  %v68 = vunpack.c.l.b16 %v30
  %v69 = vunpack.c.l.b16 %v31
  %v70 = vunpack.c.l.b16 %v32
  %v71 = vunpack.c.l.b16 %v33
  %v72 = vunpack.c.l.b16 %v34
  %v73 = vunpack.c.l.b16 %v35
  %v74 = vunpack.c.l.b16 %v36
  %v75 = vunpack.c.l.b16 %v37
  %v76 = vunpack.c.l.b16 %v38
  %v77 = vunpack.c.l.b16 %v39
  %v78 = vunpack.c.l.b16 %v40
  %v79 = vunpack.c.l.b16 %v41
  %v80 = vunpack.c.l.b16 %v42
  %v81 = vunpack.c.l.b16 %v43
  %v82 = vunpack.c.l.b16 %v44
  %v83 = vpack.c.b16 %v68, %v67
  %v84 = vpack.c.b16 %v70, %v69
  %v85 = vpack.c.b16 %v72, %v71
  %v86 = vpack.c.b16 %v74, %v73
  %v87 = vpack.c.b16 %v76, %v75
  %v88 = vpack.c.b16 %v78, %v77
  %v89 = vpack.c.b16 %v80, %v79
  %v90 = vpack.c.b16 %v82, %v81
  %99 = vmatprep.subr.bf16.mxu0 0
  %100 = vmatpush1.bf16.msra.mxu0 %v90
  %101 = vmatprep.subr.bf16.mxu0 0
  %102 = vmatpush1.bf16.msra.mxu0 %v89
  %103 = vmatprep.subr.bf16.mxu0 0
  %104 = vmatpush1.bf16.msra.mxu0 %v88
  %105 = vmatprep.subr.bf16.mxu0 0
  %106 = vmatpush1.bf16.msra.mxu0 %v87
  %107 = vmatprep.subr.bf16.mxu0 0
  %108 = vmatpush1.bf16.msra.mxu0 %v86
  %109 = vmatprep.subr.bf16.mxu0 0
  %110 = vmatpush1.bf16.msra.mxu0 %v85
  %111 = vmatprep.subr.bf16.mxu0 0
  %112 = vmatpush1.bf16.msra.mxu0 %v84
  %113 = vmatprep.subr.bf16.mxu0 0
  %114 = vmatpush1.bf16.msra.mxu0 %v83
  %115 = vmatprep.subr.bf16.mxu0 0
  %116 = vmatpush2.bf16.msra.mxu0 0
  %117 = vmatprep.subr.bf16.mxu0 0
  %118 = vmatpush2.bf16.msra.mxu0 0
  %119 = vmatprep.subr.bf16.mxu0 0
  %120 = vmatpush2.bf16.msra.mxu0 0
  %121 = vmatprep.subr.bf16.mxu0 0
  %122 = vmatpush2.bf16.msra.mxu0 0
  %123 = vmatprep.subr.bf16.mxu0 0
  %124 = vmatpush2.bf16.msra.mxu0 0
  %125 = vmatprep.subr.bf16.mxu0 0
  %126 = vmatpush2.bf16.msra.mxu0 0
  %127 = vmatprep.subr.bf16.mxu0 0
  %128 = vmatpush2.bf16.msra.mxu0 0
  %129 = vmatprep.subr.bf16.mxu0 0
  %130 = vmatpush2.bf16.msra.mxu0 0
  %131 = vmatprep.mubr.bf16.mxu0 0
  %132 = vmatmul.mubr.bf16.gmra.mxu0 %v49
  %v133 = vpop.f32.mrf.mxu0
  %v134 = vadd.f32 0.0, %v133
  %v135 = vpop.f32.mrf.mxu0
  %v136 = vpop.f32.mrf.mxu0
  %v137 = vadd.f32 0.0, %v136
  %v138 = vpop.f32.mrf.mxu0
  %139 = vdwg.mxu0
  %v140 = vadd.f32 %v25, %v134
  %v141 = vadd.f32 %v26, %v137
  %vm142 = vcmask 261120
  %143 = vst.msk [vmem:[#allocation2] sm:$0xff] %vm142, %v140
  %144 = vst.msk [vmem:[#allocation2 + $0x8] sm:$0xff] %vm142, %v141
  // Predicated region
  $region22: #{transformer_forward.28} parent=0 // pred_check
    %p145 = pneg %p18
  $region23: #{transformer_forward.28} parent=0 // pred_check_branch
    %147 = sbr.rel (%p145) target = $region25
  $region24: #{transformer_forward.28} parent=0 // pred_region
    %v148 = vld [vmem:[#allocation2] sm:$0xff]
    %v149 = vld [vmem:[#allocation2 + $0x8] sm:$0xff]
    %v150 = vld [vmem:[%s2] sm:$0x1]
    %v152 = vlaneseq
    %v153 = vshrl.u32 %v152, 7
    %v154 = vsub.s32 0, %v153
    %v155 = vrot.slane %v150, %v154
    %v157 = vadd.f32 %v148, %v155
    %v158 = vadd.f32 %v149, %v155
    %v159 = vld [vmem:[%s3] sm:$0xf]
    %v160 = vld [vmem:[%s3 + $0x4] sm:$0xf]
    %v161 = vunpack.c.l.bf16 %v159
    %v162 = vunpack.c.l.bf16 %v160
    %v163 = vadd.f32 %v157, %v161
    %v164 = vadd.f32 %v158, %v162
    %v165 = vpack.c.bf16 %v164, %v163
    %v167 = vunpack.c.l.b16 %v165
    %v168 = vunpack.c.h.b16 %v165
    %v169 = vpack.c.b16 %v167, %v167
    %v170 = vpack.c.b16 %v168, %v168
    %vm173 = vcmask 257024
    %174 = vst.msk [vmem:[%s4] sm:$0xf] %vm173, %v169
    %175 = vst.msk [vmem:[%s4 + $0x4] sm:$0xf] %vm173, %v170
  $region25: #{transformer_forward.28} parent=0 // pred_fallthru
    _
  // Predicated region
  $region26: #{transformer_forward.28} parent=0 // pred_check
    _
  $region27: #{transformer_forward.28} parent=0 // pred_check_branch
    %177 = sbr.rel (0) target = $region29
  $region28: #{transformer_forward.28} parent=0 // pred_region
    _
  $region29: #{transformer_forward.28} parent=0 // pred_fallthru
    _
  // Predicated region
  $region30: #{transformer_forward.28} parent=0 // pred_check
    _
  $region31: #{transformer_forward.28} parent=0 // pred_check_branch
    %179 = sbr.rel (0) target = $region33
  $region32: #{transformer_forward.28} parent=0 // pred_region
    _
  $region33: #{transformer_forward.28} parent=0 // pred_fallthru
    _

// kernel: transformer_forward.33
$region0: #{transformer_forward.33}
  #allocation0 [shape = 'u32[]', space=smem, size = 0x4, offset = 0x4, fixed_abs, tag = 'smem constant byte address 0x4 - core index']
  #allocation1 [shape = 'u32[144,128]{1,0:T(1,128)}', space=vmem, size = 0x12000, scoped, tag = 'internal scratch']
  %s0 = inlined_call_operand.vmem [shape: bf16[16,32], index: 0, kind: input, shape index: {}]
  %s1 = inlined_call_operand.vmem [shape: f32[1,32], index: 1, kind: input, shape index: {}]
  %s2 = inlined_call_operand.vmem [shape: f32[1,32], index: 2, kind: input, shape index: {}]
  %s3 = inlined_call_operand.vmem [shape: bf16[16,32], index: 3, kind: output, shape index: {}]
  %s4 = sld [smem:[#allocation0]]
  $region22: #{transformer_forward.33} parent=0
    _
  %s6 = ssub.s32 1, %s4
  %s7 = scalar_select 0, %s6, %s4
  // Predicated region
  $region2: #{transformer_forward.33} parent=0 // pred_check
    _
  $region3: #{transformer_forward.33} parent=0 // pred_check_branch
    %9 = sbr.rel (0) target = $region5
  $region4: #{transformer_forward.33} parent=0 // pred_region
    _
  $region5: #{transformer_forward.33} parent=0 // pred_fallthru
    _
  // Predicated region
  $region6: #{transformer_forward.33} parent=0 // pred_check
    _
  $region7: #{transformer_forward.33} parent=0 // pred_check_branch
    %11 = sbr.rel (0) target = $region9
  $region8: #{transformer_forward.33} parent=0 // pred_region
    _
  $region9: #{transformer_forward.33} parent=0 // pred_fallthru
    _
  // Predicated region
  $region10: #{transformer_forward.33} parent=0 // pred_check
    _
  $region11: #{transformer_forward.33} parent=0 // pred_check_branch
    %13 = sbr.rel (0) target = $region13
  $region12: #{transformer_forward.33} parent=0 // pred_region
    _
  $region13: #{transformer_forward.33} parent=0 // pred_fallthru
    _
  %v14 = vld [vmem:[%s0] sm:$0xf]
  %v15 = vld [vmem:[%s0 + $0x4] sm:$0xf]
  %v16 = vunpack.c.l.bf16 %v14
  %v17 = vunpack.c.l.bf16 %v15
  %vm18 = vcmask 261120
  %v19 = vsel %vm18, %v16, 0.0
  %20 = vadd.xlane.f32.xlu0 %v19
  %v21 = vpop.xlane.xlu0 %20
  %v22 = vsel %vm18, %v17, 0.0
  %23 = vadd.xlane.f32.xlu0 %v22
  %v24 = vpop.xlane.xlu0 %23
  %v25 = vrcp.pop 32.0
  %v26 = vmul.f32 %v21, %v25
  %v27 = vmul.f32 %v24, %v25
  %v28 = vsub.f32 %v16, %v26
  %v29 = vsub.f32 %v17, %v27
  %v30 = vmul.f32 %v28, %v28
  %v31 = vmul.f32 %v29, %v29
  %v32 = vsel %vm18, %v30, 0.0
  %33 = vadd.xlane.f32.xlu0 %v32
  %v34 = vpop.xlane.xlu0 %33
  %v35 = vsel %vm18, %v31, 0.0
  %36 = vadd.xlane.f32.xlu0 %v35
  %v37 = vpop.xlane.xlu0 %36
  %v38 = vrcp.pop 31.0
  %v39 = vmul.f32 %v34, %v38
  %v40 = vmul.f32 %v37, %v38
  %v41 = vrsqrt.pop %v39
  %v42 = vmul.f32 %v39, %v41
  %vm43 = vcmp.eq.f32.partialorder %v39, inf
  %v44 = vsel %vm43, %v39, %v42
  %vm45 = vcmp.eq.f32.partialorder %v39, 0.0
  %v46 = vand.u32 %v39, 2147483648
  %v47 = vsel %vm45, %v46, %v44
  %v48 = vrsqrt.pop %v40
  %v49 = vmul.f32 %v40, %v48
  %vm50 = vcmp.eq.f32.partialorder %v40, inf
  %v51 = vsel %vm50, %v40, %v49
  %vm52 = vcmp.eq.f32.partialorder %v40, 0.0
  %v53 = vand.u32 %v40, 2147483648
  %v54 = vsel %vm52, %v53, %v51
  %v55 = vld [vmem:[%s1] sm:$0x1]
  %v57 = vlaneseq
  %v58 = vshrl.u32 %v57, 7
  %v59 = vsub.s32 0, %v58
  %v60 = vrot.slane %v55, %v59
  %v62 = vmul.f32 %v60, %v28
  %v63 = vmul.f32 %v60, %v29
  %v64 = vadd.f32 %v47, 1e-06
  %v65 = vadd.f32 %v54, 1e-06
  %v66 = vrcp.pop %v64
  %v67 = vmul.f32 %v62, %v66
  %v68 = vrcp.pop %v65
  %v69 = vmul.f32 %v63, %v68
  %v70 = vld [vmem:[%s2] sm:$0x1]
  %v72 = vlaneseq
  %v73 = vshrl.u32 %v72, 7
  %v74 = vsub.s32 0, %v73
  %v75 = vrot.slane %v70, %v74
  %v77 = vadd.f32 %v67, %v75
  %v78 = vadd.f32 %v69, %v75
  %v79 = vpack.c.bf16 %v78, %v77
  %v81 = vunpack.c.l.b16 %v79
  %v82 = vunpack.c.h.b16 %v79
  %v83 = vpack.c.b16 %v81, %v81
  %v84 = vpack.c.b16 %v82, %v82
  %vm87 = vcmask 257024
  %88 = vst.msk [vmem:[%s3] sm:$0xf] %vm87, %v83
  %89 = vst.msk [vmem:[%s3 + $0x4] sm:$0xf] %vm87, %v84
  // Predicated region
  $region14: #{transformer_forward.33} parent=0 // pred_check
    _
  $region15: #{transformer_forward.33} parent=0 // pred_check_branch
    %91 = sbr.rel (0) target = $region17
  $region16: #{transformer_forward.33} parent=0 // pred_region
    _
  $region17: #{transformer_forward.33} parent=0 // pred_fallthru
    _
  // Predicated region
  $region18: #{transformer_forward.33} parent=0 // pred_check
    _
  $region19: #{transformer_forward.33} parent=0 // pred_check_branch
    %93 = sbr.rel (0) target = $region21
  $region20: #{transformer_forward.33} parent=0 // pred_region
    _
  $region21: #{transformer_forward.33} parent=0 // pred_fallthru
    _

// kernel: transformer_forward.26
$region0: #{transformer_forward.26}
  #allocation0 [shape = 'u32[]', space=smem, size = 0x4, offset = 0x4, fixed_abs, tag = 'smem constant byte address 0x4 - core index']
  #allocation1 [shape = 'u32[144,128]{1,0:T(1,128)}', space=vmem, size = 0x12000, scoped, tag = 'internal scratch']
  %s0 = inlined_call_operand.vmem [shape: bf16[2,4,8,8], index: 0, kind: input, shape index: {}]
  %s1 = inlined_call_operand.vmem [shape: bf16[2,4,8,8], index: 1, kind: input, shape index: {}]
  %s2 = inlined_call_operand.vmem [shape: bf16[2,4,8,8], index: 2, kind: input, shape index: {}]
  %s3 = inlined_call_operand.vmem [shape: s32[2,1,8], index: 3, kind: input, shape index: {}]
  %s4 = inlined_call_operand.vmem [shape: bf16[32,32], index: 4, kind: input, shape index: {}]
  %s5 = inlined_call_operand.vmem [shape: f32[1,32], index: 5, kind: input, shape index: {}]
  %s6 = inlined_call_operand.vmem [shape: bf16[2,8,32], index: 6, kind: input, shape index: {}]
  %s7 = inlined_call_operand.vmem [shape: bf16[2,8,32], index: 7, kind: output, shape index: {}]
  %s8 = sld [smem:[#allocation0]]
  $region61: #{transformer_forward.26} parent=0
    _
  %s10 = ssub.s32 1, %s8
  %s11 = scalar_select 0, %s10, %s8
  loop: start=0, step=1, limit=4
  $region2: #{transformer_forward.26} parent=0 // loop_pre_header
    _
  $region3: #{transformer_forward.26} parent=0 // loop_header
    %s13 = sphi 0, %s17
    %p14 = scmp.ge.s32.totalorder %s13, 4
    %s20 = sphi 0, %s32
    %s21 = sphi 0, %s28
    %s22 = sphi 0, %s20
    %s23 = sphi 0, %s21
    %s24 = sphi 0, %s22
    %s25 = sphi 0, %s23
    %s37 = sphi 0, %s39
    %s40 = sphi 0, %s37
    %s41 = sphi 0, %s40
    %s57 = sphi 0, %s41
    %s63 = sphi 0, %s65
    %s66 = sphi 0, %s63
    %s67 = sphi 0, %s66
    %s83 = sphi 0, %s67
    %s89 = sphi 0, %s91
    %s92 = sphi 0, %s89
    %s93 = sphi 0, %s92
    %s109 = sphi 0, %s93
    %s115 = sphi 0, %s117
    %s118 = sphi 0, %s115
    %s119 = sphi 0, %s118
    %s135 = sphi 0, %s119
    %s139 = sphi 0, %s139
    %s141 = sphi 0, %s139
    %s142 = sphi 0, %s141
    %s156 = sphi 0, %s142
    %s160 = sphi 0, %s160
    %s162 = sphi 0, %s160
    %s163 = sphi 0, %s162
    %s177 = sphi 0, %s163
    %s185 = sphi 0, %s187
    %s188 = sphi 0, %s185
    %s189 = sphi 0, %s188
    %s205 = sphi 0, %s189
    %s213 = sphi 0, %s215
    %s216 = sphi 0, %s213
    %s217 = sphi 0, %s216
    %s233 = sphi 0, %s217
  $region4: #{transformer_forward.26} parent=0 // loop_header_branch
    %16 = sbr.rel (%p14) target = $region8
  $region5: #{transformer_forward.26} parent=0 // loop_body
    %s18 = ssub.s32 %s13, 1
    %s19 = ssub.s32 %s13, 2
    %s26 = sadd.s32 1, %s21
    %p27 = scmp.ge.s32.totalorder %s26, 1
    %s28 = scalar_select %p27, 0, %s26
    %s29 = sadd.s32 1, %s20
    %s30 = scalar_select %p27, %s29, %s20
    %p31 = scmp.ge.s32.totalorder %s30, 2
    %s32 = scalar_select %p31, 0, %s30
    %s33 = ssub.s32 %s20, %s32
    %s34 = ssub.s32 %s21, %s28
    %s35 = sor.u32 %s33, %s34
    %p36 = scmp.eq.s32.totalorder %s35, 0
    %s38 = sadd.s32 %s37, 1
    %s39 = scalar_select %p36, %s37, %s38
    %p42 = pneg %p36
    %p43 = scmp.eq.s32.totalorder %s13, 1
    %p44 = por %p42, %p43
    %p45 = scmp.ne.s32.totalorder %s37, %s40
    %p46 = scmp.eq.s32.totalorder %s13, 0
    %p47 = por %p45, %p46
    %p48 = scmp.ne.s32.totalorder %s37, %s40
    %p49 = scmp.eq.s32.totalorder %s18, 1
    %p50 = por %p48, %p49
    %p51 = scmp.ne.s32.totalorder %s40, %s41
    %p52 = scmp.eq.s32.totalorder %s18, 0
    %p53 = por %p51, %p52
    %p54 = scmp.ne.s32.totalorder %s40, %s41
    %p55 = scmp.eq.s32.totalorder %s19, 1
    %p56 = por %p54, %p55
    %p58 = scmp.ne.s32.totalorder %s41, %s57
    %p59 = scmp.eq.s32.totalorder %s19, 0
    %p60 = por %p58, %p59
    %s61 = ssub.s32 %s20, %s32
    %p62 = scmp.eq.s32.totalorder %s61, 0
    %s64 = sadd.s32 %s63, 1
    %s65 = scalar_select %p62, %s63, %s64
    %p68 = pneg %p62
    %p69 = scmp.eq.s32.totalorder %s13, 1
    %p70 = por %p68, %p69
    %p71 = scmp.ne.s32.totalorder %s63, %s66
    %p72 = scmp.eq.s32.totalorder %s13, 0
    %p73 = por %p71, %p72
    %p74 = scmp.ne.s32.totalorder %s63, %s66
    %p75 = scmp.eq.s32.totalorder %s18, 1
    %p76 = por %p74, %p75
    %p77 = scmp.ne.s32.totalorder %s66, %s67
    %p78 = scmp.eq.s32.totalorder %s18, 0
    %p79 = por %p77, %p78
    %p80 = scmp.ne.s32.totalorder %s66, %s67
    %p81 = scmp.eq.s32.totalorder %s19, 1
    %p82 = por %p80, %p81
    %p84 = scmp.ne.s32.totalorder %s67, %s83
    %p85 = scmp.eq.s32.totalorder %s19, 0
    %p86 = por %p84, %p85
    %s87 = ssub.s32 %s20, %s32
    %p88 = scmp.eq.s32.totalorder %s87, 0
    %s90 = sadd.s32 %s89, 1
    %s91 = scalar_select %p88, %s89, %s90
    %p94 = pneg %p88
    %p95 = scmp.eq.s32.totalorder %s13, 1
    %p96 = por %p94, %p95
    %p97 = scmp.ne.s32.totalorder %s89, %s92
    %p98 = scmp.eq.s32.totalorder %s13, 0
    %p99 = por %p97, %p98
    %p100 = scmp.ne.s32.totalorder %s89, %s92
    %p101 = scmp.eq.s32.totalorder %s18, 1
    %p102 = por %p100, %p101
    %p103 = scmp.ne.s32.totalorder %s92, %s93
    %p104 = scmp.eq.s32.totalorder %s18, 0
    %p105 = por %p103, %p104
    %p106 = scmp.ne.s32.totalorder %s92, %s93
    %p107 = scmp.eq.s32.totalorder %s19, 1
    %p108 = por %p106, %p107
    %p110 = scmp.ne.s32.totalorder %s93, %s109
    %p111 = scmp.eq.s32.totalorder %s19, 0
    %p112 = por %p110, %p111
    %s113 = ssub.s32 %s20, %s32
    %p114 = scmp.eq.s32.totalorder %s113, 0
    %s116 = sadd.s32 %s115, 1
    %s117 = scalar_select %p114, %s115, %s116
    %p120 = pneg %p114
    %p121 = scmp.eq.s32.totalorder %s13, 1
    %p122 = por %p120, %p121
    %p123 = scmp.ne.s32.totalorder %s115, %s118
    %p124 = scmp.eq.s32.totalorder %s13, 0
    %p125 = por %p123, %p124
    %p126 = scmp.ne.s32.totalorder %s115, %s118
    %p127 = scmp.eq.s32.totalorder %s18, 1
    %p128 = por %p126, %p127
    %p129 = scmp.ne.s32.totalorder %s118, %s119
    %p130 = scmp.eq.s32.totalorder %s18, 0
    %p131 = por %p129, %p130
    %p132 = scmp.ne.s32.totalorder %s118, %s119
    %p133 = scmp.eq.s32.totalorder %s19, 1
    %p134 = por %p132, %p133
    %p136 = scmp.ne.s32.totalorder %s119, %s135
    %p137 = scmp.eq.s32.totalorder %s19, 0
    %p138 = por %p136, %p137
    %s140 = sadd.s32 %s139, 1
    %p143 = scmp.eq.s32.totalorder %s13, 1
    %p144 = scmp.ne.s32.totalorder %s139, %s141
    %p145 = scmp.eq.s32.totalorder %s13, 0
    %p146 = por %p144, %p145
    %p147 = scmp.ne.s32.totalorder %s139, %s141
    %p148 = scmp.eq.s32.totalorder %s18, 1
    %p149 = por %p147, %p148
    %p150 = scmp.ne.s32.totalorder %s141, %s142
    %p151 = scmp.eq.s32.totalorder %s18, 0
    %p152 = por %p150, %p151
    %p153 = scmp.ne.s32.totalorder %s141, %s142
    %p154 = scmp.eq.s32.totalorder %s19, 1
    %p155 = por %p153, %p154
    %p157 = scmp.ne.s32.totalorder %s142, %s156
    %p158 = scmp.eq.s32.totalorder %s19, 0
    %p159 = por %p157, %p158
    %s161 = sadd.s32 %s160, 1
    %p164 = scmp.eq.s32.totalorder %s13, 1
    %p165 = scmp.ne.s32.totalorder %s160, %s162
    %p166 = scmp.eq.s32.totalorder %s13, 0
    %p167 = por %p165, %p166
    %p168 = scmp.ne.s32.totalorder %s160, %s162
    %p169 = scmp.eq.s32.totalorder %s18, 1
    %p170 = por %p168, %p169
    %p171 = scmp.ne.s32.totalorder %s162, %s163
    %p172 = scmp.eq.s32.totalorder %s18, 0
    %p173 = por %p171, %p172
    %p174 = scmp.ne.s32.totalorder %s162, %s163
    %p175 = scmp.eq.s32.totalorder %s19, 1
    %p176 = por %p174, %p175
    %p178 = scmp.ne.s32.totalorder %s163, %s177
    %p179 = scmp.eq.s32.totalorder %s19, 0
    %p180 = por %p178, %p179
    %s181 = ssub.s32 %s20, %s32
    %s182 = ssub.s32 %s21, %s28
    %s183 = sor.u32 %s181, %s182
    %p184 = scmp.eq.s32.totalorder %s183, 0
    %s186 = sadd.s32 %s185, 1
    %s187 = scalar_select %p184, %s185, %s186
    %p190 = pneg %p184
    %p191 = scmp.eq.s32.totalorder %s13, 1
    %p192 = por %p190, %p191
    %p193 = scmp.ne.s32.totalorder %s185, %s188
    %p194 = scmp.eq.s32.totalorder %s13, 0
    %p195 = por %p193, %p194
    %p196 = scmp.ne.s32.totalorder %s185, %s188
    %p197 = scmp.eq.s32.totalorder %s18, 1
    %p198 = por %p196, %p197
    %p199 = scmp.ne.s32.totalorder %s188, %s189
    %p200 = scmp.eq.s32.totalorder %s18, 0
    %p201 = por %p199, %p200
    %p202 = scmp.ne.s32.totalorder %s188, %s189
    %p203 = scmp.eq.s32.totalorder %s19, 1
    %p204 = por %p202, %p203
    %p206 = scmp.ne.s32.totalorder %s189, %s205
    %p207 = scmp.eq.s32.totalorder %s19, 0
    %p208 = por %p206, %p207
    %s209 = ssub.s32 %s20, %s32
    %s210 = ssub.s32 %s21, %s28
    %s211 = sor.u32 %s209, %s210
    %p212 = scmp.eq.s32.totalorder %s211, 0
    %s214 = sadd.s32 %s213, 1
    %s215 = scalar_select %p212, %s213, %s214
    %p218 = pneg %p212
    %p219 = scmp.eq.s32.totalorder %s13, 1
    %p220 = por %p218, %p219
    %p221 = scmp.ne.s32.totalorder %s213, %s216
    %p222 = scmp.eq.s32.totalorder %s13, 0
    %p223 = por %p221, %p222
    %p224 = scmp.ne.s32.totalorder %s213, %s216
    %p225 = scmp.eq.s32.totalorder %s18, 1
    %p226 = por %p224, %p225
    %p227 = scmp.ne.s32.totalorder %s216, %s217
    %p228 = scmp.eq.s32.totalorder %s18, 0
    %p229 = por %p227, %p228
    %p230 = scmp.ne.s32.totalorder %s216, %s217
    %p231 = scmp.eq.s32.totalorder %s19, 1
    %p232 = por %p230, %p231
    %p234 = scmp.ne.s32.totalorder %s217, %s233
    %p235 = scmp.eq.s32.totalorder %s19, 0
    %p236 = por %p234, %p235
    %p237 = scmp.le.s32.totalorder 1, %s13
    %p238 = scmp.lt.s32.totalorder %s13, 3
    %p239 = pnand %p237, %p238
    %p240 = pneg %p239
    // Predicated region
    $region9: #{transformer_forward.26} parent=5 // pred_check
      _
    $region10: #{transformer_forward.26} parent=5 // pred_check_branch
      %242 = sbr.rel (%p239) target = $region12
    $region11: #{transformer_forward.26} parent=5 // pred_region
      %s243 = ssub.s32 %s13, 1
      // Predicated region
      $region13: #{transformer_forward.26} parent=11 // pred_check
        %p244 = pneg %p152
      $region14: #{transformer_forward.26} parent=11 // pred_check_branch
        %246 = sbr.rel (%p244) target = $region16
      $region15: #{transformer_forward.26} parent=11 // pred_region
        _
      $region16: #{transformer_forward.26} parent=11 // pred_fallthru
        _
      // Predicated region
      $region17: #{transformer_forward.26} parent=11 // pred_check
        %p247 = pneg %p173
      $region18: #{transformer_forward.26} parent=11 // pred_check_branch
        %249 = sbr.rel (%p247) target = $region20
      $region19: #{transformer_forward.26} parent=11 // pred_region
        _
      $region20: #{transformer_forward.26} parent=11 // pred_fallthru
        _
    $region12: #{transformer_forward.26} parent=5 // pred_fallthru
      _
    %p250 = scmp.lt.s32.totalorder %s13, 2
    // Predicated region
    $region21: #{transformer_forward.26} parent=5 // pred_check
      %p251 = pneg %p250
    $region22: #{transformer_forward.26} parent=5 // pred_check_branch
      %253 = sbr.rel (%p251) target = $region24
    $region23: #{transformer_forward.26} parent=5 // pred_region
      // Predicated region
      $region25: #{transformer_forward.26} parent=23 // pred_check
        %p254 = pneg %p47
      $region26: #{transformer_forward.26} parent=23 // pred_check_branch
        %256 = sbr.rel (%p254) target = $region28
      $region27: #{transformer_forward.26} parent=23 // pred_region
        %p257 = scmp.lt.s32.totalorder %s20, 1
        %s258 = scalar_select %p257, %s20, 1
        %p259 = scmp.lt.s32.totalorder %s21, 0
        %s260 = scalar_select %p259, %s21, 0
        %s261 = smul.addr %s258, 4
        %s262 = sadd.s32 %s260, %s261
        %s263 = smul.addr %s262, 4
        %s264 = scalar_lea.vmem %s0, %s263
      $region28: #{transformer_forward.26} parent=23 // pred_fallthru
        _
      // Predicated region
      $region29: #{transformer_forward.26} parent=23 // pred_check
        %p265 = pneg %p73
      $region30: #{transformer_forward.26} parent=23 // pred_check_branch
        %267 = sbr.rel (%p265) target = $region32
      $region31: #{transformer_forward.26} parent=23 // pred_region
        %p268 = scmp.lt.s32.totalorder %s20, 1
        %s269 = scalar_select %p268, %s20, 1
        %s270 = smul.addr %s269, 4
        %s271 = smul.addr %s270, 4
        %s272 = scalar_lea.vmem %s1, %s271
      $region32: #{transformer_forward.26} parent=23 // pred_fallthru
        _
      // Predicated region
      $region33: #{transformer_forward.26} parent=23 // pred_check
        %p273 = pneg %p99
      $region34: #{transformer_forward.26} parent=23 // pred_check_branch
        %275 = sbr.rel (%p273) target = $region36
      $region35: #{transformer_forward.26} parent=23 // pred_region
        %p276 = scmp.lt.s32.totalorder %s20, 1
        %s277 = scalar_select %p276, %s20, 1
        %s278 = smul.addr %s277, 4
        %s279 = smul.addr %s278, 4
        %s280 = scalar_lea.vmem %s2, %s279
      $region36: #{transformer_forward.26} parent=23 // pred_fallthru
        _
      // Predicated region
      $region37: #{transformer_forward.26} parent=23 // pred_check
        %p281 = pneg %p125
      $region38: #{transformer_forward.26} parent=23 // pred_check_branch
        %283 = sbr.rel (%p281) target = $region40
      $region39: #{transformer_forward.26} parent=23 // pred_region
        %p284 = scmp.lt.s32.totalorder %s20, 1
        %s285 = scalar_select %p284, %s20, 1
        %s286 = scalar_lea.vmem %s3, %s285
      $region40: #{transformer_forward.26} parent=23 // pred_fallthru
        _
      // Predicated region
      $region41: #{transformer_forward.26} parent=23 // pred_check
        %p287 = pneg %p195
      $region42: #{transformer_forward.26} parent=23 // pred_check_branch
        %289 = sbr.rel (%p287) target = $region44
      $region43: #{transformer_forward.26} parent=23 // pred_region
        %p290 = scmp.lt.s32.totalorder %s20, 1
        %s291 = scalar_select %p290, %s20, 1
        %p292 = scmp.lt.s32.totalorder %s21, 0
        %s293 = scalar_select %p292, %s21, 0
        %s294 = sadd.s32 %s293, %s291
        %s295 = smul.addr %s294, 4
        %s296 = scalar_lea.vmem %s6, %s295
      $region44: #{transformer_forward.26} parent=23 // pred_fallthru
        _
    $region24: #{transformer_forward.26} parent=5 // pred_fallthru
      _
    %p297 = scmp.le.s32.totalorder 1, %s13
    %p298 = scmp.lt.s32.totalorder %s13, 3
    %p299 = pnand %p297, %p298
    %p300 = pneg %p299
    // Predicated region
    $region45: #{transformer_forward.26} parent=5 // pred_check
      _
    $region46: #{transformer_forward.26} parent=5 // pred_check_branch
      %302 = sbr.rel (%p299) target = $region48
    $region47: #{transformer_forward.26} parent=5 // pred_region
      %s303 = ssub.s32 %s13, 1
      %p304 = scmp.lt.s32.totalorder %s22, 1
      %s305 = scalar_select %p304, %s22, 1
      %p306 = scmp.lt.s32.totalorder %s23, 0
      %s307 = scalar_select %p306, %s23, 0
      %s308 = smul.addr %s305, 4
      %s309 = sadd.s32 %s307, %s308
      %s310 = smul.addr %s309, 4
      %s311 = scalar_lea.vmem %s0, %s310
      %p312 = pneg %p53
      %p313 = pneg %p50
      %p314 = scmp.lt.s32.totalorder %s22, 1
      %s315 = scalar_select %p314, %s22, 1
      %s316 = smul.addr %s315, 4
      %s317 = smul.addr %s316, 4
      %s318 = scalar_lea.vmem %s1, %s317
      %p319 = pneg %p79
      %p320 = pneg %p76
      %p321 = scmp.lt.s32.totalorder %s22, 1
      %s322 = scalar_select %p321, %s22, 1
      %s323 = smul.addr %s322, 4
      %s324 = smul.addr %s323, 4
      %s325 = scalar_lea.vmem %s2, %s324
      %p326 = pneg %p105
      %p327 = pneg %p102
      %p328 = scmp.lt.s32.totalorder %s22, 1
      %s329 = scalar_select %p328, %s22, 1
      %s330 = scalar_lea.vmem %s3, %s329
      %p331 = pneg %p131
      %p332 = pneg %p128
      %p333 = pneg %p152
      %p334 = pneg %p149
      %p335 = pneg %p173
      %p336 = pneg %p170
      %p337 = scmp.lt.s32.totalorder %s22, 1
      %s338 = scalar_select %p337, %s22, 1
      %p339 = scmp.lt.s32.totalorder %s23, 0
      %s340 = scalar_select %p339, %s23, 0
      %s341 = sadd.s32 %s340, %s338
      %s342 = smul.addr %s341, 4
      %s343 = scalar_lea.vmem %s6, %s342
      %p344 = pneg %p201
      %p345 = pneg %p198
      %p346 = pneg %p229
      %p347 = pneg %p226
      %p348 = scmp.lt.s32.totalorder %s22, 1
      %s349 = scalar_select %p348, %s22, 1
      %p350 = scmp.lt.s32.totalorder %s23, 0
      %s351 = scalar_select %p350, %s23, 0
      %s352 = sadd.s32 %s351, %s349
      %s353 = smul.addr %s352, 4
      %s354 = scalar_lea.vmem %s7, %s353
      %p355 = scmp.lt.s32.totalorder %s22, 1
      %s356 = scalar_select %p355, %s22, 1
      %p357 = scmp.lt.s32.totalorder %s23, 0
      %s358 = scalar_select %p357, %s23, 0
      %s359 = smul.addr %s356, 4
      %s360 = sadd.s32 %s358, %s359
      %s361 = smul.addr %s360, 4
      %s362 = scalar_lea.vmem %s0, %s361
      %p363 = scmp.lt.s32.totalorder %s22, 1
      %s364 = scalar_select %p363, %s22, 1
      %s365 = smul.addr %s364, 4
      %s366 = smul.addr %s365, 4
      %s367 = scalar_lea.vmem %s1, %s366
      %p368 = scmp.lt.s32.totalorder %s22, 1
      %s369 = scalar_select %p368, %s22, 1
      %s370 = smul.addr %s369, 4
      %s371 = smul.addr %s370, 4
      %s372 = scalar_lea.vmem %s2, %s371
      %p373 = scmp.lt.s32.totalorder %s22, 1
      %s374 = scalar_select %p373, %s22, 1
      %s375 = scalar_lea.vmem %s3, %s374
      %p376 = scmp.lt.s32.totalorder %s22, 1
      %s377 = scalar_select %p376, %s22, 1
      %p378 = scmp.lt.s32.totalorder %s23, 0
      %s379 = scalar_select %p378, %s23, 0
      %s380 = sadd.s32 %s379, %s377
      %s381 = smul.addr %s380, 4
      %s382 = scalar_lea.vmem %s6, %s381
      %p383 = scmp.lt.s32.totalorder %s22, 1
      %s384 = scalar_select %p383, %s22, 1
      %p385 = scmp.lt.s32.totalorder %s23, 0
      %s386 = scalar_select %p385, %s23, 0
      %s387 = sadd.s32 %s386, %s384
      %s388 = smul.addr %s387, 4
      %s389 = scalar_lea.vmem %s7, %s388
      %v391 = vld [vmem:[%s362] sm:$0xf]
      %v392 = vld [vmem:[%s362 + $0x4] sm:$0xf]
      %v393 = vld [vmem:[%s362 + $0x8] sm:$0xf]
      %v394 = vld [vmem:[%s362 + $0xc] sm:$0xf]
      %v395 = vld [vmem:[%s367] sm:$0xf]
      %v396 = vld [vmem:[%s367 + $0x4] sm:$0xf]
      %v397 = vld [vmem:[%s367 + $0x8] sm:$0xf]
      %v398 = vld [vmem:[%s367 + $0xc] sm:$0xf]
      %v399 = vld [vmem:[%s372] sm:$0xf]
      %v400 = vld [vmem:[%s372 + $0x4] sm:$0xf]
      %v401 = vld [vmem:[%s372 + $0x8] sm:$0xf]
      %v402 = vld [vmem:[%s372 + $0xc] sm:$0xf]
      %vm403 = vcmask 64512
      %v405 = vsel %vm403, %v391, 0
      %v408 = vsel %vm403, %v395, 0
      %410 = vmatprep.subr.bf16.mxu0 0
      %411 = vmatpush1.bf16.xpose.msra.mxu0 0
      %412 = vmatprep.subr.bf16.mxu0 0
      %413 = vmatpush1.bf16.xpose.msra.mxu0 0
      %414 = vmatprep.subr.bf16.mxu0 0
      %415 = vmatpush1.bf16.xpose.msra.mxu0 0
      %416 = vmatprep.subr.bf16.mxu0 0
      %417 = vmatpush1.bf16.xpose.msra.mxu0 0
      %418 = vmatprep.subr.bf16.mxu0 0
      %419 = vmatpush1.bf16.xpose.msra.mxu0 0
      %420 = vmatprep.subr.bf16.mxu0 0
      %421 = vmatpush1.bf16.xpose.msra.mxu0 0
      %422 = vmatprep.subr.bf16.mxu0 0
      %423 = vmatpush1.bf16.xpose.msra.mxu0 0
      %424 = vmatprep.subr.bf16.mxu0 0
      %425 = vmatpush1.bf16.xpose.msra.mxu0 %v408
      %426 = vmatprep.subr.bf16.mxu0 0
      %427 = vmatpush2.bf16.xpose.msra.mxu0 0
      %428 = vmatprep.subr.bf16.mxu0 0
      %429 = vmatpush2.bf16.xpose.msra.mxu0 0
      %430 = vmatprep.subr.bf16.mxu0 0
      %431 = vmatpush2.bf16.xpose.msra.mxu0 0
      %432 = vmatprep.subr.bf16.mxu0 0
      %433 = vmatpush2.bf16.xpose.msra.mxu0 0
      %434 = vmatprep.subr.bf16.mxu0 0
      %435 = vmatpush2.bf16.xpose.msra.mxu0 0
      %436 = vmatprep.subr.bf16.mxu0 0
      %437 = vmatpush2.bf16.xpose.msra.mxu0 0
      %438 = vmatprep.subr.bf16.mxu0 0
      %439 = vmatpush2.bf16.xpose.msra.mxu0 0
      %440 = vmatprep.subr.bf16.mxu0 0
      %441 = vmatpush2.bf16.xpose.msra.mxu0 0
      %442 = vmatprep.mubr.bf16.mxu0 0
      %443 = vmatmul.mubr.bf16.gmra.mxu0 %v405
      %v444 = vpop.f32.mrf.mxu0
      %v445 = vadd.f32 0.0, %v444
      %v446 = vpop.f32.mrf.mxu0
      %v447 = vpop.f32.mrf.mxu0
      %v448 = vpop.f32.mrf.mxu0
      %449 = vdwg.mxu0
      %v451 = vsel %vm403, %v392, 0
      %v454 = vsel %vm403, %v396, 0
      %456 = vmatprep.subr.bf16.mxu0 0
      %457 = vmatpush1.bf16.xpose.msra.mxu0 0
      %458 = vmatprep.subr.bf16.mxu0 0
      %459 = vmatpush1.bf16.xpose.msra.mxu0 0
      %460 = vmatprep.subr.bf16.mxu0 0
      %461 = vmatpush1.bf16.xpose.msra.mxu0 0
      %462 = vmatprep.subr.bf16.mxu0 0
      %463 = vmatpush1.bf16.xpose.msra.mxu0 0
      %464 = vmatprep.subr.bf16.mxu0 0
      %465 = vmatpush1.bf16.xpose.msra.mxu0 0
      %466 = vmatprep.subr.bf16.mxu0 0
      %467 = vmatpush1.bf16.xpose.msra.mxu0 0
      %468 = vmatprep.subr.bf16.mxu0 0
      %469 = vmatpush1.bf16.xpose.msra.mxu0 0
      %470 = vmatprep.subr.bf16.mxu0 0
      %471 = vmatpush1.bf16.xpose.msra.mxu0 %v454
      %472 = vmatprep.subr.bf16.mxu0 0
      %473 = vmatpush2.bf16.xpose.msra.mxu0 0
      %474 = vmatprep.subr.bf16.mxu0 0
      %475 = vmatpush2.bf16.xpose.msra.mxu0 0
      %476 = vmatprep.subr.bf16.mxu0 0
      %477 = vmatpush2.bf16.xpose.msra.mxu0 0
      %478 = vmatprep.subr.bf16.mxu0 0
      %479 = vmatpush2.bf16.xpose.msra.mxu0 0
      %480 = vmatprep.subr.bf16.mxu0 0
      %481 = vmatpush2.bf16.xpose.msra.mxu0 0
      %482 = vmatprep.subr.bf16.mxu0 0
      %483 = vmatpush2.bf16.xpose.msra.mxu0 0
      %484 = vmatprep.subr.bf16.mxu0 0
      %485 = vmatpush2.bf16.xpose.msra.mxu0 0
      %486 = vmatprep.subr.bf16.mxu0 0
      %487 = vmatpush2.bf16.xpose.msra.mxu0 0
      %488 = vmatprep.mubr.bf16.mxu0 0
      %489 = vmatmul.mubr.bf16.gmra.mxu0 %v451
      %v490 = vpop.f32.mrf.mxu0
      %v491 = vadd.f32 0.0, %v490
      %v492 = vpop.f32.mrf.mxu0
      %v493 = vpop.f32.mrf.mxu0
      %v494 = vpop.f32.mrf.mxu0
      %495 = vdwg.mxu0
      %v497 = vsel %vm403, %v393, 0
      %v500 = vsel %vm403, %v397, 0
      %502 = vmatprep.subr.bf16.mxu0 0
      %503 = vmatpush1.bf16.xpose.msra.mxu0 0
      %504 = vmatprep.subr.bf16.mxu0 0
      %505 = vmatpush1.bf16.xpose.msra.mxu0 0
      %506 = vmatprep.subr.bf16.mxu0 0
      %507 = vmatpush1.bf16.xpose.msra.mxu0 0
      %508 = vmatprep.subr.bf16.mxu0 0
      %509 = vmatpush1.bf16.xpose.msra.mxu0 0
      %510 = vmatprep.subr.bf16.mxu0 0
      %511 = vmatpush1.bf16.xpose.msra.mxu0 0
      %512 = vmatprep.subr.bf16.mxu0 0
      %513 = vmatpush1.bf16.xpose.msra.mxu0 0
      %514 = vmatprep.subr.bf16.mxu0 0
      %515 = vmatpush1.bf16.xpose.msra.mxu0 0
      %516 = vmatprep.subr.bf16.mxu0 0
      %517 = vmatpush1.bf16.xpose.msra.mxu0 %v500
      %518 = vmatprep.subr.bf16.mxu0 0
      %519 = vmatpush2.bf16.xpose.msra.mxu0 0
      %520 = vmatprep.subr.bf16.mxu0 0
      %521 = vmatpush2.bf16.xpose.msra.mxu0 0
      %522 = vmatprep.subr.bf16.mxu0 0
      %523 = vmatpush2.bf16.xpose.msra.mxu0 0
      %524 = vmatprep.subr.bf16.mxu0 0
      %525 = vmatpush2.bf16.xpose.msra.mxu0 0
      %526 = vmatprep.subr.bf16.mxu0 0
      %527 = vmatpush2.bf16.xpose.msra.mxu0 0
      %528 = vmatprep.subr.bf16.mxu0 0
      %529 = vmatpush2.bf16.xpose.msra.mxu0 0
      %530 = vmatprep.subr.bf16.mxu0 0
      %531 = vmatpush2.bf16.xpose.msra.mxu0 0
      %532 = vmatprep.subr.bf16.mxu0 0
      %533 = vmatpush2.bf16.xpose.msra.mxu0 0
      %534 = vmatprep.mubr.bf16.mxu0 0
      %535 = vmatmul.mubr.bf16.gmra.mxu0 %v497
      %v536 = vpop.f32.mrf.mxu0
      %v537 = vadd.f32 0.0, %v536
      %v538 = vpop.f32.mrf.mxu0
      %v539 = vpop.f32.mrf.mxu0
      %v540 = vpop.f32.mrf.mxu0
      %541 = vdwg.mxu0
      %v543 = vsel %vm403, %v394, 0
      %v546 = vsel %vm403, %v398, 0
      %548 = vmatprep.subr.bf16.mxu0 0
      %549 = vmatpush1.bf16.xpose.msra.mxu0 0
      %550 = vmatprep.subr.bf16.mxu0 0
      %551 = vmatpush1.bf16.xpose.msra.mxu0 0
      %552 = vmatprep.subr.bf16.mxu0 0
      %553 = vmatpush1.bf16.xpose.msra.mxu0 0
      %554 = vmatprep.subr.bf16.mxu0 0
      %555 = vmatpush1.bf16.xpose.msra.mxu0 0
      %556 = vmatprep.subr.bf16.mxu0 0
      %557 = vmatpush1.bf16.xpose.msra.mxu0 0
      %558 = vmatprep.subr.bf16.mxu0 0
      %559 = vmatpush1.bf16.xpose.msra.mxu0 0
      %560 = vmatprep.subr.bf16.mxu0 0
      %561 = vmatpush1.bf16.xpose.msra.mxu0 0
      %562 = vmatprep.subr.bf16.mxu0 0
      %563 = vmatpush1.bf16.xpose.msra.mxu0 %v546
      %564 = vmatprep.subr.bf16.mxu0 0
      %565 = vmatpush2.bf16.xpose.msra.mxu0 0
      %566 = vmatprep.subr.bf16.mxu0 0
      %567 = vmatpush2.bf16.xpose.msra.mxu0 0
      %568 = vmatprep.subr.bf16.mxu0 0
      %569 = vmatpush2.bf16.xpose.msra.mxu0 0
      %570 = vmatprep.subr.bf16.mxu0 0
      %571 = vmatpush2.bf16.xpose.msra.mxu0 0
      %572 = vmatprep.subr.bf16.mxu0 0
      %573 = vmatpush2.bf16.xpose.msra.mxu0 0
      %574 = vmatprep.subr.bf16.mxu0 0
      %575 = vmatpush2.bf16.xpose.msra.mxu0 0
      %576 = vmatprep.subr.bf16.mxu0 0
      %577 = vmatpush2.bf16.xpose.msra.mxu0 0
      %578 = vmatprep.subr.bf16.mxu0 0
      %579 = vmatpush2.bf16.xpose.msra.mxu0 0
      %580 = vmatprep.mubr.bf16.mxu0 0
      %581 = vmatmul.mubr.bf16.gmra.mxu0 %v543
      %v582 = vpop.f32.mrf.mxu0
      %v583 = vadd.f32 0.0, %v582
      %v584 = vpop.f32.mrf.mxu0
      %v585 = vpop.f32.mrf.mxu0
      %v586 = vpop.f32.mrf.mxu0
      %587 = vdwg.mxu0
      %v588 = vld [vmem:[%s375] sm:$0x1]
      %vm589 = vcmp.eq.s32.totalorder %v588, 0
      %v590 = vsel %vm589, 1, 0
      %v591 = vlaneseq
      %v592 = vshrl.u32 %v591, 7
      %v593 = vsub.s32 0, %v592
      %v594 = vrot.slane %v590, %v593
      %vm595 = vcmp.eq.s32.totalorder %v594, 1
      %v596 = vsel %vm595, -1e+09, %v445
      %v597 = vsel %vm595, -1e+09, %v491
      %v598 = vsel %vm595, -1e+09, %v537
      %v599 = vsel %vm595, -1e+09, %v583
      %v600 = vsel %vm403, %v596, -inf
      %601 = vmax.xlane.f32.xlu0 %v600
      %v602 = vpop.xlane.xlu0 %601
      %v603 = vsel %vm403, %v597, -inf
      %604 = vmax.xlane.f32.xlu0 %v603
      %v605 = vpop.xlane.xlu0 %604
      %v606 = vsel %vm403, %v598, -inf
      %607 = vmax.xlane.f32.xlu0 %v606
      %v608 = vpop.xlane.xlu0 %607
      %v609 = vsel %vm403, %v599, -inf
      %610 = vmax.xlane.f32.xlu0 %v609
      %v611 = vpop.xlane.xlu0 %610
      %v612 = vsub.f32 %v596, %v602
      %v613 = vsub.f32 %v597, %v605
      %v614 = vsub.f32 %v598, %v608
      %v615 = vsub.f32 %v599, %v611
      %v616 = vmul.f32 %v612, 1.442695
      %v617 = vpow.pop %v616
      %v618 = vmul.f32 %v613, 1.442695
      %v619 = vpow.pop %v618
      %v620 = vmul.f32 %v614, 1.442695
      %v621 = vpow.pop %v620
      %v622 = vmul.f32 %v615, 1.442695
      %v623 = vpow.pop %v622
      %v624 = vsel %vm403, %v617, 0.0
      %625 = vadd.xlane.f32.xlu0 %v624
      %v626 = vpop.xlane.xlu0 %625
      %v627 = vsel %vm403, %v619, 0.0
      %628 = vadd.xlane.f32.xlu0 %v627
      %v629 = vpop.xlane.xlu0 %628
      %v630 = vsel %vm403, %v621, 0.0
      %631 = vadd.xlane.f32.xlu0 %v630
      %v632 = vpop.xlane.xlu0 %631
      %v633 = vsel %vm403, %v623, 0.0
      %634 = vadd.xlane.f32.xlu0 %v633
      %v635 = vpop.xlane.xlu0 %634
      %v636 = vrcp.pop %v626
      %v637 = vrcp.pop %v629
      %v638 = vrcp.pop %v632
      %v639 = vrcp.pop %v635
      %v640 = vmul.f32 %v617, %v636
      %v641 = vmul.f32 %v619, %v637
      %v642 = vmul.f32 %v621, %v638
      %v643 = vmul.f32 %v623, %v639
      %v644 = vpack.c.bf16 %v640, %v640
      %v645 = vpack.c.bf16 %v641, %v641
      %v646 = vpack.c.bf16 %v642, %v642
      %v647 = vpack.c.bf16 %v643, %v643
      %v649 = vsel %vm403, %v644, 0
      %vm651 = vcmask 1043456
      %v653 = vsel %vm651, %v399, 0
      %655 = vmatprep.subr.bf16.mxu0 0
      %656 = vmatpush1.bf16.msra.mxu0 0
      %657 = vmatprep.subr.bf16.mxu0 0
      %658 = vmatpush1.bf16.msra.mxu0 0
      %659 = vmatprep.subr.bf16.mxu0 0
      %660 = vmatpush1.bf16.msra.mxu0 0
      %661 = vmatprep.subr.bf16.mxu0 0
      %662 = vmatpush1.bf16.msra.mxu0 0
      %663 = vmatprep.subr.bf16.mxu0 0
      %664 = vmatpush1.bf16.msra.mxu0 0
      %665 = vmatprep.subr.bf16.mxu0 0
      %666 = vmatpush1.bf16.msra.mxu0 0
      %667 = vmatprep.subr.bf16.mxu0 0
      %668 = vmatpush1.bf16.msra.mxu0 0
      %669 = vmatprep.subr.bf16.mxu0 0
      %670 = vmatpush1.bf16.msra.mxu0 %v653
      %671 = vmatprep.subr.bf16.mxu0 0
      %672 = vmatpush2.bf16.msra.mxu0 0
      %673 = vmatprep.subr.bf16.mxu0 0
      %674 = vmatpush2.bf16.msra.mxu0 0
      %675 = vmatprep.subr.bf16.mxu0 0
      %676 = vmatpush2.bf16.msra.mxu0 0
      %677 = vmatprep.subr.bf16.mxu0 0
      %678 = vmatpush2.bf16.msra.mxu0 0
      %679 = vmatprep.subr.bf16.mxu0 0
      %680 = vmatpush2.bf16.msra.mxu0 0
      %681 = vmatprep.subr.bf16.mxu0 0
      %682 = vmatpush2.bf16.msra.mxu0 0
      %683 = vmatprep.subr.bf16.mxu0 0
      %684 = vmatpush2.bf16.msra.mxu0 0
      %685 = vmatprep.subr.bf16.mxu0 0
      %686 = vmatpush2.bf16.msra.mxu0 0
      %687 = vmatprep.mubr.bf16.mxu0 0
      %688 = vmatmul.mubr.bf16.gmra.mxu0 %v649
      %v689 = vpop.f32.mrf.mxu0
      %v690 = vadd.f32 0.0, %v689
      %v691 = vpop.f32.mrf.mxu0
      %v692 = vpop.f32.mrf.mxu0
      %v693 = vpop.f32.mrf.mxu0
      %694 = vdwg.mxu0
      %v696 = vsel %vm403, %v645, 0
      %v699 = vsel %vm651, %v400, 0
      %701 = vmatprep.subr.bf16.mxu0 0
      %702 = vmatpush1.bf16.msra.mxu0 0
      %703 = vmatprep.subr.bf16.mxu0 0
      %704 = vmatpush1.bf16.msra.mxu0 0
      %705 = vmatprep.subr.bf16.mxu0 0
      %706 = vmatpush1.bf16.msra.mxu0 0
      %707 = vmatprep.subr.bf16.mxu0 0
      %708 = vmatpush1.bf16.msra.mxu0 0
      %709 = vmatprep.subr.bf16.mxu0 0
      %710 = vmatpush1.bf16.msra.mxu0 0
      %711 = vmatprep.subr.bf16.mxu0 0
      %712 = vmatpush1.bf16.msra.mxu0 0
      %713 = vmatprep.subr.bf16.mxu0 0
      %714 = vmatpush1.bf16.msra.mxu0 0
      %715 = vmatprep.subr.bf16.mxu0 0
      %716 = vmatpush1.bf16.msra.mxu0 %v699
      %717 = vmatprep.subr.bf16.mxu0 0
      %718 = vmatpush2.bf16.msra.mxu0 0
      %719 = vmatprep.subr.bf16.mxu0 0
      %720 = vmatpush2.bf16.msra.mxu0 0
      %721 = vmatprep.subr.bf16.mxu0 0
      %722 = vmatpush2.bf16.msra.mxu0 0
      %723 = vmatprep.subr.bf16.mxu0 0
      %724 = vmatpush2.bf16.msra.mxu0 0
      %725 = vmatprep.subr.bf16.mxu0 0
      %726 = vmatpush2.bf16.msra.mxu0 0
      %727 = vmatprep.subr.bf16.mxu0 0
      %728 = vmatpush2.bf16.msra.mxu0 0
      %729 = vmatprep.subr.bf16.mxu0 0
      %730 = vmatpush2.bf16.msra.mxu0 0
      %731 = vmatprep.subr.bf16.mxu0 0
      %732 = vmatpush2.bf16.msra.mxu0 0
      %733 = vmatprep.mubr.bf16.mxu0 0
      %734 = vmatmul.mubr.bf16.gmra.mxu0 %v696
      %v735 = vpop.f32.mrf.mxu0
      %v736 = vadd.f32 0.0, %v735
      %v737 = vpop.f32.mrf.mxu0
      %v738 = vpop.f32.mrf.mxu0
      %v739 = vpop.f32.mrf.mxu0
      %740 = vdwg.mxu0
      %v742 = vsel %vm403, %v646, 0
      %v745 = vsel %vm651, %v401, 0
      %747 = vmatprep.subr.bf16.mxu0 0
      %748 = vmatpush1.bf16.msra.mxu0 0
      %749 = vmatprep.subr.bf16.mxu0 0
      %750 = vmatpush1.bf16.msra.mxu0 0
      %751 = vmatprep.subr.bf16.mxu0 0
      %752 = vmatpush1.bf16.msra.mxu0 0
      %753 = vmatprep.subr.bf16.mxu0 0
      %754 = vmatpush1.bf16.msra.mxu0 0
      %755 = vmatprep.subr.bf16.mxu0 0
      %756 = vmatpush1.bf16.msra.mxu0 0
      %757 = vmatprep.subr.bf16.mxu0 0
      %758 = vmatpush1.bf16.msra.mxu0 0
      %759 = vmatprep.subr.bf16.mxu0 0
      %760 = vmatpush1.bf16.msra.mxu0 0
      %761 = vmatprep.subr.bf16.mxu0 0
      %762 = vmatpush1.bf16.msra.mxu0 %v745
      %763 = vmatprep.subr.bf16.mxu0 0
      %764 = vmatpush2.bf16.msra.mxu0 0
      %765 = vmatprep.subr.bf16.mxu0 0
      %766 = vmatpush2.bf16.msra.mxu0 0
      %767 = vmatprep.subr.bf16.mxu0 0
      %768 = vmatpush2.bf16.msra.mxu0 0
      %769 = vmatprep.subr.bf16.mxu0 0
      %770 = vmatpush2.bf16.msra.mxu0 0
      %771 = vmatprep.subr.bf16.mxu0 0
      %772 = vmatpush2.bf16.msra.mxu0 0
      %773 = vmatprep.subr.bf16.mxu0 0
      %774 = vmatpush2.bf16.msra.mxu0 0
      %775 = vmatprep.subr.bf16.mxu0 0
      %776 = vmatpush2.bf16.msra.mxu0 0
      %777 = vmatprep.subr.bf16.mxu0 0
      %778 = vmatpush2.bf16.msra.mxu0 0
      %779 = vmatprep.mubr.bf16.mxu0 0
      %780 = vmatmul.mubr.bf16.gmra.mxu0 %v742
      %v781 = vpop.f32.mrf.mxu0
      %v782 = vadd.f32 0.0, %v781
      %v783 = vpop.f32.mrf.mxu0
      %v784 = vpop.f32.mrf.mxu0
      %v785 = vpop.f32.mrf.mxu0
      %786 = vdwg.mxu0
      %v788 = vsel %vm403, %v647, 0
      %v791 = vsel %vm651, %v402, 0
      %793 = vmatprep.subr.bf16.mxu0 0
      %794 = vmatpush1.bf16.msra.mxu0 0
      %795 = vmatprep.subr.bf16.mxu0 0
      %796 = vmatpush1.bf16.msra.mxu0 0
      %797 = vmatprep.subr.bf16.mxu0 0
      %798 = vmatpush1.bf16.msra.mxu0 0
      %799 = vmatprep.subr.bf16.mxu0 0
      %800 = vmatpush1.bf16.msra.mxu0 0
      %801 = vmatprep.subr.bf16.mxu0 0
      %802 = vmatpush1.bf16.msra.mxu0 0
      %803 = vmatprep.subr.bf16.mxu0 0
      %804 = vmatpush1.bf16.msra.mxu0 0
      %805 = vmatprep.subr.bf16.mxu0 0
      %806 = vmatpush1.bf16.msra.mxu0 0
      %807 = vmatprep.subr.bf16.mxu0 0
      %808 = vmatpush1.bf16.msra.mxu0 %v791
      %809 = vmatprep.subr.bf16.mxu0 0
      %810 = vmatpush2.bf16.msra.mxu0 0
      %811 = vmatprep.subr.bf16.mxu0 0
      %812 = vmatpush2.bf16.msra.mxu0 0
      %813 = vmatprep.subr.bf16.mxu0 0
      %814 = vmatpush2.bf16.msra.mxu0 0
      %815 = vmatprep.subr.bf16.mxu0 0
      %816 = vmatpush2.bf16.msra.mxu0 0
      %817 = vmatprep.subr.bf16.mxu0 0
      %818 = vmatpush2.bf16.msra.mxu0 0
      %819 = vmatprep.subr.bf16.mxu0 0
      %820 = vmatpush2.bf16.msra.mxu0 0
      %821 = vmatprep.subr.bf16.mxu0 0
      %822 = vmatpush2.bf16.msra.mxu0 0
      %823 = vmatprep.subr.bf16.mxu0 0
      %824 = vmatpush2.bf16.msra.mxu0 0
      %825 = vmatprep.mubr.bf16.mxu0 0
      %826 = vmatmul.mubr.bf16.gmra.mxu0 %v788
      %v827 = vpop.f32.mrf.mxu0
      %v828 = vadd.f32 0.0, %v827
      %v829 = vpop.f32.mrf.mxu0
      %v830 = vpop.f32.mrf.mxu0
      %v831 = vpop.f32.mrf.mxu0
      %832 = vdwg.mxu0
      %v833 = vld [vmem:[%s382] sm:$0xf]
      %v834 = vunpack.c.l.bf16 %v833
      %v835 = vld [vmem:[%s5] sm:$0x1]
      %v837 = vlaneseq
      %v838 = vshrl.u32 %v837, 7
      %v839 = vsub.s32 0, %v838
      %v840 = vrot.slane %v835, %v839
      %v842 = vadd.f32 %v834, %v840
      %v843 = vpack.c.bf16 %v690, %v690
      %v844 = vld [vmem:[%s4] sm:$0xf]
      %v846 = vsel %vm403, %v843, 0
      %v849 = vsel %vm651, %v844, 0
      %851 = vmatprep.subr.bf16.mxu0 0
      %852 = vmatpush1.bf16.msra.mxu0 0
      %853 = vmatprep.subr.bf16.mxu0 0
      %854 = vmatpush1.bf16.msra.mxu0 0
      %855 = vmatprep.subr.bf16.mxu0 0
      %856 = vmatpush1.bf16.msra.mxu0 0
      %857 = vmatprep.subr.bf16.mxu0 0
      %858 = vmatpush1.bf16.msra.mxu0 0
      %859 = vmatprep.subr.bf16.mxu0 0
      %860 = vmatpush1.bf16.msra.mxu0 0
      %861 = vmatprep.subr.bf16.mxu0 0
      %862 = vmatpush1.bf16.msra.mxu0 0
      %863 = vmatprep.subr.bf16.mxu0 0
      %864 = vmatpush1.bf16.msra.mxu0 0
      %865 = vmatprep.subr.bf16.mxu0 0
      %866 = vmatpush1.bf16.msra.mxu0 %v849
      %867 = vmatprep.subr.bf16.mxu0 0
      %868 = vmatpush2.bf16.msra.mxu0 0
      %869 = vmatprep.subr.bf16.mxu0 0
      %870 = vmatpush2.bf16.msra.mxu0 0
      %871 = vmatprep.subr.bf16.mxu0 0
      %872 = vmatpush2.bf16.msra.mxu0 0
      %873 = vmatprep.subr.bf16.mxu0 0
      %874 = vmatpush2.bf16.msra.mxu0 0
      %875 = vmatprep.subr.bf16.mxu0 0
      %876 = vmatpush2.bf16.msra.mxu0 0
      %877 = vmatprep.subr.bf16.mxu0 0
      %878 = vmatpush2.bf16.msra.mxu0 0
      %879 = vmatprep.subr.bf16.mxu0 0
      %880 = vmatpush2.bf16.msra.mxu0 0
      %881 = vmatprep.subr.bf16.mxu0 0
      %882 = vmatpush2.bf16.msra.mxu0 0
      %883 = vmatprep.mubr.bf16.mxu0 0
      %884 = vmatmul.mubr.bf16.gmra.mxu0 %v846
      %v885 = vpop.f32.mrf.mxu0
      %v886 = vadd.f32 0.0, %v885
      %v887 = vpop.f32.mrf.mxu0
      %v888 = vpop.f32.mrf.mxu0
      %v889 = vpop.f32.mrf.mxu0
      %890 = vdwg.mxu0
      %v891 = vadd.f32 %v842, %v886
      %v892 = vpack.c.bf16 %v736, %v736
      %v893 = vld [vmem:[%s4 + $0x4] sm:$0xf]
      %v895 = vsel %vm403, %v892, 0
      %v898 = vsel %vm651, %v893, 0
      %900 = vmatprep.subr.bf16.mxu0 0
      %901 = vmatpush1.bf16.msra.mxu0 0
      %902 = vmatprep.subr.bf16.mxu0 0
      %903 = vmatpush1.bf16.msra.mxu0 0
      %904 = vmatprep.subr.bf16.mxu0 0
      %905 = vmatpush1.bf16.msra.mxu0 0
      %906 = vmatprep.subr.bf16.mxu0 0
      %907 = vmatpush1.bf16.msra.mxu0 0
      %908 = vmatprep.subr.bf16.mxu0 0
      %909 = vmatpush1.bf16.msra.mxu0 0
      %910 = vmatprep.subr.bf16.mxu0 0
      %911 = vmatpush1.bf16.msra.mxu0 0
      %912 = vmatprep.subr.bf16.mxu0 0
      %913 = vmatpush1.bf16.msra.mxu0 0
      %914 = vmatprep.subr.bf16.mxu0 0
      %915 = vmatpush1.bf16.msra.mxu0 %v898
      %916 = vmatprep.subr.bf16.mxu0 0
      %917 = vmatpush2.bf16.msra.mxu0 0
      %918 = vmatprep.subr.bf16.mxu0 0
      %919 = vmatpush2.bf16.msra.mxu0 0
      %920 = vmatprep.subr.bf16.mxu0 0
      %921 = vmatpush2.bf16.msra.mxu0 0
      %922 = vmatprep.subr.bf16.mxu0 0
      %923 = vmatpush2.bf16.msra.mxu0 0
      %924 = vmatprep.subr.bf16.mxu0 0
      %925 = vmatpush2.bf16.msra.mxu0 0
      %926 = vmatprep.subr.bf16.mxu0 0
      %927 = vmatpush2.bf16.msra.mxu0 0
      %928 = vmatprep.subr.bf16.mxu0 0
      %929 = vmatpush2.bf16.msra.mxu0 0
      %930 = vmatprep.subr.bf16.mxu0 0
      %931 = vmatpush2.bf16.msra.mxu0 0
      %932 = vmatprep.mubr.bf16.mxu0 0
      %933 = vmatmul.mubr.bf16.gmra.mxu0 %v895
      %v934 = vpop.f32.mrf.mxu0
      %v935 = vadd.f32 0.0, %v934
      %v936 = vpop.f32.mrf.mxu0
      %v937 = vpop.f32.mrf.mxu0
      %v938 = vpop.f32.mrf.mxu0
      %939 = vdwg.mxu0
      %v940 = vadd.f32 %v891, %v935
      %v941 = vpack.c.bf16 %v782, %v782
      %v942 = vld [vmem:[%s4 + $0x8] sm:$0xf]
      %v944 = vsel %vm403, %v941, 0
      %v947 = vsel %vm651, %v942, 0
      %949 = vmatprep.subr.bf16.mxu0 0
      %950 = vmatpush1.bf16.msra.mxu0 0
      %951 = vmatprep.subr.bf16.mxu0 0
      %952 = vmatpush1.bf16.msra.mxu0 0
      %953 = vmatprep.subr.bf16.mxu0 0
      %954 = vmatpush1.bf16.msra.mxu0 0
      %955 = vmatprep.subr.bf16.mxu0 0
      %956 = vmatpush1.bf16.msra.mxu0 0
      %957 = vmatprep.subr.bf16.mxu0 0
      %958 = vmatpush1.bf16.msra.mxu0 0
      %959 = vmatprep.subr.bf16.mxu0 0
      %960 = vmatpush1.bf16.msra.mxu0 0
      %961 = vmatprep.subr.bf16.mxu0 0
      %962 = vmatpush1.bf16.msra.mxu0 0
      %963 = vmatprep.subr.bf16.mxu0 0
      %964 = vmatpush1.bf16.msra.mxu0 %v947
      %965 = vmatprep.subr.bf16.mxu0 0
      %966 = vmatpush2.bf16.msra.mxu0 0
      %967 = vmatprep.subr.bf16.mxu0 0
      %968 = vmatpush2.bf16.msra.mxu0 0
      %969 = vmatprep.subr.bf16.mxu0 0
      %970 = vmatpush2.bf16.msra.mxu0 0
      %971 = vmatprep.subr.bf16.mxu0 0
      %972 = vmatpush2.bf16.msra.mxu0 0
      %973 = vmatprep.subr.bf16.mxu0 0
      %974 = vmatpush2.bf16.msra.mxu0 0
      %975 = vmatprep.subr.bf16.mxu0 0
      %976 = vmatpush2.bf16.msra.mxu0 0
      %977 = vmatprep.subr.bf16.mxu0 0
      %978 = vmatpush2.bf16.msra.mxu0 0
      %979 = vmatprep.subr.bf16.mxu0 0
      %980 = vmatpush2.bf16.msra.mxu0 0
      %981 = vmatprep.mubr.bf16.mxu0 0
      %982 = vmatmul.mubr.bf16.gmra.mxu0 %v944
      %v983 = vpop.f32.mrf.mxu0
      %v984 = vadd.f32 0.0, %v983
      %v985 = vpop.f32.mrf.mxu0
      %v986 = vpop.f32.mrf.mxu0
      %v987 = vpop.f32.mrf.mxu0
      %988 = vdwg.mxu0
      %v989 = vadd.f32 %v940, %v984
      %v990 = vpack.c.bf16 %v828, %v828
      %v991 = vld [vmem:[%s4 + $0xc] sm:$0xf]
      %v993 = vsel %vm403, %v990, 0
      %v996 = vsel %vm651, %v991, 0
      %998 = vmatprep.subr.bf16.mxu0 0
      %999 = vmatpush1.bf16.msra.mxu0 0
      %1000 = vmatprep.subr.bf16.mxu0 0
      %1001 = vmatpush1.bf16.msra.mxu0 0
      %1002 = vmatprep.subr.bf16.mxu0 0
      %1003 = vmatpush1.bf16.msra.mxu0 0
      %1004 = vmatprep.subr.bf16.mxu0 0
      %1005 = vmatpush1.bf16.msra.mxu0 0
      %1006 = vmatprep.subr.bf16.mxu0 0
      %1007 = vmatpush1.bf16.msra.mxu0 0
      %1008 = vmatprep.subr.bf16.mxu0 0
      %1009 = vmatpush1.bf16.msra.mxu0 0
      %1010 = vmatprep.subr.bf16.mxu0 0
      %1011 = vmatpush1.bf16.msra.mxu0 0
      %1012 = vmatprep.subr.bf16.mxu0 0
      %1013 = vmatpush1.bf16.msra.mxu0 %v996
      %1014 = vmatprep.subr.bf16.mxu0 0
      %1015 = vmatpush2.bf16.msra.mxu0 0
      %1016 = vmatprep.subr.bf16.mxu0 0
      %1017 = vmatpush2.bf16.msra.mxu0 0
      %1018 = vmatprep.subr.bf16.mxu0 0
      %1019 = vmatpush2.bf16.msra.mxu0 0
      %1020 = vmatprep.subr.bf16.mxu0 0
      %1021 = vmatpush2.bf16.msra.mxu0 0
      %1022 = vmatprep.subr.bf16.mxu0 0
      %1023 = vmatpush2.bf16.msra.mxu0 0
      %1024 = vmatprep.subr.bf16.mxu0 0
      %1025 = vmatpush2.bf16.msra.mxu0 0
      %1026 = vmatprep.subr.bf16.mxu0 0
      %1027 = vmatpush2.bf16.msra.mxu0 0
      %1028 = vmatprep.subr.bf16.mxu0 0
      %1029 = vmatpush2.bf16.msra.mxu0 0
      %1030 = vmatprep.mubr.bf16.mxu0 0
      %1031 = vmatmul.mubr.bf16.gmra.mxu0 %v993
      %v1032 = vpop.f32.mrf.mxu0
      %v1033 = vadd.f32 0.0, %v1032
      %v1034 = vpop.f32.mrf.mxu0
      %v1035 = vpop.f32.mrf.mxu0
      %v1036 = vpop.f32.mrf.mxu0
      %1037 = vdwg.mxu0
      %v1038 = vadd.f32 %v989, %v1033
      %v1039 = vpack.c.bf16 %v1038, %v1038
      %vm1040 = vcmask 257024
      %1041 = vst.msk [vmem:[%s389] sm:$0xf] %vm1040, %v1039
      %p1042 = scmp.lt.s32.totalorder %s22, 1
      %s1043 = scalar_select %p1042, %s22, 1
      %p1044 = scmp.lt.s32.totalorder %s23, 0
      %s1045 = scalar_select %p1044, %s23, 0
      %s1046 = sadd.s32 %s1045, %s1043
      %s1047 = smul.addr %s1046, 4
      %s1048 = scalar_lea.vmem %s7, %s1047
      // Predicated region
      $region49: #{transformer_forward.26} parent=47 // pred_check
        %p1049 = pneg %p226
      $region50: #{transformer_forward.26} parent=47 // pred_check_branch
        %1051 = sbr.rel (%p1049) target = $region52
      $region51: #{transformer_forward.26} parent=47 // pred_region
        _
      $region52: #{transformer_forward.26} parent=47 // pred_fallthru
        _
    $region48: #{transformer_forward.26} parent=5 // pred_fallthru
      _
    %p1052 = scmp.le.s32.totalorder 2, %s13
    // Predicated region
    $region53: #{transformer_forward.26} parent=5 // pred_check
      %p1053 = pneg %p1052
    $region54: #{transformer_forward.26} parent=5 // pred_check_branch
      %1055 = sbr.rel (%p1053) target = $region56
    $region55: #{transformer_forward.26} parent=5 // pred_region
      %s1056 = ssub.s32 %s13, 2
      // Predicated region
      $region57: #{transformer_forward.26} parent=55 // pred_check
        %p1057 = pneg %p232
      $region58: #{transformer_forward.26} parent=55 // pred_check_branch
        %1059 = sbr.rel (%p1057) target = $region60
      $region59: #{transformer_forward.26} parent=55 // pred_region
        %p1060 = scmp.lt.s32.totalorder %s24, 1
        %s1061 = scalar_select %p1060, %s24, 1
        %p1062 = scmp.lt.s32.totalorder %s25, 0
        %s1063 = scalar_select %p1062, %s25, 0
        %s1064 = sadd.s32 %s1063, %s1061
        %s1065 = smul.addr %s1064, 4
        %s1066 = scalar_lea.vmem %s7, %s1065
      $region60: #{transformer_forward.26} parent=55 // pred_fallthru
        _
    $region56: #{transformer_forward.26} parent=5 // pred_fallthru
      _
  $region6: #{transformer_forward.26} parent=0 // loop_footer
    %s17 = sadd.s32 1, %s13
  $region7: #{transformer_forward.26} parent=0 // loop_footer_branch
    %12 = sbr.rel target = $region3
  $region8: #{transformer_forward.26} parent=0 // loop_exit
    _

// kernel: transformer_forward.37
$region0: #{transformer_forward.37}
  #allocation0 [shape = 'u32[]', space=smem, size = 0x4, offset = 0x4, fixed_abs, tag = 'smem constant byte address 0x4 - core index']
  #allocation1 [shape = 'u32[144,128]{1,0:T(1,128)}', space=vmem, size = 0x12000, scoped, tag = 'internal scratch']
  #allocation2 [shape = 'f32[16,64]{1,0:T(8,128)}', space=vmem, size = 0x2000, scoped, tag = 'scratch operand']
  %s0 = inlined_call_operand.vmem [shape: bf16[16,32], index: 0, kind: input, shape index: {}]
  %s1 = inlined_call_operand.vmem [shape: bf16[32,64], index: 1, kind: input, shape index: {}]
  %s2 = inlined_call_operand.vmem [shape: f32[1,64], index: 2, kind: input, shape index: {}]
  %s3 = inlined_call_operand.vmem [shape: bf16[16,64], index: 3, kind: output, shape index: {}]
  %s4 = sld [smem:[#allocation0]]
  $region30: #{transformer_forward.37} parent=0
    _
  %s6 = ssub.s32 1, %s4
  %s7 = scalar_select 0, %s6, %s4
  // Predicated region
  $region2: #{transformer_forward.37} parent=0 // pred_check
    _
  $region3: #{transformer_forward.37} parent=0 // pred_check_branch
    %9 = sbr.rel (0) target = $region5
  $region4: #{transformer_forward.37} parent=0 // pred_region
    _
  $region5: #{transformer_forward.37} parent=0 // pred_fallthru
    _
  // Predicated region
  $region6: #{transformer_forward.37} parent=0 // pred_check
    _
  $region7: #{transformer_forward.37} parent=0 // pred_check_branch
    %11 = sbr.rel (0) target = $region9
  $region8: #{transformer_forward.37} parent=0 // pred_region
    _
  $region9: #{transformer_forward.37} parent=0 // pred_fallthru
    _
  // Predicated region
  $region10: #{transformer_forward.37} parent=0 // pred_check
    _
  $region11: #{transformer_forward.37} parent=0 // pred_check_branch
    %13 = sbr.rel (0) target = $region13
  $region12: #{transformer_forward.37} parent=0 // pred_region
    _
  $region13: #{transformer_forward.37} parent=0 // pred_fallthru
    _
  %p15 = scmp.eq.s32.totalorder 0, 0
  // Predicated region
  $region14: #{transformer_forward.37} parent=0 // pred_check
    %p16 = pneg %p15
  $region15: #{transformer_forward.37} parent=0 // pred_check_branch
    %18 = sbr.rel (%p16) target = $region17
  $region16: #{transformer_forward.37} parent=0 // pred_region
    %vm19 = vcmask 523264
    %20 = vst.msk [vmem:[#allocation2] sm:$0xff] %vm19, 0.0
    %21 = vst.msk [vmem:[#allocation2 + $0x8] sm:$0xff] %vm19, 0.0
  $region17: #{transformer_forward.37} parent=0 // pred_fallthru
    _
  %v22 = vld [vmem:[#allocation2] sm:$0xff]
  %v23 = vld [vmem:[#allocation2 + $0x8] sm:$0xff]
  %v24 = vld [vmem:[%s0] sm:$0xf]
  %v25 = vld [vmem:[%s0 + $0x4] sm:$0xf]
  %v26 = vld [vmem:[%s1] sm:$0xf]
  %v27 = vld [vmem:[%s1 + $0x4] sm:$0xf]
  %v28 = vld [vmem:[%s1 + $0x8] sm:$0xf]
  %v29 = vld [vmem:[%s1 + $0xc] sm:$0xf]
  %v32 = vunpack.c.l.b16 %v24
  %v33 = vunpack.c.l.b16 %v25
  %v34 = vpack.c.b16 %v33, %v32
  %v39 = vunpack.c.l.b16 %v26
  %v40 = vunpack.c.l.b16 %v27
  %v41 = vunpack.c.l.b16 %v28
  %v42 = vunpack.c.l.b16 %v29
  %v43 = vpack.c.b16 %v40, %v39
  %v44 = vpack.c.b16 %v42, %v41
  %vm47 = vcmask 261120
  %v49 = vsel %vm47, %v34, 0
  %51 = vmatprep.subr.bf16.mxu0 0
  %52 = vmatpush1.bf16.msra.mxu0 0
  %53 = vmatprep.subr.bf16.mxu0 0
  %54 = vmatpush1.bf16.msra.mxu0 0
  %55 = vmatprep.subr.bf16.mxu0 0
  %56 = vmatpush1.bf16.msra.mxu0 0
  %57 = vmatprep.subr.bf16.mxu0 0
  %58 = vmatpush1.bf16.msra.mxu0 0
  %59 = vmatprep.subr.bf16.mxu0 0
  %60 = vmatpush1.bf16.msra.mxu0 0
  %61 = vmatprep.subr.bf16.mxu0 0
  %62 = vmatpush1.bf16.msra.mxu0 0
  %63 = vmatprep.subr.bf16.mxu0 0
  %64 = vmatpush1.bf16.msra.mxu0 %v44
  %65 = vmatprep.subr.bf16.mxu0 0
  %66 = vmatpush1.bf16.msra.mxu0 %v43
  %67 = vmatprep.subr.bf16.mxu0 0
  %68 = vmatpush2.bf16.msra.mxu0 0
  %69 = vmatprep.subr.bf16.mxu0 0
  %70 = vmatpush2.bf16.msra.mxu0 0
  %71 = vmatprep.subr.bf16.mxu0 0
  %72 = vmatpush2.bf16.msra.mxu0 0
  %73 = vmatprep.subr.bf16.mxu0 0
  %74 = vmatpush2.bf16.msra.mxu0 0
  %75 = vmatprep.subr.bf16.mxu0 0
  %76 = vmatpush2.bf16.msra.mxu0 0
  %77 = vmatprep.subr.bf16.mxu0 0
  %78 = vmatpush2.bf16.msra.mxu0 0
  %79 = vmatprep.subr.bf16.mxu0 0
  %80 = vmatpush2.bf16.msra.mxu0 0
  %81 = vmatprep.subr.bf16.mxu0 0
  %82 = vmatpush2.bf16.msra.mxu0 0
  %83 = vmatprep.mubr.bf16.mxu0 0
  %84 = vmatmul.mubr.bf16.gmra.mxu0 %v49
  %v85 = vpop.f32.mrf.mxu0
  %v86 = vadd.f32 0.0, %v85
  %v87 = vpop.f32.mrf.mxu0
  %v88 = vpop.f32.mrf.mxu0
  %v89 = vadd.f32 0.0, %v88
  %v90 = vpop.f32.mrf.mxu0
  %91 = vdwg.mxu0
  %v92 = vadd.f32 %v22, %v86
  %v93 = vadd.f32 %v23, %v89
  %vm94 = vcmask 523264
  %95 = vst.msk [vmem:[#allocation2] sm:$0xff] %vm94, %v92
  %96 = vst.msk [vmem:[#allocation2 + $0x8] sm:$0xff] %vm94, %v93
  // Predicated region
  $region18: #{transformer_forward.37} parent=0 // pred_check
    %p97 = pneg %p15
  $region19: #{transformer_forward.37} parent=0 // pred_check_branch
    %99 = sbr.rel (%p97) target = $region21
  $region20: #{transformer_forward.37} parent=0 // pred_region
    %v100 = vld [vmem:[#allocation2] sm:$0xff]
    %v101 = vld [vmem:[#allocation2 + $0x8] sm:$0xff]
    %v102 = vld [vmem:[%s2] sm:$0x1]
    %v104 = vlaneseq
    %v105 = vshrl.u32 %v104, 7
    %v106 = vsub.s32 0, %v105
    %v107 = vrot.slane %v102, %v106
    %v109 = vadd.f32 %v100, %v107
    %v110 = vadd.f32 %v101, %v107
    %v111 = vpack.c.bf16 %v110, %v109
    %v113 = vunpack.c.l.b16 %v111
    %v114 = vunpack.c.h.b16 %v111
    %v115 = vpack.c.b16 %v113, %v113
    %v116 = vpack.c.b16 %v114, %v114
    %vm119 = vcmask 519168
    %120 = vst.msk [vmem:[%s3] sm:$0xf] %vm119, %v115
    %121 = vst.msk [vmem:[%s3 + $0x4] sm:$0xf] %vm119, %v116
  $region21: #{transformer_forward.37} parent=0 // pred_fallthru
    _
  // Predicated region
  $region22: #{transformer_forward.37} parent=0 // pred_check
    _
  $region23: #{transformer_forward.37} parent=0 // pred_check_branch
    %123 = sbr.rel (0) target = $region25
  $region24: #{transformer_forward.37} parent=0 // pred_region
    _
  $region25: #{transformer_forward.37} parent=0 // pred_fallthru
    _
  // Predicated region
  $region26: #{transformer_forward.37} parent=0 // pred_check
    _
  $region27: #{transformer_forward.37} parent=0 // pred_check_branch
    %125 = sbr.rel (0) target = $region29
  $region28: #{transformer_forward.37} parent=0 // pred_region
    _
  $region29: #{transformer_forward.37} parent=0 // pred_fallthru
    _

// kernel: transformer_forward.49
$region0: #{transformer_forward.49}
  #allocation0 [shape = 'u32[]', space=smem, size = 0x4, offset = 0x4, fixed_abs, tag = 'smem constant byte address 0x4 - core index']
  #allocation1 [shape = 'u32[144,128]{1,0:T(1,128)}', space=vmem, size = 0x12000, scoped, tag = 'internal scratch']
  #allocation2 [shape = 'f32[16,60]{1,0:T(8,128)}', space=vmem, size = 0x2000, scoped, tag = 'scratch operand']
  %s0 = inlined_call_operand.vmem [shape: bf16[16,32], index: 0, kind: input, shape index: {}]
  %s1 = inlined_call_operand.vmem [shape: bf16[32,60], index: 1, kind: input, shape index: {}]
  %s2 = inlined_call_operand.vmem [shape: f32[1,60], index: 2, kind: input, shape index: {}]
  %s3 = inlined_call_operand.hbm [shape: f32[16,60], index: 3, kind: output, shape index: {}]
  %s4 = sld [smem:[#allocation0]]
  $region30: #{transformer_forward.49} parent=0
    _
  %s6 = ssub.s32 1, %s4
  %s7 = scalar_select 0, %s6, %s4
  $region1: #{transformer_forward.49} parent=0
    #allocation3 [shape = 'u8[8192]{0}', space=vmem, size = 0x2000, scoped, tag = 'output window, operand 0, single buffered']
    #allocation4 [shape = 's32[1]{0}', space=sflag, size = 0x4, scoped, tag = 'scoped memory for transformer_forward.49']
    %8 = vsyncpa [#allocation4], 0
    // Predicated region
    $region2: #{transformer_forward.49} parent=1 // pred_check
      _
    $region3: #{transformer_forward.49} parent=1 // pred_check_branch
      %10 = sbr.rel (0) target = $region5
    $region4: #{transformer_forward.49} parent=1 // pred_region
      _
    $region5: #{transformer_forward.49} parent=1 // pred_fallthru
      _
    // Predicated region
    $region6: #{transformer_forward.49} parent=1 // pred_check
      _
    $region7: #{transformer_forward.49} parent=1 // pred_check_branch
      %12 = sbr.rel (0) target = $region9
    $region8: #{transformer_forward.49} parent=1 // pred_region
      _
    $region9: #{transformer_forward.49} parent=1 // pred_fallthru
      _
    // Predicated region
    $region10: #{transformer_forward.49} parent=1 // pred_check
      _
    $region11: #{transformer_forward.49} parent=1 // pred_check_branch
      %14 = sbr.rel (0) target = $region13
    $region12: #{transformer_forward.49} parent=1 // pred_region
      _
    $region13: #{transformer_forward.49} parent=1 // pred_fallthru
      _
    %p16 = scmp.eq.s32.totalorder 0, 0
    // Predicated region
    $region14: #{transformer_forward.49} parent=1 // pred_check
      %p17 = pneg %p16
    $region15: #{transformer_forward.49} parent=1 // pred_check_branch
      %19 = sbr.rel (%p17) target = $region17
    $region16: #{transformer_forward.49} parent=1 // pred_region
      %vm20 = vcmask 490496
      %21 = vst.msk [vmem:[#allocation2] sm:$0xff] %vm20, 0.0
      %22 = vst.msk [vmem:[#allocation2 + $0x8] sm:$0xff] %vm20, 0.0
    $region17: #{transformer_forward.49} parent=1 // pred_fallthru
      _
    %v23 = vld [vmem:[#allocation2] sm:$0xff]
    %v24 = vld [vmem:[#allocation2 + $0x8] sm:$0xff]
    %v25 = vld [vmem:[%s0] sm:$0xf]
    %v26 = vld [vmem:[%s0 + $0x4] sm:$0xf]
    %v27 = vld [vmem:[%s1] sm:$0xf]
    %v28 = vld [vmem:[%s1 + $0x4] sm:$0xf]
    %v29 = vld [vmem:[%s1 + $0x8] sm:$0xf]
    %v30 = vld [vmem:[%s1 + $0xc] sm:$0xf]
    %v33 = vunpack.c.l.b16 %v25
    %v34 = vunpack.c.l.b16 %v26
    %v35 = vpack.c.b16 %v34, %v33
    %v40 = vunpack.c.l.b16 %v27
    %v41 = vunpack.c.l.b16 %v28
    %v42 = vunpack.c.l.b16 %v29
    %v43 = vunpack.c.l.b16 %v30
    %v44 = vpack.c.b16 %v41, %v40
    %v45 = vpack.c.b16 %v43, %v42
    %vm48 = vcmask 261120
    %v50 = vsel %vm48, %v35, 0
    %52 = vmatprep.subr.bf16.mxu0 0
    %53 = vmatpush1.bf16.msra.mxu0 0
    %54 = vmatprep.subr.bf16.mxu0 0
    %55 = vmatpush1.bf16.msra.mxu0 0
    %56 = vmatprep.subr.bf16.mxu0 0
    %57 = vmatpush1.bf16.msra.mxu0 0
    %58 = vmatprep.subr.bf16.mxu0 0
    %59 = vmatpush1.bf16.msra.mxu0 0
    %60 = vmatprep.subr.bf16.mxu0 0
    %61 = vmatpush1.bf16.msra.mxu0 0
    %62 = vmatprep.subr.bf16.mxu0 0
    %63 = vmatpush1.bf16.msra.mxu0 0
    %64 = vmatprep.subr.bf16.mxu0 0
    %65 = vmatpush1.bf16.msra.mxu0 %v45
    %66 = vmatprep.subr.bf16.mxu0 0
    %67 = vmatpush1.bf16.msra.mxu0 %v44
    %68 = vmatprep.subr.bf16.mxu0 0
    %69 = vmatpush2.bf16.msra.mxu0 0
    %70 = vmatprep.subr.bf16.mxu0 0
    %71 = vmatpush2.bf16.msra.mxu0 0
    %72 = vmatprep.subr.bf16.mxu0 0
    %73 = vmatpush2.bf16.msra.mxu0 0
    %74 = vmatprep.subr.bf16.mxu0 0
    %75 = vmatpush2.bf16.msra.mxu0 0
    %76 = vmatprep.subr.bf16.mxu0 0
    %77 = vmatpush2.bf16.msra.mxu0 0
    %78 = vmatprep.subr.bf16.mxu0 0
    %79 = vmatpush2.bf16.msra.mxu0 0
    %80 = vmatprep.subr.bf16.mxu0 0
    %81 = vmatpush2.bf16.msra.mxu0 0
    %82 = vmatprep.subr.bf16.mxu0 0
    %83 = vmatpush2.bf16.msra.mxu0 0
    %84 = vmatprep.mubr.bf16.mxu0 0
    %85 = vmatmul.mubr.bf16.gmra.mxu0 %v50
    %v86 = vpop.f32.mrf.mxu0
    %v87 = vadd.f32 0.0, %v86
    %v88 = vpop.f32.mrf.mxu0
    %v89 = vpop.f32.mrf.mxu0
    %v90 = vadd.f32 0.0, %v89
    %v91 = vpop.f32.mrf.mxu0
    %92 = vdwg.mxu0
    %v93 = vadd.f32 %v23, %v87
    %v94 = vadd.f32 %v24, %v90
    %vm95 = vcmask 490496
    %96 = vst.msk [vmem:[#allocation2] sm:$0xff] %vm95, %v93
    %97 = vst.msk [vmem:[#allocation2 + $0x8] sm:$0xff] %vm95, %v94
    // Predicated region
    $region18: #{transformer_forward.49} parent=1 // pred_check
      %p98 = pneg %p16
    $region19: #{transformer_forward.49} parent=1 // pred_check_branch
      %100 = sbr.rel (%p98) target = $region21
    $region20: #{transformer_forward.49} parent=1 // pred_region
      %v101 = vld [vmem:[#allocation2] sm:$0xff]
      %v102 = vld [vmem:[#allocation2 + $0x8] sm:$0xff]
      %v103 = vld [vmem:[%s2] sm:$0x1]
      %v105 = vlaneseq
      %v106 = vshrl.u32 %v105, 7
      %v107 = vsub.s32 0, %v106
      %v108 = vrot.slane %v103, %v107
      %v110 = vadd.f32 %v101, %v108
      %v111 = vadd.f32 %v102, %v108
      %112 = vst.msk [vmem:[#allocation3] sm:$0xff] %vm95, %v110
      %113 = vst.msk [vmem:[#allocation3 + $0x8] sm:$0xff] %vm95, %v111
    $region21: #{transformer_forward.49} parent=1 // pred_fallthru
      _
    // Predicated region
    $region22: #{transformer_forward.49} parent=1 // pred_check
      _
    $region23: #{transformer_forward.49} parent=1 // pred_check_branch
      %115 = sbr.rel (0) target = $region25
    $region24: #{transformer_forward.49} parent=1 // pred_region
      %s117 = ssub.s32 256, 256
      %118 = vsyncadd [#allocation4], %s117
      %s119 = sshll.u32 [#allocation3], 4
      %s120 = int_to_ptr.vmem [resolvable:$true] %s119
      %125 = dma.vmem_to_hbm [thread:$0]  %s120, 256, %s3, [#allocation4], 128, 128, 8
    $region25: #{transformer_forward.49} parent=1 // pred_fallthru
      _
    // Predicated region
    $region26: #{transformer_forward.49} parent=1 // pred_check
      _
    $region27: #{transformer_forward.49} parent=1 // pred_check_branch
      %127 = sbr.rel (0) target = $region29
    $region28: #{transformer_forward.49} parent=1 // pred_region
      %128 = dma.done [#allocation4], 256
    $region29: #{transformer_forward.49} parent=1 // pred_fallthru
      _
    %129 = vsyncpa [#allocation4], 1

</llo_original>
